<compile_context>
chip_gen: v7x
topology: tpu7x:2x2x1
jax: 0.10.0
libtpu: 0.0.40
codegen_flags: <defaults>
</compile_context>

<pallas_src>
import jax
import jax.numpy as jnp
from jax import lax
from jax.experimental import pallas as pl
from jax.experimental.pallas import tpu as pltpu


_VMEM_LIMIT_BYTES = 32 * 1024 * 1024   # > v5e's 16 MiB default, safe on v7x (64 MiB phys)
_UNROLL_LIMIT = 32                     # fully unroll recurrences up to this many steps


# ----------------------------- Pallas kernels ------------------------------


def _char_lstm_kernel(x_ref, cm_ref, wih_t_ref, whh_t_ref, out_ref, xp_ref):
    """Single-layer LSTM (bias=False, PyTorch gate order i,f,g,o) + word-end mask.

    x_ref:   (T, TB, E) f32     cm_ref:    (T, TB, 1) f32
    wih_t:   (E, 4H)    bf16    whh_t_ref: (H, 4H)    bf16
    out_ref: (T, TB, H) f32     xp_ref:    (T, TB, 4H) f32 VMEM scratch
    """
    T, B, E = x_ref.shape
    H = whh_t_ref.shape[0]

    # Hoisted input projection: ONE (T*B, E) @ (E, 4H) bf16 MXU pass.
    x2d = x_ref[...].reshape(T * B, E).astype(jnp.bfloat16)
    xp_ref[...] = jnp.dot(
        x2d, wih_t_ref[...],
        preferred_element_type=jnp.float32).reshape(T, B, 4 * H)

    # Whh is read once and kept live across the whole recurrence so the MXU
    # RHS push is hoisted out of the loop.
    # TODO(synk): if the Mosaic dump shows a per-step RHS push, drive the MXU
    # explicitly with pltpu.matmul_push_rhs / matmul_acc_lhs / matmul_pop.
    whh_t = whh_t_ref[...]

    def step(t, h, c):
        gates = xp_ref[t] + jnp.dot(h.astype(jnp.bfloat16), whh_t,
                                    preferred_element_type=jnp.float32)
        sig = jax.nn.sigmoid(gates)                  # one full-width EUP pass
        g = jnp.tanh(gates[:, 2 * H:3 * H])
        c = sig[:, H:2 * H] * c + sig[:, 0:H] * g
        h = sig[:, 3 * H:4 * H] * jnp.tanh(c)
        out_ref[t] = cm_ref[t] * h                   # fused word-end mask
        return h, c

    h = jnp.zeros((B, H), jnp.float32)
    c = jnp.zeros((B, H), jnp.float32)
    if T <= _UNROLL_LIMIT:
        for t in range(T):                           # fully unrolled
            h, c = step(t, h, c)
    else:
        h, c = lax.fori_loop(0, T, lambda t, hc: step(t, *hc), (h, c), unroll=4)


def _hw_lstm_fc_kernel(emb_ref, chr_ref, wt_t_ref, bt_ref, wg_t_ref, bg_ref,
                       wihe_t_ref, wihs_t_ref, whh_t_ref, wfc_t_ref, bfc_ref,
                       out_ref, xp_ref, h_all_ref):
    """Fused Highway -> word LSTM (bias=False) -> fc head (lane-dense output).

    emb_ref: (T, TB, E) f32      chr_ref: (T, TB, Hc) f32
    wt_t/wg_t: (Hc, Hc) bf16     bt/bg:   (1, Hc) f32
    wihe_t: (E, 4Hw) bf16        wihs_t:  (Hc, 4Hw) bf16   whh_t: (Hw, 4Hw) bf16
    wfc_t:  (Hw, 128) bf16       bfc:     (1, 128) f32     (padded to 128 lanes)
    out_ref: (T, TB, 128) f32    xp_ref: (T, TB, 4Hw) f32  h_all_ref: (T, TB, Hw) f32
    """
    T, B, E = emb_ref.shape
    Hc = chr_ref.shape[2]
    Hw = whh_t_ref.shape[0]

    # ---- time-parallel prologue: all big matmuls hoisted out of the loop ----
    ch = chr_ref[...].reshape(T * B, Hc)
    ch16 = ch.astype(jnp.bfloat16)
    tr = jax.nn.relu(
        jnp.dot(ch16, wt_t_ref[...], preferred_element_type=jnp.float32)
        + bt_ref[...])
    gate = jax.nn.sigmoid(
        jnp.dot(ch16, wg_t_ref[...], preferred_element_type=jnp.float32)
        + bg_ref[...])
    sub = gate * tr + (1.0 - gate) * ch              # highway, f32, (T*B, Hc)

    # concat(emb, sub) @ Wih^T == emb @ Wihe^T + sub @ Wihs^T  (no lane concat)
    xp_ref[...] = (
        jnp.dot(emb_ref[...].reshape(T * B, E).astype(jnp.bfloat16),
                wihe_t_ref[...], preferred_element_type=jnp.float32)
        + jnp.dot(sub.astype(jnp.bfloat16), wihs_t_ref[...],
                  preferred_element_type=jnp.float32)
    ).reshape(T, B, 4 * Hw)

    whh_t = whh_t_ref[...]

    def step(t, h, c):
        gates = xp_ref[t] + jnp.dot(h.astype(jnp.bfloat16), whh_t,
                                    preferred_element_type=jnp.float32)
        sig = jax.nn.sigmoid(gates)
        g = jnp.tanh(gates[:, 2 * Hw:3 * Hw])
        c = sig[:, Hw:2 * Hw] * c + sig[:, 0:Hw] * g
        h = sig[:, 3 * Hw:4 * Hw] * jnp.tanh(c)
        h_all_ref[t] = h
        return h, c

    h = jnp.zeros((B, Hw), jnp.float32)
    c = jnp.zeros((B, Hw), jnp.float32)
    if T <= _UNROLL_LIMIT:
        for t in range(T):                           # fully unrolled
            h, c = step(t, h, c)
    else:
        h, c = lax.fori_loop(0, T, lambda t, hc: step(t, *hc), (h, c), unroll=4)

    # ---- fc head: one (T*B, Hw) @ (Hw, 128) matmul, single lane-dense store
    # (dropout is identity in eval mode) ---------------------------------------
    out_ref[...] = (
        jnp.dot(h_all_ref[...].reshape(T * B, Hw).astype(jnp.bfloat16),
                wfc_t_ref[...], preferred_element_type=jnp.float32)
        + bfc_ref[...]).reshape(out_ref.shape)


# ----------------------------- wrappers -------------------------------------


def _pick_batch_tile(Bp, T, f32_per_row, budget_bytes=6 * 1024 * 1024):
    """Largest batch tile (multiple of 8, divides Bp) whose activation working
    set (double-buffered in/out + scratch) fits a per-tile VMEM budget that is
    safe on all generations (v7x has only 64 MiB physical VMEM)."""
    for tb in (512, 256, 128, 64, 32, 16, 8):
        if Bp % tb == 0 and T * tb * f32_per_row * 4 <= budget_bytes:
            return tb
    return 8


def run_char_lstm(x_tm, cm_tm, wih_t, whh_t, *, batch_tile):
    T, Bp, E = x_tm.shape
    H = whh_t.shape[0]
    return pl.pallas_call(
        _char_lstm_kernel,
        out_shape=jax.ShapeDtypeStruct((T, Bp, H), jnp.float32),
        grid_spec=pltpu.PrefetchScalarGridSpec(
            num_scalar_prefetch=0,
            grid=(Bp // batch_tile,),
            in_specs=[
                pl.BlockSpec((T, batch_tile, E), lambda b: (0, b, 0)),
                pl.BlockSpec((T, batch_tile, 1), lambda b: (0, b, 0)),
                pl.BlockSpec((E, 4 * H), lambda b: (0, 0)),
                pl.BlockSpec((H, 4 * H), lambda b: (0, 0)),
            ],
            out_specs=pl.BlockSpec((T, batch_tile, H), lambda b: (0, b, 0)),
            scratch_shapes=[pltpu.VMEM((T, batch_tile, 4 * H), jnp.float32)],
        ),
        compiler_params=pltpu.CompilerParams(
            dimension_semantics=("parallel",),
            vmem_limit_bytes=_VMEM_LIMIT_BYTES),
    )(x_tm, cm_tm, wih_t, whh_t)


def run_hw_word_lstm_fc(emb_tm, chr_tm, wt_t, bt, wg_t, bg,
                        wihe_t, wihs_t, whh_t, wfc_t, bfc, *, batch_tile):
    T, Bp, E = emb_tm.shape
    Hc = chr_tm.shape[2]
    Hw = whh_t.shape[0]
    Opad = wfc_t.shape[1]
    full = lambda shape: pl.BlockSpec(shape, lambda b: tuple(0 for _ in shape))
    return pl.pallas_call(
        _hw_lstm_fc_kernel,
        out_shape=jax.ShapeDtypeStruct((T, Bp, Opad), jnp.float32),
        grid_spec=pltpu.PrefetchScalarGridSpec(
            num_scalar_prefetch=0,
            grid=(Bp // batch_tile,),
            in_specs=[
                pl.BlockSpec((T, batch_tile, E), lambda b: (0, b, 0)),
                pl.BlockSpec((T, batch_tile, Hc), lambda b: (0, b, 0)),
                full((Hc, Hc)),            # wt_t
                full((1, Hc)),             # bt
                full((Hc, Hc)),            # wg_t
                full((1, Hc)),             # bg
                full((E, 4 * Hw)),         # wihe_t
                full((Hc, 4 * Hw)),        # wihs_t
                full((Hw, 4 * Hw)),        # whh_t
                full((Hw, Opad)),          # wfc_t (lane-dense padded)
                full((1, Opad)),           # bfc
            ],
            out_specs=pl.BlockSpec((T, batch_tile, Opad), lambda b: (0, b, 0)),
            scratch_shapes=[pltpu.VMEM((T, batch_tile, 4 * Hw), jnp.float32),
                            pltpu.VMEM((T, batch_tile, Hw), jnp.float32)],
        ),
        compiler_params=pltpu.CompilerParams(
            dimension_semantics=("parallel",),
            vmem_limit_bytes=_VMEM_LIMIT_BYTES),
    )(emb_tm, chr_tm, wt_t, bt, wg_t, bg, wihe_t, wihs_t, whh_t, wfc_t, bfc)


class DualPOSTaggerPallas:
    """JAX/Pallas re-implementation of DualPOSTagger.forward (highway=True)."""

    def __init__(self, word_hidden_dim, output_dim, word_vocab, char_vocab,
                 word_embedding_dim=32, char_hidden_dim=32,
                 char_embedding_dim=32, seed=0):
        k = jax.random.PRNGKey(seed)
        ks = jax.random.split(k, 12)
        s = 0.1
        E, Ec, Hc, Hw, O = (word_embedding_dim, char_embedding_dim,
                            char_hidden_dim, word_hidden_dim, output_dim)
        self.E, self.Ec, self.Hc, self.Hw, self.O = E, Ec, Hc, Hw, O
        self.Opad = ((O + 127) // 128) * 128   # lane-dense fc output width

        # TODO(synk): deterministic stand-in for the GloVe-loaded embedding
        # table (_load_embeddings); no file / network access in-script.
        self.word_emb = jax.random.normal(ks[0], (word_vocab, E), jnp.float32) * s
        self.char_emb = jax.random.normal(ks[1], (char_vocab, Ec), jnp.float32) * s
        # char LSTM (bias=False), PyTorch gate order i,f,g,o
        c_wih = jax.random.normal(ks[2], (4 * Hc, Ec), jnp.float32) * s
        c_whh = jax.random.normal(ks[3], (4 * Hc, Hc), jnp.float32) * s
        # Highway (Linear layers have bias; non-zero stand-in like nn.Linear)
        hw_wt = jax.random.normal(ks[4], (Hc, Hc), jnp.float32) * s
        hw_wg = jax.random.normal(ks[5], (Hc, Hc), jnp.float32) * s
        hw_bt = jax.random.normal(ks[6], (1, Hc), jnp.float32) * s
        hw_bg = jax.random.normal(ks[7], (1, Hc), jnp.float32) * s
        # word LSTM over concat(embed, subword)  (bias=False)
        w_wih = jax.random.normal(ks[8], (4 * Hw, E + Hc), jnp.float32) * s
        w_whh = jax.random.normal(ks[9], (4 * Hw, Hw), jnp.float32) * s
        # fc head
        fc_w = jax.random.normal(ks[10], (O, Hw), jnp.float32) * s
        fc_b = jax.random.normal(ks[11], (1, O), jnp.float32) * s

        # Pre-transposed / pre-split / bf16 weights: MXU consumes them natively
        # (no in-kernel transposes, no per-timestep concat, bf16 MXU peak).
        bf = jnp.bfloat16
        self.c_wih_t = c_wih.T.astype(bf)            # (Ec, 4Hc)
        self.c_whh_t = c_whh.T.astype(bf)            # (Hc, 4Hc)
        self.hw_wt_t = hw_wt.T.astype(bf)            # (Hc, Hc)
        self.hw_wg_t = hw_wg.T.astype(bf)            # (Hc, Hc)
        self.hw_bt = hw_bt                           # f32 (elementwise math stays f32)
        self.hw_bg = hw_bg
        self.w_wih_emb_t = w_wih[:, :E].T.astype(bf)  # (E,  4Hw)
        self.w_wih_sub_t = w_wih[:, E:].T.astype(bf)  # (Hc, 4Hw)
        self.w_whh_t = w_whh.T.astype(bf)             # (Hw, 4Hw)
        # lane-dense fc head: zero-pad output columns to 128
        fc_w_t = jnp.zeros((Hw, self.Opad), jnp.float32).at[:, :O].set(fc_w.T)
        self.fc_w_t = fc_w_t.astype(bf)               # (Hw, 128)
        self.fc_b = jnp.zeros((1, self.Opad), jnp.float32).at[:, :O].set(fc_b)

        self._fwd = jax.jit(self._forward_impl)

    # ------------------------------------------------------------------ #

    def _forward_impl(self, word_seq, char_seq, char_makers, tags, lengths):
        B, Sw = word_seq.shape
        Sc = char_seq.shape[1]
        # Pad batch to a multiple of 8 sublanes.
        # TODO(synk): for production throughput pad/tile to 128 (v5e) / 256
        # (v6e, v7x) rows so the recurrence fills the MXU instead of being
        # latency-bound at 8 active rows.
        Bp = ((B + 7) // 8) * 8
        pad = Bp - B

        # Time-major gathers directly from the tables (no (B,T,F)->(T,B,F)
        # float transposes; only the tiny int index / bool mask are transposed).
        emb_tm = jnp.take(self.word_emb, word_seq.T, axis=0)     # (Sw, B, E)
        chr_tm = jnp.take(self.char_emb, char_seq.T, axis=0)     # (Sc, B, Ec)
        cm_tm = char_makers.T.astype(jnp.float32)                # (Sc, B)
        if pad:
            emb_tm = jnp.pad(emb_tm, ((0, 0), (0, pad), (0, 0)))
            chr_tm = jnp.pad(chr_tm, ((0, 0), (0, pad), (0, 0)))
            cm_tm = jnp.pad(cm_tm, ((0, 0), (0, pad)))
        cm_tm = cm_tm[:, :, None]                                # (Sc, Bp, 1)

        # char LSTM (Pallas, time-major, word-end mask fused into its epilogue)
        tb_c = _pick_batch_tile(Bp, Sc, 2 * (self.Ec + 1 + self.Hc) + 4 * self.Hc)
        char_out_tm = run_char_lstm(chr_tm, cm_tm, self.c_wih_t, self.c_whh_t,
                                    batch_tile=tb_c)             # (Sc, Bp, Hc)

        # Stable-partition word-end rows to the top, time-major.  Row selection
        # uses (masked char_out row-sum == 0), exactly the reference semantics.
        row_zero = (char_out_tm.sum(axis=2) == 0)                # (Sc, Bp)
        perm = jnp.argsort(row_zero, axis=0, stable=True)[:Sw]   # (Sw, Bp)
        char_sel_tm = jnp.take_along_axis(char_out_tm, perm[:, :, None], axis=0)

        # highway branch: Highway + split-Wih word LSTM + fc (fused kernel)
        tb_w = _pick_batch_tile(
            Bp, Sw, 2 * (self.E + self.Hc + self.Opad) + 5 * self.Hw)
        preds_tm = run_hw_word_lstm_fc(
            emb_tm, char_sel_tm,
            self.hw_wt_t, self.hw_bt, self.hw_wg_t, self.hw_bg,
            self.w_wih_emb_t, self.w_wih_sub_t, self.w_whh_t,
            self.fc_w_t, self.fc_b, batch_tile=tb_w)             # (Sw, Bp, 128)

        # Only the small logits slab is transposed back to batch-first.
        preds = jnp.transpose(preds_tm[:, :B, :self.O], (1, 0, 2))  # (B, Sw, O)
        # TODO(synk): non-highway branch (embeds + char_out -> self.lstm -> fc)
        # not exercised here; it reuses _char_lstm_kernel with an fc epilogue.
        return preds, tags, lengths

    def forward(self, word_seq, char_seq, char_makers, tags, lengths):
        return self._fwd(word_seq, char_seq, char_makers, tags, lengths)


# ----------------------------- demo -----------------------------------------

if __name__ == "__main__":
    B, Sw, Sc = 2, 8, 24
    word_vocab, char_vocab, out_dim, word_hidden = 50, 30, 8, 32

    model = DualPOSTaggerPallas(word_hidden_dim=word_hidden,
                                output_dim=out_dim,
                                word_vocab=word_vocab,
                                char_vocab=char_vocab,
                                seed=0)

    key = jax.random.PRNGKey(0)
    k1, k2, k3, k4 = jax.random.split(key, 4)
    word_seq = jax.random.randint(k1, (B, Sw), 0, word_vocab, jnp.int32)
    char_seq = jax.random.randint(k2, (B, Sc), 0, char_vocab, jnp.int32)
    char_makers = jax.random.bernoulli(k3, 0.4, (B, Sc)).astype(jnp.float32)
    tags = jax.random.randint(k4, (B, Sw), 0, out_dim, jnp.int32)
    lengths = jnp.full((B,), Sw, jnp.int32)

    preds, tags_out, lengths_out = model.forward(
        word_seq, char_seq, char_makers, tags, lengths)
    jax.block_until_ready(preds)

    assert preds.shape == (B, Sw, out_dim)
    assert preds.dtype == jnp.float32
    print("KERNEL_OK")
</pallas_src>

<mosaic_0001>
module attributes {stable_mosaic.version = 11 : i64} {
  func.func @_char_lstm_kernel(%arg0: i32, %arg1: memref<24x8x32xf32, #tpu.memory_space<vmem>>, %arg2: memref<24x8x1xf32, #tpu.memory_space<vmem>>, %arg3: memref<32x128xbf16, #tpu.memory_space<vmem>>, %arg4: memref<32x128xbf16, #tpu.memory_space<vmem>>, %arg5: memref<24x8x32xf32, #tpu.memory_space<vmem>>, %arg6: memref<24x8x128xf32, #tpu.memory_space<vmem>>) attributes {dimension_semantics = [#tpu.dimension_semantics<parallel>], iteration_bounds = array<i64: 1>, scalar_prefetch = 0 : i64, scratch_operands = 1 : i64, tpu.core_type = #tpu.core_type<tc>, window_params = [{transform_indices = @transform_0, window_bounds = array<i64: 24, 8, 32>}, {transform_indices = @transform_1, window_bounds = array<i64: 24, 8, 1>}, {pipeline_mode = #tpu.pipeline_mode<synchronous>, transform_indices = @transform_2, window_bounds = array<i64: 32, 128>}, {pipeline_mode = #tpu.pipeline_mode<synchronous>, transform_indices = @transform_3, window_bounds = array<i64: 32, 128>}, {transform_indices = @transform_4, window_bounds = array<i64: 24, 8, 32>}]} {
    %c0 = arith.constant 0 : index
    %c0_0 = arith.constant 0 : index
    %c0_1 = arith.constant 0 : index
    %0 = vector.load %arg1[%c0, %c0_0, %c0_1] : memref<24x8x32xf32, #tpu.memory_space<vmem>>, vector<24x8x32xf32>
    %1 = vector.shape_cast %0 : vector<24x8x32xf32> to vector<192x32xf32>
    %2 = arith.truncf %1 : vector<192x32xf32> to vector<192x32xbf16>
    %c0_2 = arith.constant 0 : index
    %c0_3 = arith.constant 0 : index
    %3 = vector.load %arg3[%c0_2, %c0_3] : memref<32x128xbf16, #tpu.memory_space<vmem>>, vector<32x128xbf16>
    %cst = arith.constant dense<0.000000e+00> : vector<192x128xf32>
    %4 = tpu.matmul %2, %3, %cst {dimension_numbers = #tpu.dot_dimension_numbers<[1], [0], [0], [1], [0, 0, 1, 1], [], []>} : vector<192x32xbf16>, vector<32x128xbf16>, vector<192x128xf32> -> vector<192x128xf32>
    %5 = vector.shape_cast %4 : vector<192x128xf32> to vector<24x8x128xf32>
    %c0_4 = arith.constant 0 : index
    %c0_5 = arith.constant 0 : index
    %c0_6 = arith.constant 0 : index
    %6 = vector.load %arg6[%c0_4, %c0_5, %c0_6] : memref<24x8x128xf32, #tpu.memory_space<vmem>>, vector<24x8x128xf32>
    tpu.vector_store %arg6[%c0_4, %c0_5, %c0_6], %5 {strides = array<i32>} : memref<24x8x128xf32, #tpu.memory_space<vmem>>, vector<24x8x128xf32>,
    %c0_7 = arith.constant 0 : index
    %c0_8 = arith.constant 0 : index
    %7 = vector.load %arg4[%c0_7, %c0_8] : memref<32x128xbf16, #tpu.memory_space<vmem>>, vector<32x128xbf16>
    %cst_9 = arith.constant 0.000000e+00 : f32
    %8 = vector.broadcast %cst_9 : f32 to vector<8x32xf32>
    %cst_10 = arith.constant 0.000000e+00 : f32
    %9 = vector.broadcast %cst_10 : f32 to vector<8x32xf32>
    %c0_11 = arith.constant 0 : index
    %c0_12 = arith.constant 0 : index
    %c0_13 = arith.constant 0 : index
    %10 = vector.load %arg6[%c0_11, %c0_12, %c0_13] : memref<24x8x128xf32, #tpu.memory_space<vmem>>, vector<1x8x128xf32>
    %11 = vector.shape_cast %10 : vector<1x8x128xf32> to vector<8x128xf32>
    %12 = arith.truncf %8 : vector<8x32xf32> to vector<8x32xbf16>
    %cst_14 = arith.constant dense<0.000000e+00> : vector<8x128xf32>
    %13 = tpu.matmul %12, %7, %cst_14 {dimension_numbers = #tpu.dot_dimension_numbers<[1], [0], [0], [1], [0, 0, 1, 1], [], []>} : vector<8x32xbf16>, vector<32x128xbf16>, vector<8x128xf32> -> vector<8x128xf32>
    %14 = arith.addf %11, %13 : vector<8x128xf32>
    %15 = arith.negf %14 : vector<8x128xf32>
    %16 = math.exp %15 : vector<8x128xf32>
    %cst_15 = arith.constant 1.000000e+00 : f32
    %17 = vector.broadcast %cst_15 : f32 to vector<8x128xf32>
    %18 = arith.addf %17, %16 : vector<8x128xf32>
    %19 = arith.divf %17, %18 : vector<8x128xf32>
    %20 = vector.extract_strided_slice %14 {offsets = [0, 64], sizes = [8, 32], strides = [1, 1]} : vector<8x128xf32> to vector<8x32xf32>
    %21 = math.tanh %20 : vector<8x32xf32>
    %22 = vector.extract_strided_slice %19 {offsets = [0, 32], sizes = [8, 32], strides = [1, 1]} : vector<8x128xf32> to vector<8x32xf32>
    %23 = arith.mulf %22, %9 : vector<8x32xf32>
    %24 = vector.extract_strided_slice %19 {offsets = [0, 0], sizes = [8, 32], strides = [1, 1]} : vector<8x128xf32> to vector<8x32xf32>
    %25 = arith.mulf %24, %21 : vector<8x32xf32>
    %26 = arith.addf %23, %25 : vector<8x32xf32>
    %27 = vector.extract_strided_slice %19 {offsets = [0, 96], sizes = [8, 32], strides = [1, 1]} : vector<8x128xf32> to vector<8x32xf32>
    %28 = math.tanh %26 : vector<8x32xf32>
    %29 = arith.mulf %27, %28 : vector<8x32xf32>
    %c0_16 = arith.constant 0 : index
    %c0_17 = arith.constant 0 : index
    %c0_18 = arith.constant 0 : index
    %30 = vector.load %arg2[%c0_16, %c0_17, %c0_18] : memref<24x8x1xf32, #tpu.memory_space<vmem>>, vector<1x8x1xf32>
    %31 = vector.shape_cast %30 : vector<1x8x1xf32> to vector<8x1xf32>
    %32 = vector.broadcast %31 : vector<8x1xf32> to vector<8x32xf32>
    %33 = arith.mulf %32, %29 : vector<8x32xf32>
    %c0_19 = arith.constant 0 : index
    %c0_20 = arith.constant 0 : index
    %c0_21 = arith.constant 0 : index
    %34 = vector.load %arg5[%c0_19, %c0_20, %c0_21] : memref<24x8x32xf32, #tpu.memory_space<vmem>>, vector<1x8x32xf32>
    %35 = vector.shape_cast %34 : vector<1x8x32xf32> to vector<8x32xf32>
    %36 = vector.shape_cast %33 : vector<8x32xf32> to vector<1x8x32xf32>
    tpu.vector_store %arg5[%c0_19, %c0_20, %c0_21], %36 {strides = array<i32>} : memref<24x8x32xf32, #tpu.memory_space<vmem>>, vector<1x8x32xf32>,
    %c1 = arith.constant 1 : index
    %c0_22 = arith.constant 0 : index
    %c0_23 = arith.constant 0 : index
    %37 = vector.load %arg6[%c1, %c0_22, %c0_23] : memref<24x8x128xf32, #tpu.memory_space<vmem>>, vector<1x8x128xf32>
    %38 = vector.shape_cast %37 : vector<1x8x128xf32> to vector<8x128xf32>
    %39 = arith.truncf %29 : vector<8x32xf32> to vector<8x32xbf16>
    %cst_24 = arith.constant dense<0.000000e+00> : vector<8x128xf32>
    %40 = tpu.matmul %39, %7, %cst_24 {dimension_numbers = #tpu.dot_dimension_numbers<[1], [0], [0], [1], [0, 0, 1, 1], [], []>} : vector<8x32xbf16>, vector<32x128xbf16>, vector<8x128xf32> -> vector<8x128xf32>
    %41 = arith.addf %38, %40 : vector<8x128xf32>
    %42 = arith.negf %41 : vector<8x128xf32>
    %43 = math.exp %42 : vector<8x128xf32>
    %cst_25 = arith.constant 1.000000e+00 : f32
    %44 = vector.broadcast %cst_25 : f32 to vector<8x128xf32>
    %45 = arith.addf %44, %43 : vector<8x128xf32>
    %46 = arith.divf %44, %45 : vector<8x128xf32>
    %47 = vector.extract_strided_slice %41 {offsets = [0, 64], sizes = [8, 32], strides = [1, 1]} : vector<8x128xf32> to vector<8x32xf32>
    %48 = math.tanh %47 : vector<8x32xf32>
    %49 = vector.extract_strided_slice %46 {offsets = [0, 32], sizes = [8, 32], strides = [1, 1]} : vector<8x128xf32> to vector<8x32xf32>
    %50 = arith.mulf %49, %26 : vector<8x32xf32>
    %51 = vector.extract_strided_slice %46 {offsets = [0, 0], sizes = [8, 32], strides = [1, 1]} : vector<8x128xf32> to vector<8x32xf32>
    %52 = arith.mulf %51, %48 : vector<8x32xf32>
    %53 = arith.addf %50, %52 : vector<8x32xf32>
    %54 = vector.extract_strided_slice %46 {offsets = [0, 96], sizes = [8, 32], strides = [1, 1]} : vector<8x128xf32> to vector<8x32xf32>
    %55 = math.tanh %53 : vector<8x32xf32>
    %56 = arith.mulf %54, %55 : vector<8x32xf32>
    %c1_26 = arith.constant 1 : index
    %c0_27 = arith.constant 0 : index
    %c0_28 = arith.constant 0 : index
    %57 = vector.load %arg2[%c1_26, %c0_27, %c0_28] : memref<24x8x1xf32, #tpu.memory_space<vmem>>, vector<1x8x1xf32>
    %58 = vector.shape_cast %57 : vector<1x8x1xf32> to vector<8x1xf32>
    %59 = vector.broadcast %58 : vector<8x1xf32> to vector<8x32xf32>
    %60 = arith.mulf %59, %56 : vector<8x32xf32>
    %c1_29 = arith.constant 1 : index
    %c0_30 = arith.constant 0 : index
    %c0_31 = arith.constant 0 : index
    %61 = vector.load %arg5[%c1_29, %c0_30, %c0_31] : memref<24x8x32xf32, #tpu.memory_space<vmem>>, vector<1x8x32xf32>
    %62 = vector.shape_cast %61 : vector<1x8x32xf32> to vector<8x32xf32>
    %63 = vector.shape_cast %60 : vector<8x32xf32> to vector<1x8x32xf32>
    tpu.vector_store %arg5[%c1_29, %c0_30, %c0_31], %63 {strides = array<i32>} : memref<24x8x32xf32, #tpu.memory_space<vmem>>, vector<1x8x32xf32>,
    %c2 = arith.constant 2 : index
    %c0_32 = arith.constant 0 : index
    %c0_33 = arith.constant 0 : index
    %64 = vector.load %arg6[%c2, %c0_32, %c0_33] : memref<24x8x128xf32, #tpu.memory_space<vmem>>, vector<1x8x128xf32>
    %65 = vector.shape_cast %64 : vector<1x8x128xf32> to vector<8x128xf32>
    %66 = arith.truncf %56 : vector<8x32xf32> to vector<8x32xbf16>
    %cst_34 = arith.constant dense<0.000000e+00> : vector<8x128xf32>
    %67 = tpu.matmul %66, %7, %cst_34 {dimension_numbers = #tpu.dot_dimension_numbers<[1], [0], [0], [1], [0, 0, 1, 1], [], []>} : vector<8x32xbf16>, vector<32x128xbf16>, vector<8x128xf32> -> vector<8x128xf32>
    %68 = arith.addf %65, %67 : vector<8x128xf32>
    %69 = arith.negf %68 : vector<8x128xf32>
    %70 = math.exp %69 : vector<8x128xf32>
    %cst_35 = arith.constant 1.000000e+00 : f32
    %71 = vector.broadcast %cst_35 : f32 to vector<8x128xf32>
    %72 = arith.addf %71, %70 : vector<8x128xf32>
    %73 = arith.divf %71, %72 : vector<8x128xf32>
    %74 = vector.extract_strided_slice %68 {offsets = [0, 64], sizes = [8, 32], strides = [1, 1]} : vector<8x128xf32> to vector<8x32xf32>
    %75 = math.tanh %74 : vector<8x32xf32>
    %76 = vector.extract_strided_slice %73 {offsets = [0, 32], sizes = [8, 32], strides = [1, 1]} : vector<8x128xf32> to vector<8x32xf32>
    %77 = arith.mulf %76, %53 : vector<8x32xf32>
    %78 = vector.extract_strided_slice %73 {offsets = [0, 0], sizes = [8, 32], strides = [1, 1]} : vector<8x128xf32> to vector<8x32xf32>
    %79 = arith.mulf %78, %75 : vector<8x32xf32>
    %80 = arith.addf %77, %79 : vector<8x32xf32>
    %81 = vector.extract_strided_slice %73 {offsets = [0, 96], sizes = [8, 32], strides = [1, 1]} : vector<8x128xf32> to vector<8x32xf32>
    %82 = math.tanh %80 : vector<8x32xf32>
    %83 = arith.mulf %81, %82 : vector<8x32xf32>
    %c2_36 = arith.constant 2 : index
    %c0_37 = arith.constant 0 : index
    %c0_38 = arith.constant 0 : index
    %84 = vector.load %arg2[%c2_36, %c0_37, %c0_38] : memref<24x8x1xf32, #tpu.memory_space<vmem>>, vector<1x8x1xf32>
    %85 = vector.shape_cast %84 : vector<1x8x1xf32> to vector<8x1xf32>
    %86 = vector.broadcast %85 : vector<8x1xf32> to vector<8x32xf32>
    %87 = arith.mulf %86, %83 : vector<8x32xf32>
    %c2_39 = arith.constant 2 : index
    %c0_40 = arith.constant 0 : index
    %c0_41 = arith.constant 0 : index
    %88 = vector.load %arg5[%c2_39, %c0_40, %c0_41] : memref<24x8x32xf32, #tpu.memory_space<vmem>>, vector<1x8x32xf32>
    %89 = vector.shape_cast %88 : vector<1x8x32xf32> to vector<8x32xf32>
    %90 = vector.shape_cast %87 : vector<8x32xf32> to vector<1x8x32xf32>
    tpu.vector_store %arg5[%c2_39, %c0_40, %c0_41], %90 {strides = array<i32>} : memref<24x8x32xf32, #tpu.memory_space<vmem>>, vector<1x8x32xf32>,
    %c3 = arith.constant 3 : index
    %c0_42 = arith.constant 0 : index
    %c0_43 = arith.constant 0 : index
    %91 = vector.load %arg6[%c3, %c0_42, %c0_43] : memref<24x8x128xf32, #tpu.memory_space<vmem>>, vector<1x8x128xf32>
    %92 = vector.shape_cast %91 : vector<1x8x128xf32> to vector<8x128xf32>
    %93 = arith.truncf %83 : vector<8x32xf32> to vector<8x32xbf16>
    %cst_44 = arith.constant dense<0.000000e+00> : vector<8x128xf32>
    %94 = tpu.matmul %93, %7, %cst_44 {dimension_numbers = #tpu.dot_dimension_numbers<[1], [0], [0], [1], [0, 0, 1, 1], [], []>} : vector<8x32xbf16>, vector<32x128xbf16>, vector<8x128xf32> -> vector<8x128xf32>
    %95 = arith.addf %92, %94 : vector<8x128xf32>
    %96 = arith.negf %95 : vector<8x128xf32>
    %97 = math.exp %96 : vector<8x128xf32>
    %cst_45 = arith.constant 1.000000e+00 : f32
    %98 = vector.broadcast %cst_45 : f32 to vector<8x128xf32>
    %99 = arith.addf %98, %97 : vector<8x128xf32>
    %100 = arith.divf %98, %99 : vector<8x128xf32>
    %101 = vector.extract_strided_slice %95 {offsets = [0, 64], sizes = [8, 32], strides = [1, 1]} : vector<8x128xf32> to vector<8x32xf32>
    %102 = math.tanh %101 : vector<8x32xf32>
    %103 = vector.extract_strided_slice %100 {offsets = [0, 32], sizes = [8, 32], strides = [1, 1]} : vector<8x128xf32> to vector<8x32xf32>
    %104 = arith.mulf %103, %80 : vector<8x32xf32>
    %105 = vector.extract_strided_slice %100 {offsets = [0, 0], sizes = [8, 32], strides = [1, 1]} : vector<8x128xf32> to vector<8x32xf32>
    %106 = arith.mulf %105, %102 : vector<8x32xf32>
    %107 = arith.addf %104, %106 : vector<8x32xf32>
    %108 = vector.extract_strided_slice %100 {offsets = [0, 96], sizes = [8, 32], strides = [1, 1]} : vector<8x128xf32> to vector<8x32xf32>
    %109 = math.tanh %107 : vector<8x32xf32>
    %110 = arith.mulf %108, %109 : vector<8x32xf32>
    %c3_46 = arith.constant 3 : index
    %c0_47 = arith.constant 0 : index
    %c0_48 = arith.constant 0 : index
    %111 = vector.load %arg2[%c3_46, %c0_47, %c0_48] : memref<24x8x1xf32, #tpu.memory_space<vmem>>, vector<1x8x1xf32>
    %112 = vector.shape_cast %111 : vector<1x8x1xf32> to vector<8x1xf32>
    %113 = vector.broadcast %112 : vector<8x1xf32> to vector<8x32xf32>
    %114 = arith.mulf %113, %110 : vector<8x32xf32>
    %c3_49 = arith.constant 3 : index
    %c0_50 = arith.constant 0 : index
    %c0_51 = arith.constant 0 : index
    %115 = vector.load %arg5[%c3_49, %c0_50, %c0_51] : memref<24x8x32xf32, #tpu.memory_space<vmem>>, vector<1x8x32xf32>
    %116 = vector.shape_cast %115 : vector<1x8x32xf32> to vector<8x32xf32>
    %117 = vector.shape_cast %114 : vector<8x32xf32> to vector<1x8x32xf32>
    tpu.vector_store %arg5[%c3_49, %c0_50, %c0_51], %117 {strides = array<i32>} : memref<24x8x32xf32, #tpu.memory_space<vmem>>, vector<1x8x32xf32>,
    %c4 = arith.constant 4 : index
    %c0_52 = arith.constant 0 : index
    %c0_53 = arith.constant 0 : index
    %118 = vector.load %arg6[%c4, %c0_52, %c0_53] : memref<24x8x128xf32, #tpu.memory_space<vmem>>, vector<1x8x128xf32>
    %119 = vector.shape_cast %118 : vector<1x8x128xf32> to vector<8x128xf32>
    %120 = arith.truncf %110 : vector<8x32xf32> to vector<8x32xbf16>
    %cst_54 = arith.constant dense<0.000000e+00> : vector<8x128xf32>
    %121 = tpu.matmul %120, %7, %cst_54 {dimension_numbers = #tpu.dot_dimension_numbers<[1], [0], [0], [1], [0, 0, 1, 1], [], []>} : vector<8x32xbf16>, vector<32x128xbf16>, vector<8x128xf32> -> vector<8x128xf32>
    %122 = arith.addf %119, %121 : vector<8x128xf32>
    %123 = arith.negf %122 : vector<8x128xf32>
    %124 = math.exp %123 : vector<8x128xf32>
    %cst_55 = arith.constant 1.000000e+00 : f32
    %125 = vector.broadcast %cst_55 : f32 to vector<8x128xf32>
    %126 = arith.addf %125, %124 : vector<8x128xf32>
    %127 = arith.divf %125, %126 : vector<8x128xf32>
    %128 = vector.extract_strided_slice %122 {offsets = [0, 64], sizes = [8, 32], strides = [1, 1]} : vector<8x128xf32> to vector<8x32xf32>
    %129 = math.tanh %128 : vector<8x32xf32>
    %130 = vector.extract_strided_slice %127 {offsets = [0, 32], sizes = [8, 32], strides = [1, 1]} : vector<8x128xf32> to vector<8x32xf32>
    %131 = arith.mulf %130, %107 : vector<8x32xf32>
    %132 = vector.extract_strided_slice %127 {offsets = [0, 0], sizes = [8, 32], strides = [1, 1]} : vector<8x128xf32> to vector<8x32xf32>
    %133 = arith.mulf %132, %129 : vector<8x32xf32>
    %134 = arith.addf %131, %133 : vector<8x32xf32>
    %135 = vector.extract_strided_slice %127 {offsets = [0, 96], sizes = [8, 32], strides = [1, 1]} : vector<8x128xf32> to vector<8x32xf32>
    %136 = math.tanh %134 : vector<8x32xf32>
    %137 = arith.mulf %135, %136 : vector<8x32xf32>
    %c4_56 = arith.constant 4 : index
    %c0_57 = arith.constant 0 : index
    %c0_58 = arith.constant 0 : index
    %138 = vector.load %arg2[%c4_56, %c0_57, %c0_58] : memref<24x8x1xf32, #tpu.memory_space<vmem>>, vector<1x8x1xf32>
    %139 = vector.shape_cast %138 : vector<1x8x1xf32> to vector<8x1xf32>
    %140 = vector.broadcast %139 : vector<8x1xf32> to vector<8x32xf32>
    %141 = arith.mulf %140, %137 : vector<8x32xf32>
    %c4_59 = arith.constant 4 : index
    %c0_60 = arith.constant 0 : index
    %c0_61 = arith.constant 0 : index
    %142 = vector.load %arg5[%c4_59, %c0_60, %c0_61] : memref<24x8x32xf32, #tpu.memory_space<vmem>>, vector<1x8x32xf32>
    %143 = vector.shape_cast %142 : vector<1x8x32xf32> to vector<8x32xf32>
    %144 = vector.shape_cast %141 : vector<8x32xf32> to vector<1x8x32xf32>
    tpu.vector_store %arg5[%c4_59, %c0_60, %c0_61], %144 {strides = array<i32>} : memref<24x8x32xf32, #tpu.memory_space<vmem>>, vector<1x8x32xf32>,
    %c5 = arith.constant 5 : index
    %c0_62 = arith.constant 0 : index
    %c0_63 = arith.constant 0 : index
    %145 = vector.load %arg6[%c5, %c0_62, %c0_63] : memref<24x8x128xf32, #tpu.memory_space<vmem>>, vector<1x8x128xf32>
    %146 = vector.shape_cast %145 : vector<1x8x128xf32> to vector<8x128xf32>
    %147 = arith.truncf %137 : vector<8x32xf32> to vector<8x32xbf16>
    %cst_64 = arith.constant dense<0.000000e+00> : vector<8x128xf32>
    %148 = tpu.matmul %147, %7, %cst_64 {dimension_numbers = #tpu.dot_dimension_numbers<[1], [0], [0], [1], [0, 0, 1, 1], [], []>} : vector<8x32xbf16>, vector<32x128xbf16>, vector<8x128xf32> -> vector<8x128xf32>
    %149 = arith.addf %146, %148 : vector<8x128xf32>
    %150 = arith.negf %149 : vector<8x128xf32>
    %151 = math.exp %150 : vector<8x128xf32>
    %cst_65 = arith.constant 1.000000e+00 : f32
    %152 = vector.broadcast %cst_65 : f32 to vector<8x128xf32>
    %153 = arith.addf %152, %151 : vector<8x128xf32>
    %154 = arith.divf %152, %153 : vector<8x128xf32>
    %155 = vector.extract_strided_slice %149 {offsets = [0, 64], sizes = [8, 32], strides = [1, 1]} : vector<8x128xf32> to vector<8x32xf32>
    %156 = math.tanh %155 : vector<8x32xf32>
    %157 = vector.extract_strided_slice %154 {offsets = [0, 32], sizes = [8, 32], strides = [1, 1]} : vector<8x128xf32> to vector<8x32xf32>
    %158 = arith.mulf %157, %134 : vector<8x32xf32>
    %159 = vector.extract_strided_slice %154 {offsets = [0, 0], sizes = [8, 32], strides = [1, 1]} : vector<8x128xf32> to vector<8x32xf32>
    %160 = arith.mulf %159, %156 : vector<8x32xf32>
    %161 = arith.addf %158, %160 : vector<8x32xf32>
    %162 = vector.extract_strided_slice %154 {offsets = [0, 96], sizes = [8, 32], strides = [1, 1]} : vector<8x128xf32> to vector<8x32xf32>
    %163 = math.tanh %161 : vector<8x32xf32>
    %164 = arith.mulf %162, %163 : vector<8x32xf32>
    %c5_66 = arith.constant 5 : index
    %c0_67 = arith.constant 0 : index
    %c0_68 = arith.constant 0 : index
    %165 = vector.load %arg2[%c5_66, %c0_67, %c0_68] : memref<24x8x1xf32, #tpu.memory_space<vmem>>, vector<1x8x1xf32>
    %166 = vector.shape_cast %165 : vector<1x8x1xf32> to vector<8x1xf32>
    %167 = vector.broadcast %166 : vector<8x1xf32> to vector<8x32xf32>
    %168 = arith.mulf %167, %164 : vector<8x32xf32>
    %c5_69 = arith.constant 5 : index
    %c0_70 = arith.constant 0 : index
    %c0_71 = arith.constant 0 : index
    %169 = vector.load %arg5[%c5_69, %c0_70, %c0_71] : memref<24x8x32xf32, #tpu.memory_space<vmem>>, vector<1x8x32xf32>
    %170 = vector.shape_cast %169 : vector<1x8x32xf32> to vector<8x32xf32>
    %171 = vector.shape_cast %168 : vector<8x32xf32> to vector<1x8x32xf32>
    tpu.vector_store %arg5[%c5_69, %c0_70, %c0_71], %171 {strides = array<i32>} : memref<24x8x32xf32, #tpu.memory_space<vmem>>, vector<1x8x32xf32>,
    %c6 = arith.constant 6 : index
    %c0_72 = arith.constant 0 : index
    %c0_73 = arith.constant 0 : index
    %172 = vector.load %arg6[%c6, %c0_72, %c0_73] : memref<24x8x128xf32, #tpu.memory_space<vmem>>, vector<1x8x128xf32>
    %173 = vector.shape_cast %172 : vector<1x8x128xf32> to vector<8x128xf32>
    %174 = arith.truncf %164 : vector<8x32xf32> to vector<8x32xbf16>
    %cst_74 = arith.constant dense<0.000000e+00> : vector<8x128xf32>
    %175 = tpu.matmul %174, %7, %cst_74 {dimension_numbers = #tpu.dot_dimension_numbers<[1], [0], [0], [1], [0, 0, 1, 1], [], []>} : vector<8x32xbf16>, vector<32x128xbf16>, vector<8x128xf32> -> vector<8x128xf32>
    %176 = arith.addf %173, %175 : vector<8x128xf32>
    %177 = arith.negf %176 : vector<8x128xf32>
    %178 = math.exp %177 : vector<8x128xf32>
    %cst_75 = arith.constant 1.000000e+00 : f32
    %179 = vector.broadcast %cst_75 : f32 to vector<8x128xf32>
    %180 = arith.addf %179, %178 : vector<8x128xf32>
    %181 = arith.divf %179, %180 : vector<8x128xf32>
    %182 = vector.extract_strided_slice %176 {offsets = [0, 64], sizes = [8, 32], strides = [1, 1]} : vector<8x128xf32> to vector<8x32xf32>
    %183 = math.tanh %182 : vector<8x32xf32>
    %184 = vector.extract_strided_slice %181 {offsets = [0, 32], sizes = [8, 32], strides = [1, 1]} : vector<8x128xf32> to vector<8x32xf32>
    %185 = arith.mulf %184, %161 : vector<8x32xf32>
    %186 = vector.extract_strided_slice %181 {offsets = [0, 0], sizes = [8, 32], strides = [1, 1]} : vector<8x128xf32> to vector<8x32xf32>
    %187 = arith.mulf %186, %183 : vector<8x32xf32>
    %188 = arith.addf %185, %187 : vector<8x32xf32>
    %189 = vector.extract_strided_slice %181 {offsets = [0, 96], sizes = [8, 32], strides = [1, 1]} : vector<8x128xf32> to vector<8x32xf32>
    %190 = math.tanh %188 : vector<8x32xf32>
    %191 = arith.mulf %189, %190 : vector<8x32xf32>
    %c6_76 = arith.constant 6 : index
    %c0_77 = arith.constant 0 : index
    %c0_78 = arith.constant 0 : index
    %192 = vector.load %arg2[%c6_76, %c0_77, %c0_78] : memref<24x8x1xf32, #tpu.memory_space<vmem>>, vector<1x8x1xf32>
    %193 = vector.shape_cast %192 : vector<1x8x1xf32> to vector<8x1xf32>
    %194 = vector.broadcast %193 : vector<8x1xf32> to vector<8x32xf32>
    %195 = arith.mulf %194, %191 : vector<8x32xf32>
    %c6_79 = arith.constant 6 : index
    %c0_80 = arith.constant 0 : index
    %c0_81 = arith.constant 0 : index
    %196 = vector.load %arg5[%c6_79, %c0_80, %c0_81] : memref<24x8x32xf32, #tpu.memory_space<vmem>>, vector<1x8x32xf32>
    %197 = vector.shape_cast %196 : vector<1x8x32xf32> to vector<8x32xf32>
    %198 = vector.shape_cast %195 : vector<8x32xf32> to vector<1x8x32xf32>
    tpu.vector_store %arg5[%c6_79, %c0_80, %c0_81], %198 {strides = array<i32>} : memref<24x8x32xf32, #tpu.memory_space<vmem>>, vector<1x8x32xf32>,
    %c7 = arith.constant 7 : index
    %c0_82 = arith.constant 0 : index
    %c0_83 = arith.constant 0 : index
    %199 = vector.load %arg6[%c7, %c0_82, %c0_83] : memref<24x8x128xf32, #tpu.memory_space<vmem>>, vector<1x8x128xf32>
    %200 = vector.shape_cast %199 : vector<1x8x128xf32> to vector<8x128xf32>
    %201 = arith.truncf %191 : vector<8x32xf32> to vector<8x32xbf16>
    %cst_84 = arith.constant dense<0.000000e+00> : vector<8x128xf32>
    %202 = tpu.matmul %201, %7, %cst_84 {dimension_numbers = #tpu.dot_dimension_numbers<[1], [0], [0], [1], [0, 0, 1, 1], [], []>} : vector<8x32xbf16>, vector<32x128xbf16>, vector<8x128xf32> -> vector<8x128xf32>
    %203 = arith.addf %200, %202 : vector<8x128xf32>
    %204 = arith.negf %203 : vector<8x128xf32>
    %205 = math.exp %204 : vector<8x128xf32>
    %cst_85 = arith.constant 1.000000e+00 : f32
    %206 = vector.broadcast %cst_85 : f32 to vector<8x128xf32>
    %207 = arith.addf %206, %205 : vector<8x128xf32>
    %208 = arith.divf %206, %207 : vector<8x128xf32>
    %209 = vector.extract_strided_slice %203 {offsets = [0, 64], sizes = [8, 32], strides = [1, 1]} : vector<8x128xf32> to vector<8x32xf32>
    %210 = math.tanh %209 : vector<8x32xf32>
    %211 = vector.extract_strided_slice %208 {offsets = [0, 32], sizes = [8, 32], strides = [1, 1]} : vector<8x128xf32> to vector<8x32xf32>
    %212 = arith.mulf %211, %188 : vector<8x32xf32>
    %213 = vector.extract_strided_slice %208 {offsets = [0, 0], sizes = [8, 32], strides = [1, 1]} : vector<8x128xf32> to vector<8x32xf32>
    %214 = arith.mulf %213, %210 : vector<8x32xf32>
    %215 = arith.addf %212, %214 : vector<8x32xf32>
    %216 = vector.extract_strided_slice %208 {offsets = [0, 96], sizes = [8, 32], strides = [1, 1]} : vector<8x128xf32> to vector<8x32xf32>
    %217 = math.tanh %215 : vector<8x32xf32>
    %218 = arith.mulf %216, %217 : vector<8x32xf32>
    %c7_86 = arith.constant 7 : index
    %c0_87 = arith.constant 0 : index
    %c0_88 = arith.constant 0 : index
    %219 = vector.load %arg2[%c7_86, %c0_87, %c0_88] : memref<24x8x1xf32, #tpu.memory_space<vmem>>, vector<1x8x1xf32>
    %220 = vector.shape_cast %219 : vector<1x8x1xf32> to vector<8x1xf32>
    %221 = vector.broadcast %220 : vector<8x1xf32> to vector<8x32xf32>
    %222 = arith.mulf %221, %218 : vector<8x32xf32>
    %c7_89 = arith.constant 7 : index
    %c0_90 = arith.constant 0 : index
    %c0_91 = arith.constant 0 : index
    %223 = vector.load %arg5[%c7_89, %c0_90, %c0_91] : memref<24x8x32xf32, #tpu.memory_space<vmem>>, vector<1x8x32xf32>
    %224 = vector.shape_cast %223 : vector<1x8x32xf32> to vector<8x32xf32>
    %225 = vector.shape_cast %222 : vector<8x32xf32> to vector<1x8x32xf32>
    tpu.vector_store %arg5[%c7_89, %c0_90, %c0_91], %225 {strides = array<i32>} : memref<24x8x32xf32, #tpu.memory_space<vmem>>, vector<1x8x32xf32>,
    %c8 = arith.constant 8 : index
    %c0_92 = arith.constant 0 : index
    %c0_93 = arith.constant 0 : index
    %226 = vector.load %arg6[%c8, %c0_92, %c0_93] : memref<24x8x128xf32, #tpu.memory_space<vmem>>, vector<1x8x128xf32>
    %227 = vector.shape_cast %226 : vector<1x8x128xf32> to vector<8x128xf32>
    %228 = arith.truncf %218 : vector<8x32xf32> to vector<8x32xbf16>
    %cst_94 = arith.constant dense<0.000000e+00> : vector<8x128xf32>
    %229 = tpu.matmul %228, %7, %cst_94 {dimension_numbers = #tpu.dot_dimension_numbers<[1], [0], [0], [1], [0, 0, 1, 1], [], []>} : vector<8x32xbf16>, vector<32x128xbf16>, vector<8x128xf32> -> vector<8x128xf32>
    %230 = arith.addf %227, %229 : vector<8x128xf32>
    %231 = arith.negf %230 : vector<8x128xf32>
    %232 = math.exp %231 : vector<8x128xf32>
    %cst_95 = arith.constant 1.000000e+00 : f32
    %233 = vector.broadcast %cst_95 : f32 to vector<8x128xf32>
    %234 = arith.addf %233, %232 : vector<8x128xf32>
    %235 = arith.divf %233, %234 : vector<8x128xf32>
    %236 = vector.extract_strided_slice %230 {offsets = [0, 64], sizes = [8, 32], strides = [1, 1]} : vector<8x128xf32> to vector<8x32xf32>
    %237 = math.tanh %236 : vector<8x32xf32>
    %238 = vector.extract_strided_slice %235 {offsets = [0, 32], sizes = [8, 32], strides = [1, 1]} : vector<8x128xf32> to vector<8x32xf32>
    %239 = arith.mulf %238, %215 : vector<8x32xf32>
    %240 = vector.extract_strided_slice %235 {offsets = [0, 0], sizes = [8, 32], strides = [1, 1]} : vector<8x128xf32> to vector<8x32xf32>
    %241 = arith.mulf %240, %237 : vector<8x32xf32>
    %242 = arith.addf %239, %241 : vector<8x32xf32>
    %243 = vector.extract_strided_slice %235 {offsets = [0, 96], sizes = [8, 32], strides = [1, 1]} : vector<8x128xf32> to vector<8x32xf32>
    %244 = math.tanh %242 : vector<8x32xf32>
    %245 = arith.mulf %243, %244 : vector<8x32xf32>
    %c8_96 = arith.constant 8 : index
    %c0_97 = arith.constant 0 : index
    %c0_98 = arith.constant 0 : index
    %246 = vector.load %arg2[%c8_96, %c0_97, %c0_98] : memref<24x8x1xf32, #tpu.memory_space<vmem>>, vector<1x8x1xf32>
    %247 = vector.shape_cast %246 : vector<1x8x1xf32> to vector<8x1xf32>
    %248 = vector.broadcast %247 : vector<8x1xf32> to vector<8x32xf32>
    %249 = arith.mulf %248, %245 : vector<8x32xf32>
    %c8_99 = arith.constant 8 : index
    %c0_100 = arith.constant 0 : index
    %c0_101 = arith.constant 0 : index
    %250 = vector.load %arg5[%c8_99, %c0_100, %c0_101] : memref<24x8x32xf32, #tpu.memory_space<vmem>>, vector<1x8x32xf32>
    %251 = vector.shape_cast %250 : vector<1x8x32xf32> to vector<8x32xf32>
    %252 = vector.shape_cast %249 : vector<8x32xf32> to vector<1x8x32xf32>
    tpu.vector_store %arg5[%c8_99, %c0_100, %c0_101], %252 {strides = array<i32>} : memref<24x8x32xf32, #tpu.memory_space<vmem>>, vector<1x8x32xf32>,
    %c9 = arith.constant 9 : index
    %c0_102 = arith.constant 0 : index
    %c0_103 = arith.constant 0 : index
    %253 = vector.load %arg6[%c9, %c0_102, %c0_103] : memref<24x8x128xf32, #tpu.memory_space<vmem>>, vector<1x8x128xf32>
    %254 = vector.shape_cast %253 : vector<1x8x128xf32> to vector<8x128xf32>
    %255 = arith.truncf %245 : vector<8x32xf32> to vector<8x32xbf16>
    %cst_104 = arith.constant dense<0.000000e+00> : vector<8x128xf32>
    %256 = tpu.matmul %255, %7, %cst_104 {dimension_numbers = #tpu.dot_dimension_numbers<[1], [0], [0], [1], [0, 0, 1, 1], [], []>} : vector<8x32xbf16>, vector<32x128xbf16>, vector<8x128xf32> -> vector<8x128xf32>
    %257 = arith.addf %254, %256 : vector<8x128xf32>
    %258 = arith.negf %257 : vector<8x128xf32>
    %259 = math.exp %258 : vector<8x128xf32>
    %cst_105 = arith.constant 1.000000e+00 : f32
    %260 = vector.broadcast %cst_105 : f32 to vector<8x128xf32>
    %261 = arith.addf %260, %259 : vector<8x128xf32>
    %262 = arith.divf %260, %261 : vector<8x128xf32>
    %263 = vector.extract_strided_slice %257 {offsets = [0, 64], sizes = [8, 32], strides = [1, 1]} : vector<8x128xf32> to vector<8x32xf32>
    %264 = math.tanh %263 : vector<8x32xf32>
    %265 = vector.extract_strided_slice %262 {offsets = [0, 32], sizes = [8, 32], strides = [1, 1]} : vector<8x128xf32> to vector<8x32xf32>
    %266 = arith.mulf %265, %242 : vector<8x32xf32>
    %267 = vector.extract_strided_slice %262 {offsets = [0, 0], sizes = [8, 32], strides = [1, 1]} : vector<8x128xf32> to vector<8x32xf32>
    %268 = arith.mulf %267, %264 : vector<8x32xf32>
    %269 = arith.addf %266, %268 : vector<8x32xf32>
    %270 = vector.extract_strided_slice %262 {offsets = [0, 96], sizes = [8, 32], strides = [1, 1]} : vector<8x128xf32> to vector<8x32xf32>
    %271 = math.tanh %269 : vector<8x32xf32>
    %272 = arith.mulf %270, %271 : vector<8x32xf32>
    %c9_106 = arith.constant 9 : index
    %c0_107 = arith.constant 0 : index
    %c0_108 = arith.constant 0 : index
    %273 = vector.load %arg2[%c9_106, %c0_107, %c0_108] : memref<24x8x1xf32, #tpu.memory_space<vmem>>, vector<1x8x1xf32>
    %274 = vector.shape_cast %273 : vector<1x8x1xf32> to vector<8x1xf32>
    %275 = vector.broadcast %274 : vector<8x1xf32> to vector<8x32xf32>
    %276 = arith.mulf %275, %272 : vector<8x32xf32>
    %c9_109 = arith.constant 9 : index
    %c0_110 = arith.constant 0 : index
    %c0_111 = arith.constant 0 : index
    %277 = vector.load %arg5[%c9_109, %c0_110, %c0_111] : memref<24x8x32xf32, #tpu.memory_space<vmem>>, vector<1x8x32xf32>
    %278 = vector.shape_cast %277 : vector<1x8x32xf32> to vector<8x32xf32>
    %279 = vector.shape_cast %276 : vector<8x32xf32> to vector<1x8x32xf32>
    tpu.vector_store %arg5[%c9_109, %c0_110, %c0_111], %279 {strides = array<i32>} : memref<24x8x32xf32, #tpu.memory_space<vmem>>, vector<1x8x32xf32>,
    %c10 = arith.constant 10 : index
    %c0_112 = arith.constant 0 : index
    %c0_113 = arith.constant 0 : index
    %280 = vector.load %arg6[%c10, %c0_112, %c0_113] : memref<24x8x128xf32, #tpu.memory_space<vmem>>, vector<1x8x128xf32>
    %281 = vector.shape_cast %280 : vector<1x8x128xf32> to vector<8x128xf32>
    %282 = arith.truncf %272 : vector<8x32xf32> to vector<8x32xbf16>
    %cst_114 = arith.constant dense<0.000000e+00> : vector<8x128xf32>
    %283 = tpu.matmul %282, %7, %cst_114 {dimension_numbers = #tpu.dot_dimension_numbers<[1], [0], [0], [1], [0, 0, 1, 1], [], []>} : vector<8x32xbf16>, vector<32x128xbf16>, vector<8x128xf32> -> vector<8x128xf32>
    %284 = arith.addf %281, %283 : vector<8x128xf32>
    %285 = arith.negf %284 : vector<8x128xf32>
    %286 = math.exp %285 : vector<8x128xf32>
    %cst_115 = arith.constant 1.000000e+00 : f32
    %287 = vector.broadcast %cst_115 : f32 to vector<8x128xf32>
    %288 = arith.addf %287, %286 : vector<8x128xf32>
    %289 = arith.divf %287, %288 : vector<8x128xf32>
    %290 = vector.extract_strided_slice %284 {offsets = [0, 64], sizes = [8, 32], strides = [1, 1]} : vector<8x128xf32> to vector<8x32xf32>
    %291 = math.tanh %290 : vector<8x32xf32>
    %292 = vector.extract_strided_slice %289 {offsets = [0, 32], sizes = [8, 32], strides = [1, 1]} : vector<8x128xf32> to vector<8x32xf32>
    %293 = arith.mulf %292, %269 : vector<8x32xf32>
    %294 = vector.extract_strided_slice %289 {offsets = [0, 0], sizes = [8, 32], strides = [1, 1]} : vector<8x128xf32> to vector<8x32xf32>
    %295 = arith.mulf %294, %291 : vector<8x32xf32>
    %296 = arith.addf %293, %295 : vector<8x32xf32>
    %297 = vector.extract_strided_slice %289 {offsets = [0, 96], sizes = [8, 32], strides = [1, 1]} : vector<8x128xf32> to vector<8x32xf32>
    %298 = math.tanh %296 : vector<8x32xf32>
    %299 = arith.mulf %297, %298 : vector<8x32xf32>
    %c10_116 = arith.constant 10 : index
    %c0_117 = arith.constant 0 : index
    %c0_118 = arith.constant 0 : index
    %300 = vector.load %arg2[%c10_116, %c0_117, %c0_118] : memref<24x8x1xf32, #tpu.memory_space<vmem>>, vector<1x8x1xf32>
    %301 = vector.shape_cast %300 : vector<1x8x1xf32> to vector<8x1xf32>
    %302 = vector.broadcast %301 : vector<8x1xf32> to vector<8x32xf32>
    %303 = arith.mulf %302, %299 : vector<8x32xf32>
    %c10_119 = arith.constant 10 : index
    %c0_120 = arith.constant 0 : index
    %c0_121 = arith.constant 0 : index
    %304 = vector.load %arg5[%c10_119, %c0_120, %c0_121] : memref<24x8x32xf32, #tpu.memory_space<vmem>>, vector<1x8x32xf32>
    %305 = vector.shape_cast %304 : vector<1x8x32xf32> to vector<8x32xf32>
    %306 = vector.shape_cast %303 : vector<8x32xf32> to vector<1x8x32xf32>
    tpu.vector_store %arg5[%c10_119, %c0_120, %c0_121], %306 {strides = array<i32>} : memref<24x8x32xf32, #tpu.memory_space<vmem>>, vector<1x8x32xf32>,
    %c11 = arith.constant 11 : index
    %c0_122 = arith.constant 0 : index
    %c0_123 = arith.constant 0 : index
    %307 = vector.load %arg6[%c11, %c0_122, %c0_123] : memref<24x8x128xf32, #tpu.memory_space<vmem>>, vector<1x8x128xf32>
    %308 = vector.shape_cast %307 : vector<1x8x128xf32> to vector<8x128xf32>
    %309 = arith.truncf %299 : vector<8x32xf32> to vector<8x32xbf16>
    %cst_124 = arith.constant dense<0.000000e+00> : vector<8x128xf32>
    %310 = tpu.matmul %309, %7, %cst_124 {dimension_numbers = #tpu.dot_dimension_numbers<[1], [0], [0], [1], [0, 0, 1, 1], [], []>} : vector<8x32xbf16>, vector<32x128xbf16>, vector<8x128xf32> -> vector<8x128xf32>
    %311 = arith.addf %308, %310 : vector<8x128xf32>
    %312 = arith.negf %311 : vector<8x128xf32>
    %313 = math.exp %312 : vector<8x128xf32>
    %cst_125 = arith.constant 1.000000e+00 : f32
    %314 = vector.broadcast %cst_125 : f32 to vector<8x128xf32>
    %315 = arith.addf %314, %313 : vector<8x128xf32>
    %316 = arith.divf %314, %315 : vector<8x128xf32>
    %317 = vector.extract_strided_slice %311 {offsets = [0, 64], sizes = [8, 32], strides = [1, 1]} : vector<8x128xf32> to vector<8x32xf32>
    %318 = math.tanh %317 : vector<8x32xf32>
    %319 = vector.extract_strided_slice %316 {offsets = [0, 32], sizes = [8, 32], strides = [1, 1]} : vector<8x128xf32> to vector<8x32xf32>
    %320 = arith.mulf %319, %296 : vector<8x32xf32>
    %321 = vector.extract_strided_slice %316 {offsets = [0, 0], sizes = [8, 32], strides = [1, 1]} : vector<8x128xf32> to vector<8x32xf32>
    %322 = arith.mulf %321, %318 : vector<8x32xf32>
    %323 = arith.addf %320, %322 : vector<8x32xf32>
    %324 = vector.extract_strided_slice %316 {offsets = [0, 96], sizes = [8, 32], strides = [1, 1]} : vector<8x128xf32> to vector<8x32xf32>
    %325 = math.tanh %323 : vector<8x32xf32>
    %326 = arith.mulf %324, %325 : vector<8x32xf32>
    %c11_126 = arith.constant 11 : index
    %c0_127 = arith.constant 0 : index
    %c0_128 = arith.constant 0 : index
    %327 = vector.load %arg2[%c11_126, %c0_127, %c0_128] : memref<24x8x1xf32, #tpu.memory_space<vmem>>, vector<1x8x1xf32>
    %328 = vector.shape_cast %327 : vector<1x8x1xf32> to vector<8x1xf32>
    %329 = vector.broadcast %328 : vector<8x1xf32> to vector<8x32xf32>
    %330 = arith.mulf %329, %326 : vector<8x32xf32>
    %c11_129 = arith.constant 11 : index
    %c0_130 = arith.constant 0 : index
    %c0_131 = arith.constant 0 : index
    %331 = vector.load %arg5[%c11_129, %c0_130, %c0_131] : memref<24x8x32xf32, #tpu.memory_space<vmem>>, vector<1x8x32xf32>
    %332 = vector.shape_cast %331 : vector<1x8x32xf32> to vector<8x32xf32>
    %333 = vector.shape_cast %330 : vector<8x32xf32> to vector<1x8x32xf32>
    tpu.vector_store %arg5[%c11_129, %c0_130, %c0_131], %333 {strides = array<i32>} : memref<24x8x32xf32, #tpu.memory_space<vmem>>, vector<1x8x32xf32>,
    %c12 = arith.constant 12 : index
    %c0_132 = arith.constant 0 : index
    %c0_133 = arith.constant 0 : index
    %334 = vector.load %arg6[%c12, %c0_132, %c0_133] : memref<24x8x128xf32, #tpu.memory_space<vmem>>, vector<1x8x128xf32>
    %335 = vector.shape_cast %334 : vector<1x8x128xf32> to vector<8x128xf32>
    %336 = arith.truncf %326 : vector<8x32xf32> to vector<8x32xbf16>
    %cst_134 = arith.constant dense<0.000000e+00> : vector<8x128xf32>
    %337 = tpu.matmul %336, %7, %cst_134 {dimension_numbers = #tpu.dot_dimension_numbers<[1], [0], [0], [1], [0, 0, 1, 1], [], []>} : vector<8x32xbf16>, vector<32x128xbf16>, vector<8x128xf32> -> vector<8x128xf32>
    %338 = arith.addf %335, %337 : vector<8x128xf32>
    %339 = arith.negf %338 : vector<8x128xf32>
    %340 = math.exp %339 : vector<8x128xf32>
    %cst_135 = arith.constant 1.000000e+00 : f32
    %341 = vector.broadcast %cst_135 : f32 to vector<8x128xf32>
    %342 = arith.addf %341, %340 : vector<8x128xf32>
    %343 = arith.divf %341, %342 : vector<8x128xf32>
    %344 = vector.extract_strided_slice %338 {offsets = [0, 64], sizes = [8, 32], strides = [1, 1]} : vector<8x128xf32> to vector<8x32xf32>
    %345 = math.tanh %344 : vector<8x32xf32>
    %346 = vector.extract_strided_slice %343 {offsets = [0, 32], sizes = [8, 32], strides = [1, 1]} : vector<8x128xf32> to vector<8x32xf32>
    %347 = arith.mulf %346, %323 : vector<8x32xf32>
    %348 = vector.extract_strided_slice %343 {offsets = [0, 0], sizes = [8, 32], strides = [1, 1]} : vector<8x128xf32> to vector<8x32xf32>
    %349 = arith.mulf %348, %345 : vector<8x32xf32>
    %350 = arith.addf %347, %349 : vector<8x32xf32>
    %351 = vector.extract_strided_slice %343 {offsets = [0, 96], sizes = [8, 32], strides = [1, 1]} : vector<8x128xf32> to vector<8x32xf32>
    %352 = math.tanh %350 : vector<8x32xf32>
    %353 = arith.mulf %351, %352 : vector<8x32xf32>
    %c12_136 = arith.constant 12 : index
    %c0_137 = arith.constant 0 : index
    %c0_138 = arith.constant 0 : index
    %354 = vector.load %arg2[%c12_136, %c0_137, %c0_138] : memref<24x8x1xf32, #tpu.memory_space<vmem>>, vector<1x8x1xf32>
    %355 = vector.shape_cast %354 : vector<1x8x1xf32> to vector<8x1xf32>
    %356 = vector.broadcast %355 : vector<8x1xf32> to vector<8x32xf32>
    %357 = arith.mulf %356, %353 : vector<8x32xf32>
    %c12_139 = arith.constant 12 : index
    %c0_140 = arith.constant 0 : index
    %c0_141 = arith.constant 0 : index
    %358 = vector.load %arg5[%c12_139, %c0_140, %c0_141] : memref<24x8x32xf32, #tpu.memory_space<vmem>>, vector<1x8x32xf32>
    %359 = vector.shape_cast %358 : vector<1x8x32xf32> to vector<8x32xf32>
    %360 = vector.shape_cast %357 : vector<8x32xf32> to vector<1x8x32xf32>
    tpu.vector_store %arg5[%c12_139, %c0_140, %c0_141], %360 {strides = array<i32>} : memref<24x8x32xf32, #tpu.memory_space<vmem>>, vector<1x8x32xf32>,
    %c13 = arith.constant 13 : index
    %c0_142 = arith.constant 0 : index
    %c0_143 = arith.constant 0 : index
    %361 = vector.load %arg6[%c13, %c0_142, %c0_143] : memref<24x8x128xf32, #tpu.memory_space<vmem>>, vector<1x8x128xf32>
    %362 = vector.shape_cast %361 : vector<1x8x128xf32> to vector<8x128xf32>
    %363 = arith.truncf %353 : vector<8x32xf32> to vector<8x32xbf16>
    %cst_144 = arith.constant dense<0.000000e+00> : vector<8x128xf32>
    %364 = tpu.matmul %363, %7, %cst_144 {dimension_numbers = #tpu.dot_dimension_numbers<[1], [0], [0], [1], [0, 0, 1, 1], [], []>} : vector<8x32xbf16>, vector<32x128xbf16>, vector<8x128xf32> -> vector<8x128xf32>
    %365 = arith.addf %362, %364 : vector<8x128xf32>
    %366 = arith.negf %365 : vector<8x128xf32>
    %367 = math.exp %366 : vector<8x128xf32>
    %cst_145 = arith.constant 1.000000e+00 : f32
    %368 = vector.broadcast %cst_145 : f32 to vector<8x128xf32>
    %369 = arith.addf %368, %367 : vector<8x128xf32>
    %370 = arith.divf %368, %369 : vector<8x128xf32>
    %371 = vector.extract_strided_slice %365 {offsets = [0, 64], sizes = [8, 32], strides = [1, 1]} : vector<8x128xf32> to vector<8x32xf32>
    %372 = math.tanh %371 : vector<8x32xf32>
    %373 = vector.extract_strided_slice %370 {offsets = [0, 32], sizes = [8, 32], strides = [1, 1]} : vector<8x128xf32> to vector<8x32xf32>
    %374 = arith.mulf %373, %350 : vector<8x32xf32>
    %375 = vector.extract_strided_slice %370 {offsets = [0, 0], sizes = [8, 32], strides = [1, 1]} : vector<8x128xf32> to vector<8x32xf32>
    %376 = arith.mulf %375, %372 : vector<8x32xf32>
    %377 = arith.addf %374, %376 : vector<8x32xf32>
    %378 = vector.extract_strided_slice %370 {offsets = [0, 96], sizes = [8, 32], strides = [1, 1]} : vector<8x128xf32> to vector<8x32xf32>
    %379 = math.tanh %377 : vector<8x32xf32>
    %380 = arith.mulf %378, %379 : vector<8x32xf32>
    %c13_146 = arith.constant 13 : index
    %c0_147 = arith.constant 0 : index
    %c0_148 = arith.constant 0 : index
    %381 = vector.load %arg2[%c13_146, %c0_147, %c0_148] : memref<24x8x1xf32, #tpu.memory_space<vmem>>, vector<1x8x1xf32>
    %382 = vector.shape_cast %381 : vector<1x8x1xf32> to vector<8x1xf32>
    %383 = vector.broadcast %382 : vector<8x1xf32> to vector<8x32xf32>
    %384 = arith.mulf %383, %380 : vector<8x32xf32>
    %c13_149 = arith.constant 13 : index
    %c0_150 = arith.constant 0 : index
    %c0_151 = arith.constant 0 : index
    %385 = vector.load %arg5[%c13_149, %c0_150, %c0_151] : memref<24x8x32xf32, #tpu.memory_space<vmem>>, vector<1x8x32xf32>
    %386 = vector.shape_cast %385 : vector<1x8x32xf32> to vector<8x32xf32>
    %387 = vector.shape_cast %384 : vector<8x32xf32> to vector<1x8x32xf32>
    tpu.vector_store %arg5[%c13_149, %c0_150, %c0_151], %387 {strides = array<i32>} : memref<24x8x32xf32, #tpu.memory_space<vmem>>, vector<1x8x32xf32>,
    %c14 = arith.constant 14 : index
    %c0_152 = arith.constant 0 : index
    %c0_153 = arith.constant 0 : index
    %388 = vector.load %arg6[%c14, %c0_152, %c0_153] : memref<24x8x128xf32, #tpu.memory_space<vmem>>, vector<1x8x128xf32>
    %389 = vector.shape_cast %388 : vector<1x8x128xf32> to vector<8x128xf32>
    %390 = arith.truncf %380 : vector<8x32xf32> to vector<8x32xbf16>
    %cst_154 = arith.constant dense<0.000000e+00> : vector<8x128xf32>
    %391 = tpu.matmul %390, %7, %cst_154 {dimension_numbers = #tpu.dot_dimension_numbers<[1], [0], [0], [1], [0, 0, 1, 1], [], []>} : vector<8x32xbf16>, vector<32x128xbf16>, vector<8x128xf32> -> vector<8x128xf32>
    %392 = arith.addf %389, %391 : vector<8x128xf32>
    %393 = arith.negf %392 : vector<8x128xf32>
    %394 = math.exp %393 : vector<8x128xf32>
    %cst_155 = arith.constant 1.000000e+00 : f32
    %395 = vector.broadcast %cst_155 : f32 to vector<8x128xf32>
    %396 = arith.addf %395, %394 : vector<8x128xf32>
    %397 = arith.divf %395, %396 : vector<8x128xf32>
    %398 = vector.extract_strided_slice %392 {offsets = [0, 64], sizes = [8, 32], strides = [1, 1]} : vector<8x128xf32> to vector<8x32xf32>
    %399 = math.tanh %398 : vector<8x32xf32>
    %400 = vector.extract_strided_slice %397 {offsets = [0, 32], sizes = [8, 32], strides = [1, 1]} : vector<8x128xf32> to vector<8x32xf32>
    %401 = arith.mulf %400, %377 : vector<8x32xf32>
    %402 = vector.extract_strided_slice %397 {offsets = [0, 0], sizes = [8, 32], strides = [1, 1]} : vector<8x128xf32> to vector<8x32xf32>
    %403 = arith.mulf %402, %399 : vector<8x32xf32>
    %404 = arith.addf %401, %403 : vector<8x32xf32>
    %405 = vector.extract_strided_slice %397 {offsets = [0, 96], sizes = [8, 32], strides = [1, 1]} : vector<8x128xf32> to vector<8x32xf32>
    %406 = math.tanh %404 : vector<8x32xf32>
    %407 = arith.mulf %405, %406 : vector<8x32xf32>
    %c14_156 = arith.constant 14 : index
    %c0_157 = arith.constant 0 : index
    %c0_158 = arith.constant 0 : index
    %408 = vector.load %arg2[%c14_156, %c0_157, %c0_158] : memref<24x8x1xf32, #tpu.memory_space<vmem>>, vector<1x8x1xf32>
    %409 = vector.shape_cast %408 : vector<1x8x1xf32> to vector<8x1xf32>
    %410 = vector.broadcast %409 : vector<8x1xf32> to vector<8x32xf32>
    %411 = arith.mulf %410, %407 : vector<8x32xf32>
    %c14_159 = arith.constant 14 : index
    %c0_160 = arith.constant 0 : index
    %c0_161 = arith.constant 0 : index
    %412 = vector.load %arg5[%c14_159, %c0_160, %c0_161] : memref<24x8x32xf32, #tpu.memory_space<vmem>>, vector<1x8x32xf32>
    %413 = vector.shape_cast %412 : vector<1x8x32xf32> to vector<8x32xf32>
    %414 = vector.shape_cast %411 : vector<8x32xf32> to vector<1x8x32xf32>
    tpu.vector_store %arg5[%c14_159, %c0_160, %c0_161], %414 {strides = array<i32>} : memref<24x8x32xf32, #tpu.memory_space<vmem>>, vector<1x8x32xf32>,
    %c15 = arith.constant 15 : index
    %c0_162 = arith.constant 0 : index
    %c0_163 = arith.constant 0 : index
    %415 = vector.load %arg6[%c15, %c0_162, %c0_163] : memref<24x8x128xf32, #tpu.memory_space<vmem>>, vector<1x8x128xf32>
    %416 = vector.shape_cast %415 : vector<1x8x128xf32> to vector<8x128xf32>
    %417 = arith.truncf %407 : vector<8x32xf32> to vector<8x32xbf16>
    %cst_164 = arith.constant dense<0.000000e+00> : vector<8x128xf32>
    %418 = tpu.matmul %417, %7, %cst_164 {dimension_numbers = #tpu.dot_dimension_numbers<[1], [0], [0], [1], [0, 0, 1, 1], [], []>} : vector<8x32xbf16>, vector<32x128xbf16>, vector<8x128xf32> -> vector<8x128xf32>
    %419 = arith.addf %416, %418 : vector<8x128xf32>
    %420 = arith.negf %419 : vector<8x128xf32>
    %421 = math.exp %420 : vector<8x128xf32>
    %cst_165 = arith.constant 1.000000e+00 : f32
    %422 = vector.broadcast %cst_165 : f32 to vector<8x128xf32>
    %423 = arith.addf %422, %421 : vector<8x128xf32>
    %424 = arith.divf %422, %423 : vector<8x128xf32>
    %425 = vector.extract_strided_slice %419 {offsets = [0, 64], sizes = [8, 32], strides = [1, 1]} : vector<8x128xf32> to vector<8x32xf32>
    %426 = math.tanh %425 : vector<8x32xf32>
    %427 = vector.extract_strided_slice %424 {offsets = [0, 32], sizes = [8, 32], strides = [1, 1]} : vector<8x128xf32> to vector<8x32xf32>
    %428 = arith.mulf %427, %404 : vector<8x32xf32>
    %429 = vector.extract_strided_slice %424 {offsets = [0, 0], sizes = [8, 32], strides = [1, 1]} : vector<8x128xf32> to vector<8x32xf32>
    %430 = arith.mulf %429, %426 : vector<8x32xf32>
    %431 = arith.addf %428, %430 : vector<8x32xf32>
    %432 = vector.extract_strided_slice %424 {offsets = [0, 96], sizes = [8, 32], strides = [1, 1]} : vector<8x128xf32> to vector<8x32xf32>
    %433 = math.tanh %431 : vector<8x32xf32>
    %434 = arith.mulf %432, %433 : vector<8x32xf32>
    %c15_166 = arith.constant 15 : index
    %c0_167 = arith.constant 0 : index
    %c0_168 = arith.constant 0 : index
    %435 = vector.load %arg2[%c15_166, %c0_167, %c0_168] : memref<24x8x1xf32, #tpu.memory_space<vmem>>, vector<1x8x1xf32>
    %436 = vector.shape_cast %435 : vector<1x8x1xf32> to vector<8x1xf32>
    %437 = vector.broadcast %436 : vector<8x1xf32> to vector<8x32xf32>
    %438 = arith.mulf %437, %434 : vector<8x32xf32>
    %c15_169 = arith.constant 15 : index
    %c0_170 = arith.constant 0 : index
    %c0_171 = arith.constant 0 : index
    %439 = vector.load %arg5[%c15_169, %c0_170, %c0_171] : memref<24x8x32xf32, #tpu.memory_space<vmem>>, vector<1x8x32xf32>
    %440 = vector.shape_cast %439 : vector<1x8x32xf32> to vector<8x32xf32>
    %441 = vector.shape_cast %438 : vector<8x32xf32> to vector<1x8x32xf32>
    tpu.vector_store %arg5[%c15_169, %c0_170, %c0_171], %441 {strides = array<i32>} : memref<24x8x32xf32, #tpu.memory_space<vmem>>, vector<1x8x32xf32>,
    %c16 = arith.constant 16 : index
    %c0_172 = arith.constant 0 : index
    %c0_173 = arith.constant 0 : index
    %442 = vector.load %arg6[%c16, %c0_172, %c0_173] : memref<24x8x128xf32, #tpu.memory_space<vmem>>, vector<1x8x128xf32>
    %443 = vector.shape_cast %442 : vector<1x8x128xf32> to vector<8x128xf32>
    %444 = arith.truncf %434 : vector<8x32xf32> to vector<8x32xbf16>
    %cst_174 = arith.constant dense<0.000000e+00> : vector<8x128xf32>
    %445 = tpu.matmul %444, %7, %cst_174 {dimension_numbers = #tpu.dot_dimension_numbers<[1], [0], [0], [1], [0, 0, 1, 1], [], []>} : vector<8x32xbf16>, vector<32x128xbf16>, vector<8x128xf32> -> vector<8x128xf32>
    %446 = arith.addf %443, %445 : vector<8x128xf32>
    %447 = arith.negf %446 : vector<8x128xf32>
    %448 = math.exp %447 : vector<8x128xf32>
    %cst_175 = arith.constant 1.000000e+00 : f32
    %449 = vector.broadcast %cst_175 : f32 to vector<8x128xf32>
    %450 = arith.addf %449, %448 : vector<8x128xf32>
    %451 = arith.divf %449, %450 : vector<8x128xf32>
    %452 = vector.extract_strided_slice %446 {offsets = [0, 64], sizes = [8, 32], strides = [1, 1]} : vector<8x128xf32> to vector<8x32xf32>
    %453 = math.tanh %452 : vector<8x32xf32>
    %454 = vector.extract_strided_slice %451 {offsets = [0, 32], sizes = [8, 32], strides = [1, 1]} : vector<8x128xf32> to vector<8x32xf32>
    %455 = arith.mulf %454, %431 : vector<8x32xf32>
    %456 = vector.extract_strided_slice %451 {offsets = [0, 0], sizes = [8, 32], strides = [1, 1]} : vector<8x128xf32> to vector<8x32xf32>
    %457 = arith.mulf %456, %453 : vector<8x32xf32>
    %458 = arith.addf %455, %457 : vector<8x32xf32>
    %459 = vector.extract_strided_slice %451 {offsets = [0, 96], sizes = [8, 32], strides = [1, 1]} : vector<8x128xf32> to vector<8x32xf32>
    %460 = math.tanh %458 : vector<8x32xf32>
    %461 = arith.mulf %459, %460 : vector<8x32xf32>
    %c16_176 = arith.constant 16 : index
    %c0_177 = arith.constant 0 : index
    %c0_178 = arith.constant 0 : index
    %462 = vector.load %arg2[%c16_176, %c0_177, %c0_178] : memref<24x8x1xf32, #tpu.memory_space<vmem>>, vector<1x8x1xf32>
    %463 = vector.shape_cast %462 : vector<1x8x1xf32> to vector<8x1xf32>
    %464 = vector.broadcast %463 : vector<8x1xf32> to vector<8x32xf32>
    %465 = arith.mulf %464, %461 : vector<8x32xf32>
    %c16_179 = arith.constant 16 : index
    %c0_180 = arith.constant 0 : index
    %c0_181 = arith.constant 0 : index
    %466 = vector.load %arg5[%c16_179, %c0_180, %c0_181] : memref<24x8x32xf32, #tpu.memory_space<vmem>>, vector<1x8x32xf32>
    %467 = vector.shape_cast %466 : vector<1x8x32xf32> to vector<8x32xf32>
    %468 = vector.shape_cast %465 : vector<8x32xf32> to vector<1x8x32xf32>
    tpu.vector_store %arg5[%c16_179, %c0_180, %c0_181], %468 {strides = array<i32>} : memref<24x8x32xf32, #tpu.memory_space<vmem>>, vector<1x8x32xf32>,
    %c17 = arith.constant 17 : index
    %c0_182 = arith.constant 0 : index
    %c0_183 = arith.constant 0 : index
    %469 = vector.load %arg6[%c17, %c0_182, %c0_183] : memref<24x8x128xf32, #tpu.memory_space<vmem>>, vector<1x8x128xf32>
    %470 = vector.shape_cast %469 : vector<1x8x128xf32> to vector<8x128xf32>
    %471 = arith.truncf %461 : vector<8x32xf32> to vector<8x32xbf16>
    %cst_184 = arith.constant dense<0.000000e+00> : vector<8x128xf32>
    %472 = tpu.matmul %471, %7, %cst_184 {dimension_numbers = #tpu.dot_dimension_numbers<[1], [0], [0], [1], [0, 0, 1, 1], [], []>} : vector<8x32xbf16>, vector<32x128xbf16>, vector<8x128xf32> -> vector<8x128xf32>
    %473 = arith.addf %470, %472 : vector<8x128xf32>
    %474 = arith.negf %473 : vector<8x128xf32>
    %475 = math.exp %474 : vector<8x128xf32>
    %cst_185 = arith.constant 1.000000e+00 : f32
    %476 = vector.broadcast %cst_185 : f32 to vector<8x128xf32>
    %477 = arith.addf %476, %475 : vector<8x128xf32>
    %478 = arith.divf %476, %477 : vector<8x128xf32>
    %479 = vector.extract_strided_slice %473 {offsets = [0, 64], sizes = [8, 32], strides = [1, 1]} : vector<8x128xf32> to vector<8x32xf32>
    %480 = math.tanh %479 : vector<8x32xf32>
    %481 = vector.extract_strided_slice %478 {offsets = [0, 32], sizes = [8, 32], strides = [1, 1]} : vector<8x128xf32> to vector<8x32xf32>
    %482 = arith.mulf %481, %458 : vector<8x32xf32>
    %483 = vector.extract_strided_slice %478 {offsets = [0, 0], sizes = [8, 32], strides = [1, 1]} : vector<8x128xf32> to vector<8x32xf32>
    %484 = arith.mulf %483, %480 : vector<8x32xf32>
    %485 = arith.addf %482, %484 : vector<8x32xf32>
    %486 = vector.extract_strided_slice %478 {offsets = [0, 96], sizes = [8, 32], strides = [1, 1]} : vector<8x128xf32> to vector<8x32xf32>
    %487 = math.tanh %485 : vector<8x32xf32>
    %488 = arith.mulf %486, %487 : vector<8x32xf32>
    %c17_186 = arith.constant 17 : index
    %c0_187 = arith.constant 0 : index
    %c0_188 = arith.constant 0 : index
    %489 = vector.load %arg2[%c17_186, %c0_187, %c0_188] : memref<24x8x1xf32, #tpu.memory_space<vmem>>, vector<1x8x1xf32>
    %490 = vector.shape_cast %489 : vector<1x8x1xf32> to vector<8x1xf32>
    %491 = vector.broadcast %490 : vector<8x1xf32> to vector<8x32xf32>
    %492 = arith.mulf %491, %488 : vector<8x32xf32>
    %c17_189 = arith.constant 17 : index
    %c0_190 = arith.constant 0 : index
    %c0_191 = arith.constant 0 : index
    %493 = vector.load %arg5[%c17_189, %c0_190, %c0_191] : memref<24x8x32xf32, #tpu.memory_space<vmem>>, vector<1x8x32xf32>
    %494 = vector.shape_cast %493 : vector<1x8x32xf32> to vector<8x32xf32>
    %495 = vector.shape_cast %492 : vector<8x32xf32> to vector<1x8x32xf32>
    tpu.vector_store %arg5[%c17_189, %c0_190, %c0_191], %495 {strides = array<i32>} : memref<24x8x32xf32, #tpu.memory_space<vmem>>, vector<1x8x32xf32>,
    %c18 = arith.constant 18 : index
    %c0_192 = arith.constant 0 : index
    %c0_193 = arith.constant 0 : index
    %496 = vector.load %arg6[%c18, %c0_192, %c0_193] : memref<24x8x128xf32, #tpu.memory_space<vmem>>, vector<1x8x128xf32>
    %497 = vector.shape_cast %496 : vector<1x8x128xf32> to vector<8x128xf32>
    %498 = arith.truncf %488 : vector<8x32xf32> to vector<8x32xbf16>
    %cst_194 = arith.constant dense<0.000000e+00> : vector<8x128xf32>
    %499 = tpu.matmul %498, %7, %cst_194 {dimension_numbers = #tpu.dot_dimension_numbers<[1], [0], [0], [1], [0, 0, 1, 1], [], []>} : vector<8x32xbf16>, vector<32x128xbf16>, vector<8x128xf32> -> vector<8x128xf32>
    %500 = arith.addf %497, %499 : vector<8x128xf32>
    %501 = arith.negf %500 : vector<8x128xf32>
    %502 = math.exp %501 : vector<8x128xf32>
    %cst_195 = arith.constant 1.000000e+00 : f32
    %503 = vector.broadcast %cst_195 : f32 to vector<8x128xf32>
    %504 = arith.addf %503, %502 : vector<8x128xf32>
    %505 = arith.divf %503, %504 : vector<8x128xf32>
    %506 = vector.extract_strided_slice %500 {offsets = [0, 64], sizes = [8, 32], strides = [1, 1]} : vector<8x128xf32> to vector<8x32xf32>
    %507 = math.tanh %506 : vector<8x32xf32>
    %508 = vector.extract_strided_slice %505 {offsets = [0, 32], sizes = [8, 32], strides = [1, 1]} : vector<8x128xf32> to vector<8x32xf32>
    %509 = arith.mulf %508, %485 : vector<8x32xf32>
    %510 = vector.extract_strided_slice %505 {offsets = [0, 0], sizes = [8, 32], strides = [1, 1]} : vector<8x128xf32> to vector<8x32xf32>
    %511 = arith.mulf %510, %507 : vector<8x32xf32>
    %512 = arith.addf %509, %511 : vector<8x32xf32>
    %513 = vector.extract_strided_slice %505 {offsets = [0, 96], sizes = [8, 32], strides = [1, 1]} : vector<8x128xf32> to vector<8x32xf32>
    %514 = math.tanh %512 : vector<8x32xf32>
    %515 = arith.mulf %513, %514 : vector<8x32xf32>
    %c18_196 = arith.constant 18 : index
    %c0_197 = arith.constant 0 : index
    %c0_198 = arith.constant 0 : index
    %516 = vector.load %arg2[%c18_196, %c0_197, %c0_198] : memref<24x8x1xf32, #tpu.memory_space<vmem>>, vector<1x8x1xf32>
    %517 = vector.shape_cast %516 : vector<1x8x1xf32> to vector<8x1xf32>
    %518 = vector.broadcast %517 : vector<8x1xf32> to vector<8x32xf32>
    %519 = arith.mulf %518, %515 : vector<8x32xf32>
    %c18_199 = arith.constant 18 : index
    %c0_200 = arith.constant 0 : index
    %c0_201 = arith.constant 0 : index
    %520 = vector.load %arg5[%c18_199, %c0_200, %c0_201] : memref<24x8x32xf32, #tpu.memory_space<vmem>>, vector<1x8x32xf32>
    %521 = vector.shape_cast %520 : vector<1x8x32xf32> to vector<8x32xf32>
    %522 = vector.shape_cast %519 : vector<8x32xf32> to vector<1x8x32xf32>
    tpu.vector_store %arg5[%c18_199, %c0_200, %c0_201], %522 {strides = array<i32>} : memref<24x8x32xf32, #tpu.memory_space<vmem>>, vector<1x8x32xf32>,
    %c19 = arith.constant 19 : index
    %c0_202 = arith.constant 0 : index
    %c0_203 = arith.constant 0 : index
    %523 = vector.load %arg6[%c19, %c0_202, %c0_203] : memref<24x8x128xf32, #tpu.memory_space<vmem>>, vector<1x8x128xf32>
    %524 = vector.shape_cast %523 : vector<1x8x128xf32> to vector<8x128xf32>
    %525 = arith.truncf %515 : vector<8x32xf32> to vector<8x32xbf16>
    %cst_204 = arith.constant dense<0.000000e+00> : vector<8x128xf32>
    %526 = tpu.matmul %525, %7, %cst_204 {dimension_numbers = #tpu.dot_dimension_numbers<[1], [0], [0], [1], [0, 0, 1, 1], [], []>} : vector<8x32xbf16>, vector<32x128xbf16>, vector<8x128xf32> -> vector<8x128xf32>
    %527 = arith.addf %524, %526 : vector<8x128xf32>
    %528 = arith.negf %527 : vector<8x128xf32>
    %529 = math.exp %528 : vector<8x128xf32>
    %cst_205 = arith.constant 1.000000e+00 : f32
    %530 = vector.broadcast %cst_205 : f32 to vector<8x128xf32>
    %531 = arith.addf %530, %529 : vector<8x128xf32>
    %532 = arith.divf %530, %531 : vector<8x128xf32>
    %533 = vector.extract_strided_slice %527 {offsets = [0, 64], sizes = [8, 32], strides = [1, 1]} : vector<8x128xf32> to vector<8x32xf32>
    %534 = math.tanh %533 : vector<8x32xf32>
    %535 = vector.extract_strided_slice %532 {offsets = [0, 32], sizes = [8, 32], strides = [1, 1]} : vector<8x128xf32> to vector<8x32xf32>
    %536 = arith.mulf %535, %512 : vector<8x32xf32>
    %537 = vector.extract_strided_slice %532 {offsets = [0, 0], sizes = [8, 32], strides = [1, 1]} : vector<8x128xf32> to vector<8x32xf32>
    %538 = arith.mulf %537, %534 : vector<8x32xf32>
    %539 = arith.addf %536, %538 : vector<8x32xf32>
    %540 = vector.extract_strided_slice %532 {offsets = [0, 96], sizes = [8, 32], strides = [1, 1]} : vector<8x128xf32> to vector<8x32xf32>
    %541 = math.tanh %539 : vector<8x32xf32>
    %542 = arith.mulf %540, %541 : vector<8x32xf32>
    %c19_206 = arith.constant 19 : index
    %c0_207 = arith.constant 0 : index
    %c0_208 = arith.constant 0 : index
    %543 = vector.load %arg2[%c19_206, %c0_207, %c0_208] : memref<24x8x1xf32, #tpu.memory_space<vmem>>, vector<1x8x1xf32>
    %544 = vector.shape_cast %543 : vector<1x8x1xf32> to vector<8x1xf32>
    %545 = vector.broadcast %544 : vector<8x1xf32> to vector<8x32xf32>
    %546 = arith.mulf %545, %542 : vector<8x32xf32>
    %c19_209 = arith.constant 19 : index
    %c0_210 = arith.constant 0 : index
    %c0_211 = arith.constant 0 : index
    %547 = vector.load %arg5[%c19_209, %c0_210, %c0_211] : memref<24x8x32xf32, #tpu.memory_space<vmem>>, vector<1x8x32xf32>
    %548 = vector.shape_cast %547 : vector<1x8x32xf32> to vector<8x32xf32>
    %549 = vector.shape_cast %546 : vector<8x32xf32> to vector<1x8x32xf32>
    tpu.vector_store %arg5[%c19_209, %c0_210, %c0_211], %549 {strides = array<i32>} : memref<24x8x32xf32, #tpu.memory_space<vmem>>, vector<1x8x32xf32>,
    %c20 = arith.constant 20 : index
    %c0_212 = arith.constant 0 : index
    %c0_213 = arith.constant 0 : index
    %550 = vector.load %arg6[%c20, %c0_212, %c0_213] : memref<24x8x128xf32, #tpu.memory_space<vmem>>, vector<1x8x128xf32>
    %551 = vector.shape_cast %550 : vector<1x8x128xf32> to vector<8x128xf32>
    %552 = arith.truncf %542 : vector<8x32xf32> to vector<8x32xbf16>
    %cst_214 = arith.constant dense<0.000000e+00> : vector<8x128xf32>
    %553 = tpu.matmul %552, %7, %cst_214 {dimension_numbers = #tpu.dot_dimension_numbers<[1], [0], [0], [1], [0, 0, 1, 1], [], []>} : vector<8x32xbf16>, vector<32x128xbf16>, vector<8x128xf32> -> vector<8x128xf32>
    %554 = arith.addf %551, %553 : vector<8x128xf32>
    %555 = arith.negf %554 : vector<8x128xf32>
    %556 = math.exp %555 : vector<8x128xf32>
    %cst_215 = arith.constant 1.000000e+00 : f32
    %557 = vector.broadcast %cst_215 : f32 to vector<8x128xf32>
    %558 = arith.addf %557, %556 : vector<8x128xf32>
    %559 = arith.divf %557, %558 : vector<8x128xf32>
    %560 = vector.extract_strided_slice %554 {offsets = [0, 64], sizes = [8, 32], strides = [1, 1]} : vector<8x128xf32> to vector<8x32xf32>
    %561 = math.tanh %560 : vector<8x32xf32>
    %562 = vector.extract_strided_slice %559 {offsets = [0, 32], sizes = [8, 32], strides = [1, 1]} : vector<8x128xf32> to vector<8x32xf32>
    %563 = arith.mulf %562, %539 : vector<8x32xf32>
    %564 = vector.extract_strided_slice %559 {offsets = [0, 0], sizes = [8, 32], strides = [1, 1]} : vector<8x128xf32> to vector<8x32xf32>
    %565 = arith.mulf %564, %561 : vector<8x32xf32>
    %566 = arith.addf %563, %565 : vector<8x32xf32>
    %567 = vector.extract_strided_slice %559 {offsets = [0, 96], sizes = [8, 32], strides = [1, 1]} : vector<8x128xf32> to vector<8x32xf32>
    %568 = math.tanh %566 : vector<8x32xf32>
    %569 = arith.mulf %567, %568 : vector<8x32xf32>
    %c20_216 = arith.constant 20 : index
    %c0_217 = arith.constant 0 : index
    %c0_218 = arith.constant 0 : index
    %570 = vector.load %arg2[%c20_216, %c0_217, %c0_218] : memref<24x8x1xf32, #tpu.memory_space<vmem>>, vector<1x8x1xf32>
    %571 = vector.shape_cast %570 : vector<1x8x1xf32> to vector<8x1xf32>
    %572 = vector.broadcast %571 : vector<8x1xf32> to vector<8x32xf32>
    %573 = arith.mulf %572, %569 : vector<8x32xf32>
    %c20_219 = arith.constant 20 : index
    %c0_220 = arith.constant 0 : index
    %c0_221 = arith.constant 0 : index
    %574 = vector.load %arg5[%c20_219, %c0_220, %c0_221] : memref<24x8x32xf32, #tpu.memory_space<vmem>>, vector<1x8x32xf32>
    %575 = vector.shape_cast %574 : vector<1x8x32xf32> to vector<8x32xf32>
    %576 = vector.shape_cast %573 : vector<8x32xf32> to vector<1x8x32xf32>
    tpu.vector_store %arg5[%c20_219, %c0_220, %c0_221], %576 {strides = array<i32>} : memref<24x8x32xf32, #tpu.memory_space<vmem>>, vector<1x8x32xf32>,
    %c21 = arith.constant 21 : index
    %c0_222 = arith.constant 0 : index
    %c0_223 = arith.constant 0 : index
    %577 = vector.load %arg6[%c21, %c0_222, %c0_223] : memref<24x8x128xf32, #tpu.memory_space<vmem>>, vector<1x8x128xf32>
    %578 = vector.shape_cast %577 : vector<1x8x128xf32> to vector<8x128xf32>
    %579 = arith.truncf %569 : vector<8x32xf32> to vector<8x32xbf16>
    %cst_224 = arith.constant dense<0.000000e+00> : vector<8x128xf32>
    %580 = tpu.matmul %579, %7, %cst_224 {dimension_numbers = #tpu.dot_dimension_numbers<[1], [0], [0], [1], [0, 0, 1, 1], [], []>} : vector<8x32xbf16>, vector<32x128xbf16>, vector<8x128xf32> -> vector<8x128xf32>
    %581 = arith.addf %578, %580 : vector<8x128xf32>
    %582 = arith.negf %581 : vector<8x128xf32>
    %583 = math.exp %582 : vector<8x128xf32>
    %cst_225 = arith.constant 1.000000e+00 : f32
    %584 = vector.broadcast %cst_225 : f32 to vector<8x128xf32>
    %585 = arith.addf %584, %583 : vector<8x128xf32>
    %586 = arith.divf %584, %585 : vector<8x128xf32>
    %587 = vector.extract_strided_slice %581 {offsets = [0, 64], sizes = [8, 32], strides = [1, 1]} : vector<8x128xf32> to vector<8x32xf32>
    %588 = math.tanh %587 : vector<8x32xf32>
    %589 = vector.extract_strided_slice %586 {offsets = [0, 32], sizes = [8, 32], strides = [1, 1]} : vector<8x128xf32> to vector<8x32xf32>
    %590 = arith.mulf %589, %566 : vector<8x32xf32>
    %591 = vector.extract_strided_slice %586 {offsets = [0, 0], sizes = [8, 32], strides = [1, 1]} : vector<8x128xf32> to vector<8x32xf32>
    %592 = arith.mulf %591, %588 : vector<8x32xf32>
    %593 = arith.addf %590, %592 : vector<8x32xf32>
    %594 = vector.extract_strided_slice %586 {offsets = [0, 96], sizes = [8, 32], strides = [1, 1]} : vector<8x128xf32> to vector<8x32xf32>
    %595 = math.tanh %593 : vector<8x32xf32>
    %596 = arith.mulf %594, %595 : vector<8x32xf32>
    %c21_226 = arith.constant 21 : index
    %c0_227 = arith.constant 0 : index
    %c0_228 = arith.constant 0 : index
    %597 = vector.load %arg2[%c21_226, %c0_227, %c0_228] : memref<24x8x1xf32, #tpu.memory_space<vmem>>, vector<1x8x1xf32>
    %598 = vector.shape_cast %597 : vector<1x8x1xf32> to vector<8x1xf32>
    %599 = vector.broadcast %598 : vector<8x1xf32> to vector<8x32xf32>
    %600 = arith.mulf %599, %596 : vector<8x32xf32>
    %c21_229 = arith.constant 21 : index
    %c0_230 = arith.constant 0 : index
    %c0_231 = arith.constant 0 : index
    %601 = vector.load %arg5[%c21_229, %c0_230, %c0_231] : memref<24x8x32xf32, #tpu.memory_space<vmem>>, vector<1x8x32xf32>
    %602 = vector.shape_cast %601 : vector<1x8x32xf32> to vector<8x32xf32>
    %603 = vector.shape_cast %600 : vector<8x32xf32> to vector<1x8x32xf32>
    tpu.vector_store %arg5[%c21_229, %c0_230, %c0_231], %603 {strides = array<i32>} : memref<24x8x32xf32, #tpu.memory_space<vmem>>, vector<1x8x32xf32>,
    %c22 = arith.constant 22 : index
    %c0_232 = arith.constant 0 : index
    %c0_233 = arith.constant 0 : index
    %604 = vector.load %arg6[%c22, %c0_232, %c0_233] : memref<24x8x128xf32, #tpu.memory_space<vmem>>, vector<1x8x128xf32>
    %605 = vector.shape_cast %604 : vector<1x8x128xf32> to vector<8x128xf32>
    %606 = arith.truncf %596 : vector<8x32xf32> to vector<8x32xbf16>
    %cst_234 = arith.constant dense<0.000000e+00> : vector<8x128xf32>
    %607 = tpu.matmul %606, %7, %cst_234 {dimension_numbers = #tpu.dot_dimension_numbers<[1], [0], [0], [1], [0, 0, 1, 1], [], []>} : vector<8x32xbf16>, vector<32x128xbf16>, vector<8x128xf32> -> vector<8x128xf32>
    %608 = arith.addf %605, %607 : vector<8x128xf32>
    %609 = arith.negf %608 : vector<8x128xf32>
    %610 = math.exp %609 : vector<8x128xf32>
    %cst_235 = arith.constant 1.000000e+00 : f32
    %611 = vector.broadcast %cst_235 : f32 to vector<8x128xf32>
    %612 = arith.addf %611, %610 : vector<8x128xf32>
    %613 = arith.divf %611, %612 : vector<8x128xf32>
    %614 = vector.extract_strided_slice %608 {offsets = [0, 64], sizes = [8, 32], strides = [1, 1]} : vector<8x128xf32> to vector<8x32xf32>
    %615 = math.tanh %614 : vector<8x32xf32>
    %616 = vector.extract_strided_slice %613 {offsets = [0, 32], sizes = [8, 32], strides = [1, 1]} : vector<8x128xf32> to vector<8x32xf32>
    %617 = arith.mulf %616, %593 : vector<8x32xf32>
    %618 = vector.extract_strided_slice %613 {offsets = [0, 0], sizes = [8, 32], strides = [1, 1]} : vector<8x128xf32> to vector<8x32xf32>
    %619 = arith.mulf %618, %615 : vector<8x32xf32>
    %620 = arith.addf %617, %619 : vector<8x32xf32>
    %621 = vector.extract_strided_slice %613 {offsets = [0, 96], sizes = [8, 32], strides = [1, 1]} : vector<8x128xf32> to vector<8x32xf32>
    %622 = math.tanh %620 : vector<8x32xf32>
    %623 = arith.mulf %621, %622 : vector<8x32xf32>
    %c22_236 = arith.constant 22 : index
    %c0_237 = arith.constant 0 : index
    %c0_238 = arith.constant 0 : index
    %624 = vector.load %arg2[%c22_236, %c0_237, %c0_238] : memref<24x8x1xf32, #tpu.memory_space<vmem>>, vector<1x8x1xf32>
    %625 = vector.shape_cast %624 : vector<1x8x1xf32> to vector<8x1xf32>
    %626 = vector.broadcast %625 : vector<8x1xf32> to vector<8x32xf32>
    %627 = arith.mulf %626, %623 : vector<8x32xf32>
    %c22_239 = arith.constant 22 : index
    %c0_240 = arith.constant 0 : index
    %c0_241 = arith.constant 0 : index
    %628 = vector.load %arg5[%c22_239, %c0_240, %c0_241] : memref<24x8x32xf32, #tpu.memory_space<vmem>>, vector<1x8x32xf32>
    %629 = vector.shape_cast %628 : vector<1x8x32xf32> to vector<8x32xf32>
    %630 = vector.shape_cast %627 : vector<8x32xf32> to vector<1x8x32xf32>
    tpu.vector_store %arg5[%c22_239, %c0_240, %c0_241], %630 {strides = array<i32>} : memref<24x8x32xf32, #tpu.memory_space<vmem>>, vector<1x8x32xf32>,
    %c23 = arith.constant 23 : index
    %c0_242 = arith.constant 0 : index
    %c0_243 = arith.constant 0 : index
    %631 = vector.load %arg6[%c23, %c0_242, %c0_243] : memref<24x8x128xf32, #tpu.memory_space<vmem>>, vector<1x8x128xf32>
    %632 = vector.shape_cast %631 : vector<1x8x128xf32> to vector<8x128xf32>
    %633 = arith.truncf %623 : vector<8x32xf32> to vector<8x32xbf16>
    %cst_244 = arith.constant dense<0.000000e+00> : vector<8x128xf32>
    %634 = tpu.matmul %633, %7, %cst_244 {dimension_numbers = #tpu.dot_dimension_numbers<[1], [0], [0], [1], [0, 0, 1, 1], [], []>} : vector<8x32xbf16>, vector<32x128xbf16>, vector<8x128xf32> -> vector<8x128xf32>
    %635 = arith.addf %632, %634 : vector<8x128xf32>
    %636 = arith.negf %635 : vector<8x128xf32>
    %637 = math.exp %636 : vector<8x128xf32>
    %cst_245 = arith.constant 1.000000e+00 : f32
    %638 = vector.broadcast %cst_245 : f32 to vector<8x128xf32>
    %639 = arith.addf %638, %637 : vector<8x128xf32>
    %640 = arith.divf %638, %639 : vector<8x128xf32>
    %641 = vector.extract_strided_slice %635 {offsets = [0, 64], sizes = [8, 32], strides = [1, 1]} : vector<8x128xf32> to vector<8x32xf32>
    %642 = math.tanh %641 : vector<8x32xf32>
    %643 = vector.extract_strided_slice %640 {offsets = [0, 32], sizes = [8, 32], strides = [1, 1]} : vector<8x128xf32> to vector<8x32xf32>
    %644 = arith.mulf %643, %620 : vector<8x32xf32>
    %645 = vector.extract_strided_slice %640 {offsets = [0, 0], sizes = [8, 32], strides = [1, 1]} : vector<8x128xf32> to vector<8x32xf32>
    %646 = arith.mulf %645, %642 : vector<8x32xf32>
    %647 = arith.addf %644, %646 : vector<8x32xf32>
    %648 = vector.extract_strided_slice %640 {offsets = [0, 96], sizes = [8, 32], strides = [1, 1]} : vector<8x128xf32> to vector<8x32xf32>
    %649 = math.tanh %647 : vector<8x32xf32>
    %650 = arith.mulf %648, %649 : vector<8x32xf32>
    %c23_246 = arith.constant 23 : index
    %c0_247 = arith.constant 0 : index
    %c0_248 = arith.constant 0 : index
    %651 = vector.load %arg2[%c23_246, %c0_247, %c0_248] : memref<24x8x1xf32, #tpu.memory_space<vmem>>, vector<1x8x1xf32>
    %652 = vector.shape_cast %651 : vector<1x8x1xf32> to vector<8x1xf32>
    %653 = vector.broadcast %652 : vector<8x1xf32> to vector<8x32xf32>
    %654 = arith.mulf %653, %650 : vector<8x32xf32>
    %c23_249 = arith.constant 23 : index
    %c0_250 = arith.constant 0 : index
    %c0_251 = arith.constant 0 : index
    %655 = vector.load %arg5[%c23_249, %c0_250, %c0_251] : memref<24x8x32xf32, #tpu.memory_space<vmem>>, vector<1x8x32xf32>
    %656 = vector.shape_cast %655 : vector<1x8x32xf32> to vector<8x32xf32>
    %657 = vector.shape_cast %654 : vector<8x32xf32> to vector<1x8x32xf32>
    tpu.vector_store %arg5[%c23_249, %c0_250, %c0_251], %657 {strides = array<i32>} : memref<24x8x32xf32, #tpu.memory_space<vmem>>, vector<1x8x32xf32>,
    return
  }
  func.func @transform_0(%arg0: i32) -> (i32, i32, i32) {
    %c0_i32 = arith.constant 0 : i32
    %c0_i32_0 = arith.constant 0 : i32
    %c0_i32_1 = arith.constant 0 : i32
    return %c0_i32, %arg0, %c0_i32_0 : i32, i32, i32
  }
  func.func @transform_1(%arg0: i32) -> (i32, i32, i32) {
    %c0_i32 = arith.constant 0 : i32
    %c0_i32_0 = arith.constant 0 : i32
    %c0_i32_1 = arith.constant 0 : i32
    return %c0_i32, %arg0, %c0_i32_0 : i32, i32, i32
  }
  func.func @transform_2(%arg0: i32) -> (i32, i32) {
    %c0_i32 = arith.constant 0 : i32
    %c0_i32_0 = arith.constant 0 : i32
    %c0_i32_1 = arith.constant 0 : i32
    return %c0_i32, %c0_i32_0 : i32, i32
  }
  func.func @transform_3(%arg0: i32) -> (i32, i32) {
    %c0_i32 = arith.constant 0 : i32
    %c0_i32_0 = arith.constant 0 : i32
    %c0_i32_1 = arith.constant 0 : i32
    return %c0_i32, %c0_i32_0 : i32, i32
  }
  func.func @transform_4(%arg0: i32) -> (i32, i32, i32) {
    %c0_i32 = arith.constant 0 : i32
    %c0_i32_0 = arith.constant 0 : i32
    %c0_i32_1 = arith.constant 0 : i32
    return %c0_i32, %arg0, %c0_i32_0 : i32, i32, i32
  }
}

module attributes {stable_mosaic.version = 11 : i64} {
  func.func @_hw_lstm_fc_kernel(%arg0: i32, %arg1: memref<8x8x32xf32, #tpu.memory_space<vmem>>, %arg2: memref<8x8x32xf32, #tpu.memory_space<vmem>>, %arg3: memref<32x32xbf16, #tpu.memory_space<vmem>>, %arg4: memref<1x32xf32, #tpu.memory_space<vmem>>, %arg5: memref<32x32xbf16, #tpu.memory_space<vmem>>, %arg6: memref<1x32xf32, #tpu.memory_space<vmem>>, %arg7: memref<32x128xbf16, #tpu.memory_space<vmem>>, %arg8: memref<32x128xbf16, #tpu.memory_space<vmem>>, %arg9: memref<32x128xbf16, #tpu.memory_space<vmem>>, %arg10: memref<32x128xbf16, #tpu.memory_space<vmem>>, %arg11: memref<1x128xf32, #tpu.memory_space<vmem>>, %arg12: memref<8x8x128xf32, #tpu.memory_space<vmem>>, %arg13: memref<8x8x128xf32, #tpu.memory_space<vmem>>, %arg14: memref<8x8x32xf32, #tpu.memory_space<vmem>>) attributes {dimension_semantics = [#tpu.dimension_semantics<parallel>], iteration_bounds = array<i64: 1>, scalar_prefetch = 0 : i64, scratch_operands = 2 : i64, tpu.core_type = #tpu.core_type<tc>, window_params = [{transform_indices = @transform_0, window_bounds = array<i64: 8, 8, 32>}, {transform_indices = @transform_1, window_bounds = array<i64: 8, 8, 32>}, {pipeline_mode = #tpu.pipeline_mode<synchronous>, transform_indices = @transform_2, window_bounds = array<i64: 32, 32>}, {pipeline_mode = #tpu.pipeline_mode<synchronous>, transform_indices = @transform_3, window_bounds = array<i64: 1, 32>}, {pipeline_mode = #tpu.pipeline_mode<synchronous>, transform_indices = @transform_4, window_bounds = array<i64: 32, 32>}, {pipeline_mode = #tpu.pipeline_mode<synchronous>, transform_indices = @transform_5, window_bounds = array<i64: 1, 32>}, {pipeline_mode = #tpu.pipeline_mode<synchronous>, transform_indices = @transform_6, window_bounds = array<i64: 32, 128>}, {pipeline_mode = #tpu.pipeline_mode<synchronous>, transform_indices = @transform_7, window_bounds = array<i64: 32, 128>}, {pipeline_mode = #tpu.pipeline_mode<synchronous>, transform_indices = @transform_8, window_bounds = array<i64: 32, 128>}, {pipeline_mode = #tpu.pipeline_mode<synchronous>, transform_indices = @transform_9, window_bounds = array<i64: 32, 128>}, {pipeline_mode = #tpu.pipeline_mode<synchronous>, transform_indices = @transform_10, window_bounds = array<i64: 1, 128>}, {transform_indices = @transform_11, window_bounds = array<i64: 8, 8, 128>}]} {
    %c0 = arith.constant 0 : index
    %c0_0 = arith.constant 0 : index
    %c0_1 = arith.constant 0 : index
    %0 = vector.load %arg2[%c0, %c0_0, %c0_1] : memref<8x8x32xf32, #tpu.memory_space<vmem>>, vector<8x8x32xf32>
    %1 = vector.shape_cast %0 : vector<8x8x32xf32> to vector<64x32xf32>
    %2 = arith.truncf %1 : vector<64x32xf32> to vector<64x32xbf16>
    %c0_2 = arith.constant 0 : index
    %c0_3 = arith.constant 0 : index
    %3 = vector.load %arg3[%c0_2, %c0_3] : memref<32x32xbf16, #tpu.memory_space<vmem>>, vector<32x32xbf16>
    %cst = arith.constant dense<0.000000e+00> : vector<64x32xf32>
    %4 = tpu.matmul %2, %3, %cst {dimension_numbers = #tpu.dot_dimension_numbers<[1], [0], [0], [1], [0, 0, 1, 1], [], []>} : vector<64x32xbf16>, vector<32x32xbf16>, vector<64x32xf32> -> vector<64x32xf32>
    %c0_4 = arith.constant 0 : index
    %c0_5 = arith.constant 0 : index
    %5 = vector.load %arg4[%c0_4, %c0_5] : memref<1x32xf32, #tpu.memory_space<vmem>>, vector<1x32xf32>
    %6 = vector.broadcast %5 : vector<1x32xf32> to vector<64x32xf32>
    %7 = arith.addf %4, %6 : vector<64x32xf32>
    %cst_6 = arith.constant 0.000000e+00 : f32
    %8 = vector.broadcast %cst_6 : f32 to vector<64x32xf32>
    %9 = arith.maximumf %7, %8 : vector<64x32xf32>
    %c0_7 = arith.constant 0 : index
    %c0_8 = arith.constant 0 : index
    %10 = vector.load %arg5[%c0_7, %c0_8] : memref<32x32xbf16, #tpu.memory_space<vmem>>, vector<32x32xbf16>
    %cst_9 = arith.constant dense<0.000000e+00> : vector<64x32xf32>
    %11 = tpu.matmul %2, %10, %cst_9 {dimension_numbers = #tpu.dot_dimension_numbers<[1], [0], [0], [1], [0, 0, 1, 1], [], []>} : vector<64x32xbf16>, vector<32x32xbf16>, vector<64x32xf32> -> vector<64x32xf32>
    %c0_10 = arith.constant 0 : index
    %c0_11 = arith.constant 0 : index
    %12 = vector.load %arg6[%c0_10, %c0_11] : memref<1x32xf32, #tpu.memory_space<vmem>>, vector<1x32xf32>
    %13 = vector.broadcast %12 : vector<1x32xf32> to vector<64x32xf32>
    %14 = arith.addf %11, %13 : vector<64x32xf32>
    %15 = arith.negf %14 : vector<64x32xf32>
    %16 = math.exp %15 : vector<64x32xf32>
    %cst_12 = arith.constant 1.000000e+00 : f32
    %17 = vector.broadcast %cst_12 : f32 to vector<64x32xf32>
    %18 = arith.addf %17, %16 : vector<64x32xf32>
    %19 = arith.divf %17, %18 : vector<64x32xf32>
    %20 = arith.mulf %19, %9 : vector<64x32xf32>
    %cst_13 = arith.constant 1.000000e+00 : f32
    %21 = vector.broadcast %cst_13 : f32 to vector<64x32xf32>
    %22 = arith.subf %21, %19 : vector<64x32xf32>
    %23 = arith.mulf %22, %1 : vector<64x32xf32>
    %24 = arith.addf %20, %23 : vector<64x32xf32>
    %c0_14 = arith.constant 0 : index
    %c0_15 = arith.constant 0 : index
    %c0_16 = arith.constant 0 : index
    %25 = vector.load %arg1[%c0_14, %c0_15, %c0_16] : memref<8x8x32xf32, #tpu.memory_space<vmem>>, vector<8x8x32xf32>
    %26 = vector.shape_cast %25 : vector<8x8x32xf32> to vector<64x32xf32>
    %27 = arith.truncf %26 : vector<64x32xf32> to vector<64x32xbf16>
    %c0_17 = arith.constant 0 : index
    %c0_18 = arith.constant 0 : index
    %28 = vector.load %arg7[%c0_17, %c0_18] : memref<32x128xbf16, #tpu.memory_space<vmem>>, vector<32x128xbf16>
    %cst_19 = arith.constant dense<0.000000e+00> : vector<64x128xf32>
    %29 = tpu.matmul %27, %28, %cst_19 {dimension_numbers = #tpu.dot_dimension_numbers<[1], [0], [0], [1], [0, 0, 1, 1], [], []>} : vector<64x32xbf16>, vector<32x128xbf16>, vector<64x128xf32> -> vector<64x128xf32>
    %30 = arith.truncf %24 : vector<64x32xf32> to vector<64x32xbf16>
    %c0_20 = arith.constant 0 : index
    %c0_21 = arith.constant 0 : index
    %31 = vector.load %arg8[%c0_20, %c0_21] : memref<32x128xbf16, #tpu.memory_space<vmem>>, vector<32x128xbf16>
    %cst_22 = arith.constant dense<0.000000e+00> : vector<64x128xf32>
    %32 = tpu.matmul %30, %31, %cst_22 {dimension_numbers = #tpu.dot_dimension_numbers<[1], [0], [0], [1], [0, 0, 1, 1], [], []>} : vector<64x32xbf16>, vector<32x128xbf16>, vector<64x128xf32> -> vector<64x128xf32>
    %33 = arith.addf %29, %32 : vector<64x128xf32>
    %34 = vector.shape_cast %33 : vector<64x128xf32> to vector<8x8x128xf32>
    %c0_23 = arith.constant 0 : index
    %c0_24 = arith.constant 0 : index
    %c0_25 = arith.constant 0 : index
    %35 = vector.load %arg13[%c0_23, %c0_24, %c0_25] : memref<8x8x128xf32, #tpu.memory_space<vmem>>, vector<8x8x128xf32>
    tpu.vector_store %arg13[%c0_23, %c0_24, %c0_25], %34 {strides = array<i32>} : memref<8x8x128xf32, #tpu.memory_space<vmem>>, vector<8x8x128xf32>,
    %c0_26 = arith.constant 0 : index
    %c0_27 = arith.constant 0 : index
    %36 = vector.load %arg9[%c0_26, %c0_27] : memref<32x128xbf16, #tpu.memory_space<vmem>>, vector<32x128xbf16>
    %cst_28 = arith.constant 0.000000e+00 : f32
    %37 = vector.broadcast %cst_28 : f32 to vector<8x32xf32>
    %cst_29 = arith.constant 0.000000e+00 : f32
    %38 = vector.broadcast %cst_29 : f32 to vector<8x32xf32>
    %c0_30 = arith.constant 0 : index
    %c0_31 = arith.constant 0 : index
    %c0_32 = arith.constant 0 : index
    %39 = vector.load %arg13[%c0_30, %c0_31, %c0_32] : memref<8x8x128xf32, #tpu.memory_space<vmem>>, vector<1x8x128xf32>
    %40 = vector.shape_cast %39 : vector<1x8x128xf32> to vector<8x128xf32>
    %41 = arith.truncf %37 : vector<8x32xf32> to vector<8x32xbf16>
    %cst_33 = arith.constant dense<0.000000e+00> : vector<8x128xf32>
    %42 = tpu.matmul %41, %36, %cst_33 {dimension_numbers = #tpu.dot_dimension_numbers<[1], [0], [0], [1], [0, 0, 1, 1], [], []>} : vector<8x32xbf16>, vector<32x128xbf16>, vector<8x128xf32> -> vector<8x128xf32>
    %43 = arith.addf %40, %42 : vector<8x128xf32>
    %44 = arith.negf %43 : vector<8x128xf32>
    %45 = math.exp %44 : vector<8x128xf32>
    %cst_34 = arith.constant 1.000000e+00 : f32
    %46 = vector.broadcast %cst_34 : f32 to vector<8x128xf32>
    %47 = arith.addf %46, %45 : vector<8x128xf32>
    %48 = arith.divf %46, %47 : vector<8x128xf32>
    %49 = vector.extract_strided_slice %43 {offsets = [0, 64], sizes = [8, 32], strides = [1, 1]} : vector<8x128xf32> to vector<8x32xf32>
    %50 = math.tanh %49 : vector<8x32xf32>
    %51 = vector.extract_strided_slice %48 {offsets = [0, 32], sizes = [8, 32], strides = [1, 1]} : vector<8x128xf32> to vector<8x32xf32>
    %52 = arith.mulf %51, %38 : vector<8x32xf32>
    %53 = vector.extract_strided_slice %48 {offsets = [0, 0], sizes = [8, 32], strides = [1, 1]} : vector<8x128xf32> to vector<8x32xf32>
    %54 = arith.mulf %53, %50 : vector<8x32xf32>
    %55 = arith.addf %52, %54 : vector<8x32xf32>
    %56 = vector.extract_strided_slice %48 {offsets = [0, 96], sizes = [8, 32], strides = [1, 1]} : vector<8x128xf32> to vector<8x32xf32>
    %57 = math.tanh %55 : vector<8x32xf32>
    %58 = arith.mulf %56, %57 : vector<8x32xf32>
    %c0_35 = arith.constant 0 : index
    %c0_36 = arith.constant 0 : index
    %c0_37 = arith.constant 0 : index
    %59 = vector.load %arg14[%c0_35, %c0_36, %c0_37] : memref<8x8x32xf32, #tpu.memory_space<vmem>>, vector<1x8x32xf32>
    %60 = vector.shape_cast %59 : vector<1x8x32xf32> to vector<8x32xf32>
    %61 = vector.shape_cast %58 : vector<8x32xf32> to vector<1x8x32xf32>
    tpu.vector_store %arg14[%c0_35, %c0_36, %c0_37], %61 {strides = array<i32>} : memref<8x8x32xf32, #tpu.memory_space<vmem>>, vector<1x8x32xf32>,
    %c1 = arith.constant 1 : index
    %c0_38 = arith.constant 0 : index
    %c0_39 = arith.constant 0 : index
    %62 = vector.load %arg13[%c1, %c0_38, %c0_39] : memref<8x8x128xf32, #tpu.memory_space<vmem>>, vector<1x8x128xf32>
    %63 = vector.shape_cast %62 : vector<1x8x128xf32> to vector<8x128xf32>
    %64 = arith.truncf %58 : vector<8x32xf32> to vector<8x32xbf16>
    %cst_40 = arith.constant dense<0.000000e+00> : vector<8x128xf32>
    %65 = tpu.matmul %64, %36, %cst_40 {dimension_numbers = #tpu.dot_dimension_numbers<[1], [0], [0], [1], [0, 0, 1, 1], [], []>} : vector<8x32xbf16>, vector<32x128xbf16>, vector<8x128xf32> -> vector<8x128xf32>
    %66 = arith.addf %63, %65 : vector<8x128xf32>
    %67 = arith.negf %66 : vector<8x128xf32>
    %68 = math.exp %67 : vector<8x128xf32>
    %cst_41 = arith.constant 1.000000e+00 : f32
    %69 = vector.broadcast %cst_41 : f32 to vector<8x128xf32>
    %70 = arith.addf %69, %68 : vector<8x128xf32>
    %71 = arith.divf %69, %70 : vector<8x128xf32>
    %72 = vector.extract_strided_slice %66 {offsets = [0, 64], sizes = [8, 32], strides = [1, 1]} : vector<8x128xf32> to vector<8x32xf32>
    %73 = math.tanh %72 : vector<8x32xf32>
    %74 = vector.extract_strided_slice %71 {offsets = [0, 32], sizes = [8, 32], strides = [1, 1]} : vector<8x128xf32> to vector<8x32xf32>
    %75 = arith.mulf %74, %55 : vector<8x32xf32>
    %76 = vector.extract_strided_slice %71 {offsets = [0, 0], sizes = [8, 32], strides = [1, 1]} : vector<8x128xf32> to vector<8x32xf32>
    %77 = arith.mulf %76, %73 : vector<8x32xf32>
    %78 = arith.addf %75, %77 : vector<8x32xf32>
    %79 = vector.extract_strided_slice %71 {offsets = [0, 96], sizes = [8, 32], strides = [1, 1]} : vector<8x128xf32> to vector<8x32xf32>
    %80 = math.tanh %78 : vector<8x32xf32>
    %81 = arith.mulf %79, %80 : vector<8x32xf32>
    %c1_42 = arith.constant 1 : index
    %c0_43 = arith.constant 0 : index
    %c0_44 = arith.constant 0 : index
    %82 = vector.load %arg14[%c1_42, %c0_43, %c0_44] : memref<8x8x32xf32, #tpu.memory_space<vmem>>, vector<1x8x32xf32>
    %83 = vector.shape_cast %82 : vector<1x8x32xf32> to vector<8x32xf32>
    %84 = vector.shape_cast %81 : vector<8x32xf32> to vector<1x8x32xf32>
    tpu.vector_store %arg14[%c1_42, %c0_43, %c0_44], %84 {strides = array<i32>} : memref<8x8x32xf32, #tpu.memory_space<vmem>>, vector<1x8x32xf32>,
    %c2 = arith.constant 2 : index
    %c0_45 = arith.constant 0 : index
    %c0_46 = arith.constant 0 : index
    %85 = vector.load %arg13[%c2, %c0_45, %c0_46] : memref<8x8x128xf32, #tpu.memory_space<vmem>>, vector<1x8x128xf32>
    %86 = vector.shape_cast %85 : vector<1x8x128xf32> to vector<8x128xf32>
    %87 = arith.truncf %81 : vector<8x32xf32> to vector<8x32xbf16>
    %cst_47 = arith.constant dense<0.000000e+00> : vector<8x128xf32>
    %88 = tpu.matmul %87, %36, %cst_47 {dimension_numbers = #tpu.dot_dimension_numbers<[1], [0], [0], [1], [0, 0, 1, 1], [], []>} : vector<8x32xbf16>, vector<32x128xbf16>, vector<8x128xf32> -> vector<8x128xf32>
    %89 = arith.addf %86, %88 : vector<8x128xf32>
    %90 = arith.negf %89 : vector<8x128xf32>
    %91 = math.exp %90 : vector<8x128xf32>
    %cst_48 = arith.constant 1.000000e+00 : f32
    %92 = vector.broadcast %cst_48 : f32 to vector<8x128xf32>
    %93 = arith.addf %92, %91 : vector<8x128xf32>
    %94 = arith.divf %92, %93 : vector<8x128xf32>
    %95 = vector.extract_strided_slice %89 {offsets = [0, 64], sizes = [8, 32], strides = [1, 1]} : vector<8x128xf32> to vector<8x32xf32>
    %96 = math.tanh %95 : vector<8x32xf32>
    %97 = vector.extract_strided_slice %94 {offsets = [0, 32], sizes = [8, 32], strides = [1, 1]} : vector<8x128xf32> to vector<8x32xf32>
    %98 = arith.mulf %97, %78 : vector<8x32xf32>
    %99 = vector.extract_strided_slice %94 {offsets = [0, 0], sizes = [8, 32], strides = [1, 1]} : vector<8x128xf32> to vector<8x32xf32>
    %100 = arith.mulf %99, %96 : vector<8x32xf32>
    %101 = arith.addf %98, %100 : vector<8x32xf32>
    %102 = vector.extract_strided_slice %94 {offsets = [0, 96], sizes = [8, 32], strides = [1, 1]} : vector<8x128xf32> to vector<8x32xf32>
    %103 = math.tanh %101 : vector<8x32xf32>
    %104 = arith.mulf %102, %103 : vector<8x32xf32>
    %c2_49 = arith.constant 2 : index
    %c0_50 = arith.constant 0 : index
    %c0_51 = arith.constant 0 : index
    %105 = vector.load %arg14[%c2_49, %c0_50, %c0_51] : memref<8x8x32xf32, #tpu.memory_space<vmem>>, vector<1x8x32xf32>
    %106 = vector.shape_cast %105 : vector<1x8x32xf32> to vector<8x32xf32>
    %107 = vector.shape_cast %104 : vector<8x32xf32> to vector<1x8x32xf32>
    tpu.vector_store %arg14[%c2_49, %c0_50, %c0_51], %107 {strides = array<i32>} : memref<8x8x32xf32, #tpu.memory_space<vmem>>, vector<1x8x32xf32>,
    %c3 = arith.constant 3 : index
    %c0_52 = arith.constant 0 : index
    %c0_53 = arith.constant 0 : index
    %108 = vector.load %arg13[%c3, %c0_52, %c0_53] : memref<8x8x128xf32, #tpu.memory_space<vmem>>, vector<1x8x128xf32>
    %109 = vector.shape_cast %108 : vector<1x8x128xf32> to vector<8x128xf32>
    %110 = arith.truncf %104 : vector<8x32xf32> to vector<8x32xbf16>
    %cst_54 = arith.constant dense<0.000000e+00> : vector<8x128xf32>
    %111 = tpu.matmul %110, %36, %cst_54 {dimension_numbers = #tpu.dot_dimension_numbers<[1], [0], [0], [1], [0, 0, 1, 1], [], []>} : vector<8x32xbf16>, vector<32x128xbf16>, vector<8x128xf32> -> vector<8x128xf32>
    %112 = arith.addf %109, %111 : vector<8x128xf32>
    %113 = arith.negf %112 : vector<8x128xf32>
    %114 = math.exp %113 : vector<8x128xf32>
    %cst_55 = arith.constant 1.000000e+00 : f32
    %115 = vector.broadcast %cst_55 : f32 to vector<8x128xf32>
    %116 = arith.addf %115, %114 : vector<8x128xf32>
    %117 = arith.divf %115, %116 : vector<8x128xf32>
    %118 = vector.extract_strided_slice %112 {offsets = [0, 64], sizes = [8, 32], strides = [1, 1]} : vector<8x128xf32> to vector<8x32xf32>
    %119 = math.tanh %118 : vector<8x32xf32>
    %120 = vector.extract_strided_slice %117 {offsets = [0, 32], sizes = [8, 32], strides = [1, 1]} : vector<8x128xf32> to vector<8x32xf32>
    %121 = arith.mulf %120, %101 : vector<8x32xf32>
    %122 = vector.extract_strided_slice %117 {offsets = [0, 0], sizes = [8, 32], strides = [1, 1]} : vector<8x128xf32> to vector<8x32xf32>
    %123 = arith.mulf %122, %119 : vector<8x32xf32>
    %124 = arith.addf %121, %123 : vector<8x32xf32>
    %125 = vector.extract_strided_slice %117 {offsets = [0, 96], sizes = [8, 32], strides = [1, 1]} : vector<8x128xf32> to vector<8x32xf32>
    %126 = math.tanh %124 : vector<8x32xf32>
    %127 = arith.mulf %125, %126 : vector<8x32xf32>
    %c3_56 = arith.constant 3 : index
    %c0_57 = arith.constant 0 : index
    %c0_58 = arith.constant 0 : index
    %128 = vector.load %arg14[%c3_56, %c0_57, %c0_58] : memref<8x8x32xf32, #tpu.memory_space<vmem>>, vector<1x8x32xf32>
    %129 = vector.shape_cast %128 : vector<1x8x32xf32> to vector<8x32xf32>
    %130 = vector.shape_cast %127 : vector<8x32xf32> to vector<1x8x32xf32>
    tpu.vector_store %arg14[%c3_56, %c0_57, %c0_58], %130 {strides = array<i32>} : memref<8x8x32xf32, #tpu.memory_space<vmem>>, vector<1x8x32xf32>,
    %c4 = arith.constant 4 : index
    %c0_59 = arith.constant 0 : index
    %c0_60 = arith.constant 0 : index
    %131 = vector.load %arg13[%c4, %c0_59, %c0_60] : memref<8x8x128xf32, #tpu.memory_space<vmem>>, vector<1x8x128xf32>
    %132 = vector.shape_cast %131 : vector<1x8x128xf32> to vector<8x128xf32>
    %133 = arith.truncf %127 : vector<8x32xf32> to vector<8x32xbf16>
    %cst_61 = arith.constant dense<0.000000e+00> : vector<8x128xf32>
    %134 = tpu.matmul %133, %36, %cst_61 {dimension_numbers = #tpu.dot_dimension_numbers<[1], [0], [0], [1], [0, 0, 1, 1], [], []>} : vector<8x32xbf16>, vector<32x128xbf16>, vector<8x128xf32> -> vector<8x128xf32>
    %135 = arith.addf %132, %134 : vector<8x128xf32>
    %136 = arith.negf %135 : vector<8x128xf32>
    %137 = math.exp %136 : vector<8x128xf32>
    %cst_62 = arith.constant 1.000000e+00 : f32
    %138 = vector.broadcast %cst_62 : f32 to vector<8x128xf32>
    %139 = arith.addf %138, %137 : vector<8x128xf32>
    %140 = arith.divf %138, %139 : vector<8x128xf32>
    %141 = vector.extract_strided_slice %135 {offsets = [0, 64], sizes = [8, 32], strides = [1, 1]} : vector<8x128xf32> to vector<8x32xf32>
    %142 = math.tanh %141 : vector<8x32xf32>
    %143 = vector.extract_strided_slice %140 {offsets = [0, 32], sizes = [8, 32], strides = [1, 1]} : vector<8x128xf32> to vector<8x32xf32>
    %144 = arith.mulf %143, %124 : vector<8x32xf32>
    %145 = vector.extract_strided_slice %140 {offsets = [0, 0], sizes = [8, 32], strides = [1, 1]} : vector<8x128xf32> to vector<8x32xf32>
    %146 = arith.mulf %145, %142 : vector<8x32xf32>
    %147 = arith.addf %144, %146 : vector<8x32xf32>
    %148 = vector.extract_strided_slice %140 {offsets = [0, 96], sizes = [8, 32], strides = [1, 1]} : vector<8x128xf32> to vector<8x32xf32>
    %149 = math.tanh %147 : vector<8x32xf32>
    %150 = arith.mulf %148, %149 : vector<8x32xf32>
    %c4_63 = arith.constant 4 : index
    %c0_64 = arith.constant 0 : index
    %c0_65 = arith.constant 0 : index
    %151 = vector.load %arg14[%c4_63, %c0_64, %c0_65] : memref<8x8x32xf32, #tpu.memory_space<vmem>>, vector<1x8x32xf32>
    %152 = vector.shape_cast %151 : vector<1x8x32xf32> to vector<8x32xf32>
    %153 = vector.shape_cast %150 : vector<8x32xf32> to vector<1x8x32xf32>
    tpu.vector_store %arg14[%c4_63, %c0_64, %c0_65], %153 {strides = array<i32>} : memref<8x8x32xf32, #tpu.memory_space<vmem>>, vector<1x8x32xf32>,
    %c5 = arith.constant 5 : index
    %c0_66 = arith.constant 0 : index
    %c0_67 = arith.constant 0 : index
    %154 = vector.load %arg13[%c5, %c0_66, %c0_67] : memref<8x8x128xf32, #tpu.memory_space<vmem>>, vector<1x8x128xf32>
    %155 = vector.shape_cast %154 : vector<1x8x128xf32> to vector<8x128xf32>
    %156 = arith.truncf %150 : vector<8x32xf32> to vector<8x32xbf16>
    %cst_68 = arith.constant dense<0.000000e+00> : vector<8x128xf32>
    %157 = tpu.matmul %156, %36, %cst_68 {dimension_numbers = #tpu.dot_dimension_numbers<[1], [0], [0], [1], [0, 0, 1, 1], [], []>} : vector<8x32xbf16>, vector<32x128xbf16>, vector<8x128xf32> -> vector<8x128xf32>
    %158 = arith.addf %155, %157 : vector<8x128xf32>
    %159 = arith.negf %158 : vector<8x128xf32>
    %160 = math.exp %159 : vector<8x128xf32>
    %cst_69 = arith.constant 1.000000e+00 : f32
    %161 = vector.broadcast %cst_69 : f32 to vector<8x128xf32>
    %162 = arith.addf %161, %160 : vector<8x128xf32>
    %163 = arith.divf %161, %162 : vector<8x128xf32>
    %164 = vector.extract_strided_slice %158 {offsets = [0, 64], sizes = [8, 32], strides = [1, 1]} : vector<8x128xf32> to vector<8x32xf32>
    %165 = math.tanh %164 : vector<8x32xf32>
    %166 = vector.extract_strided_slice %163 {offsets = [0, 32], sizes = [8, 32], strides = [1, 1]} : vector<8x128xf32> to vector<8x32xf32>
    %167 = arith.mulf %166, %147 : vector<8x32xf32>
    %168 = vector.extract_strided_slice %163 {offsets = [0, 0], sizes = [8, 32], strides = [1, 1]} : vector<8x128xf32> to vector<8x32xf32>
    %169 = arith.mulf %168, %165 : vector<8x32xf32>
    %170 = arith.addf %167, %169 : vector<8x32xf32>
    %171 = vector.extract_strided_slice %163 {offsets = [0, 96], sizes = [8, 32], strides = [1, 1]} : vector<8x128xf32> to vector<8x32xf32>
    %172 = math.tanh %170 : vector<8x32xf32>
    %173 = arith.mulf %171, %172 : vector<8x32xf32>
    %c5_70 = arith.constant 5 : index
    %c0_71 = arith.constant 0 : index
    %c0_72 = arith.constant 0 : index
    %174 = vector.load %arg14[%c5_70, %c0_71, %c0_72] : memref<8x8x32xf32, #tpu.memory_space<vmem>>, vector<1x8x32xf32>
    %175 = vector.shape_cast %174 : vector<1x8x32xf32> to vector<8x32xf32>
    %176 = vector.shape_cast %173 : vector<8x32xf32> to vector<1x8x32xf32>
    tpu.vector_store %arg14[%c5_70, %c0_71, %c0_72], %176 {strides = array<i32>} : memref<8x8x32xf32, #tpu.memory_space<vmem>>, vector<1x8x32xf32>,
    %c6 = arith.constant 6 : index
    %c0_73 = arith.constant 0 : index
    %c0_74 = arith.constant 0 : index
    %177 = vector.load %arg13[%c6, %c0_73, %c0_74] : memref<8x8x128xf32, #tpu.memory_space<vmem>>, vector<1x8x128xf32>
    %178 = vector.shape_cast %177 : vector<1x8x128xf32> to vector<8x128xf32>
    %179 = arith.truncf %173 : vector<8x32xf32> to vector<8x32xbf16>
    %cst_75 = arith.constant dense<0.000000e+00> : vector<8x128xf32>
    %180 = tpu.matmul %179, %36, %cst_75 {dimension_numbers = #tpu.dot_dimension_numbers<[1], [0], [0], [1], [0, 0, 1, 1], [], []>} : vector<8x32xbf16>, vector<32x128xbf16>, vector<8x128xf32> -> vector<8x128xf32>
    %181 = arith.addf %178, %180 : vector<8x128xf32>
    %182 = arith.negf %181 : vector<8x128xf32>
    %183 = math.exp %182 : vector<8x128xf32>
    %cst_76 = arith.constant 1.000000e+00 : f32
    %184 = vector.broadcast %cst_76 : f32 to vector<8x128xf32>
    %185 = arith.addf %184, %183 : vector<8x128xf32>
    %186 = arith.divf %184, %185 : vector<8x128xf32>
    %187 = vector.extract_strided_slice %181 {offsets = [0, 64], sizes = [8, 32], strides = [1, 1]} : vector<8x128xf32> to vector<8x32xf32>
    %188 = math.tanh %187 : vector<8x32xf32>
    %189 = vector.extract_strided_slice %186 {offsets = [0, 32], sizes = [8, 32], strides = [1, 1]} : vector<8x128xf32> to vector<8x32xf32>
    %190 = arith.mulf %189, %170 : vector<8x32xf32>
    %191 = vector.extract_strided_slice %186 {offsets = [0, 0], sizes = [8, 32], strides = [1, 1]} : vector<8x128xf32> to vector<8x32xf32>
    %192 = arith.mulf %191, %188 : vector<8x32xf32>
    %193 = arith.addf %190, %192 : vector<8x32xf32>
    %194 = vector.extract_strided_slice %186 {offsets = [0, 96], sizes = [8, 32], strides = [1, 1]} : vector<8x128xf32> to vector<8x32xf32>
    %195 = math.tanh %193 : vector<8x32xf32>
    %196 = arith.mulf %194, %195 : vector<8x32xf32>
    %c6_77 = arith.constant 6 : index
    %c0_78 = arith.constant 0 : index
    %c0_79 = arith.constant 0 : index
    %197 = vector.load %arg14[%c6_77, %c0_78, %c0_79] : memref<8x8x32xf32, #tpu.memory_space<vmem>>, vector<1x8x32xf32>
    %198 = vector.shape_cast %197 : vector<1x8x32xf32> to vector<8x32xf32>
    %199 = vector.shape_cast %196 : vector<8x32xf32> to vector<1x8x32xf32>
    tpu.vector_store %arg14[%c6_77, %c0_78, %c0_79], %199 {strides = array<i32>} : memref<8x8x32xf32, #tpu.memory_space<vmem>>, vector<1x8x32xf32>,
    %c7 = arith.constant 7 : index
    %c0_80 = arith.constant 0 : index
    %c0_81 = arith.constant 0 : index
    %200 = vector.load %arg13[%c7, %c0_80, %c0_81] : memref<8x8x128xf32, #tpu.memory_space<vmem>>, vector<1x8x128xf32>
    %201 = vector.shape_cast %200 : vector<1x8x128xf32> to vector<8x128xf32>
    %202 = arith.truncf %196 : vector<8x32xf32> to vector<8x32xbf16>
    %cst_82 = arith.constant dense<0.000000e+00> : vector<8x128xf32>
    %203 = tpu.matmul %202, %36, %cst_82 {dimension_numbers = #tpu.dot_dimension_numbers<[1], [0], [0], [1], [0, 0, 1, 1], [], []>} : vector<8x32xbf16>, vector<32x128xbf16>, vector<8x128xf32> -> vector<8x128xf32>
    %204 = arith.addf %201, %203 : vector<8x128xf32>
    %205 = arith.negf %204 : vector<8x128xf32>
    %206 = math.exp %205 : vector<8x128xf32>
    %cst_83 = arith.constant 1.000000e+00 : f32
    %207 = vector.broadcast %cst_83 : f32 to vector<8x128xf32>
    %208 = arith.addf %207, %206 : vector<8x128xf32>
    %209 = arith.divf %207, %208 : vector<8x128xf32>
    %210 = vector.extract_strided_slice %204 {offsets = [0, 64], sizes = [8, 32], strides = [1, 1]} : vector<8x128xf32> to vector<8x32xf32>
    %211 = math.tanh %210 : vector<8x32xf32>
    %212 = vector.extract_strided_slice %209 {offsets = [0, 32], sizes = [8, 32], strides = [1, 1]} : vector<8x128xf32> to vector<8x32xf32>
    %213 = arith.mulf %212, %193 : vector<8x32xf32>
    %214 = vector.extract_strided_slice %209 {offsets = [0, 0], sizes = [8, 32], strides = [1, 1]} : vector<8x128xf32> to vector<8x32xf32>
    %215 = arith.mulf %214, %211 : vector<8x32xf32>
    %216 = arith.addf %213, %215 : vector<8x32xf32>
    %217 = vector.extract_strided_slice %209 {offsets = [0, 96], sizes = [8, 32], strides = [1, 1]} : vector<8x128xf32> to vector<8x32xf32>
    %218 = math.tanh %216 : vector<8x32xf32>
    %219 = arith.mulf %217, %218 : vector<8x32xf32>
    %c7_84 = arith.constant 7 : index
    %c0_85 = arith.constant 0 : index
    %c0_86 = arith.constant 0 : index
    %220 = vector.load %arg14[%c7_84, %c0_85, %c0_86] : memref<8x8x32xf32, #tpu.memory_space<vmem>>, vector<1x8x32xf32>
    %221 = vector.shape_cast %220 : vector<1x8x32xf32> to vector<8x32xf32>
    %222 = vector.shape_cast %219 : vector<8x32xf32> to vector<1x8x32xf32>
    tpu.vector_store %arg14[%c7_84, %c0_85, %c0_86], %222 {strides = array<i32>} : memref<8x8x32xf32, #tpu.memory_space<vmem>>, vector<1x8x32xf32>,
    %c0_87 = arith.constant 0 : index
    %c0_88 = arith.constant 0 : index
    %c0_89 = arith.constant 0 : index
    %223 = vector.load %arg14[%c0_87, %c0_88, %c0_89] : memref<8x8x32xf32, #tpu.memory_space<vmem>>, vector<8x8x32xf32>
    %224 = vector.shape_cast %223 : vector<8x8x32xf32> to vector<64x32xf32>
    %225 = arith.truncf %224 : vector<64x32xf32> to vector<64x32xbf16>
    %c0_90 = arith.constant 0 : index
    %c0_91 = arith.constant 0 : index
    %226 = vector.load %arg10[%c0_90, %c0_91] : memref<32x128xbf16, #tpu.memory_space<vmem>>, vector<32x128xbf16>
    %cst_92 = arith.constant dense<0.000000e+00> : vector<64x128xf32>
    %227 = tpu.matmul %225, %226, %cst_92 {dimension_numbers = #tpu.dot_dimension_numbers<[1], [0], [0], [1], [0, 0, 1, 1], [], []>} : vector<64x32xbf16>, vector<32x128xbf16>, vector<64x128xf32> -> vector<64x128xf32>
    %c0_93 = arith.constant 0 : index
    %c0_94 = arith.constant 0 : index
    %228 = vector.load %arg11[%c0_93, %c0_94] : memref<1x128xf32, #tpu.memory_space<vmem>>, vector<1x128xf32>
    %229 = vector.broadcast %228 : vector<1x128xf32> to vector<64x128xf32>
    %230 = arith.addf %227, %229 : vector<64x128xf32>
    %231 = vector.shape_cast %230 : vector<64x128xf32> to vector<8x8x128xf32>
    %c0_95 = arith.constant 0 : index
    %c0_96 = arith.constant 0 : index
    %c0_97 = arith.constant 0 : index
    %232 = vector.load %arg12[%c0_95, %c0_96, %c0_97] : memref<8x8x128xf32, #tpu.memory_space<vmem>>, vector<8x8x128xf32>
    tpu.vector_store %arg12[%c0_95, %c0_96, %c0_97], %231 {strides = array<i32>} : memref<8x8x128xf32, #tpu.memory_space<vmem>>, vector<8x8x128xf32>,
    return
  }
  func.func @transform_0(%arg0: i32) -> (i32, i32, i32) {
    %c0_i32 = arith.constant 0 : i32
    %c0_i32_0 = arith.constant 0 : i32
    %c0_i32_1 = arith.constant 0 : i32
    return %c0_i32, %arg0, %c0_i32_0 : i32, i32, i32
  }
  func.func @transform_1(%arg0: i32) -> (i32, i32, i32) {
    %c0_i32 = arith.constant 0 : i32
    %c0_i32_0 = arith.constant 0 : i32
    %c0_i32_1 = arith.constant 0 : i32
    return %c0_i32, %arg0, %c0_i32_0 : i32, i32, i32
  }
  func.func @transform_2(%arg0: i32) -> (i32, i32) {
    %c0_i32 = arith.constant 0 : i32
    %c0_i32_0 = arith.constant 0 : i32
    %c0_i32_1 = arith.constant 0 : i32
    return %c0_i32, %c0_i32_0 : i32, i32
  }
  func.func @transform_3(%arg0: i32) -> (i32, i32) {
    %c0_i32 = arith.constant 0 : i32
    %c0_i32_0 = arith.constant 0 : i32
    %c0_i32_1 = arith.constant 0 : i32
    return %c0_i32, %c0_i32_0 : i32, i32
  }
  func.func @transform_4(%arg0: i32) -> (i32, i32) {
    %c0_i32 = arith.constant 0 : i32
    %c0_i32_0 = arith.constant 0 : i32
    %c0_i32_1 = arith.constant 0 : i32
    return %c0_i32, %c0_i32_0 : i32, i32
  }
  func.func @transform_5(%arg0: i32) -> (i32, i32) {
    %c0_i32 = arith.constant 0 : i32
    %c0_i32_0 = arith.constant 0 : i32
    %c0_i32_1 = arith.constant 0 : i32
    return %c0_i32, %c0_i32_0 : i32, i32
  }
  func.func @transform_6(%arg0: i32) -> (i32, i32) {
    %c0_i32 = arith.constant 0 : i32
    %c0_i32_0 = arith.constant 0 : i32
    %c0_i32_1 = arith.constant 0 : i32
    return %c0_i32, %c0_i32_0 : i32, i32
  }
  func.func @transform_7(%arg0: i32) -> (i32, i32) {
    %c0_i32 = arith.constant 0 : i32
    %c0_i32_0 = arith.constant 0 : i32
    %c0_i32_1 = arith.constant 0 : i32
    return %c0_i32, %c0_i32_0 : i32, i32
  }
  func.func @transform_8(%arg0: i32) -> (i32, i32) {
    %c0_i32 = arith.constant 0 : i32
    %c0_i32_0 = arith.constant 0 : i32
    %c0_i32_1 = arith.constant 0 : i32
    return %c0_i32, %c0_i32_0 : i32, i32
  }
  func.func @transform_9(%arg0: i32) -> (i32, i32) {
    %c0_i32 = arith.constant 0 : i32
    %c0_i32_0 = arith.constant 0 : i32
    %c0_i32_1 = arith.constant 0 : i32
    return %c0_i32, %c0_i32_0 : i32, i32
  }
  func.func @transform_10(%arg0: i32) -> (i32, i32) {
    %c0_i32 = arith.constant 0 : i32
    %c0_i32_0 = arith.constant 0 : i32
    %c0_i32_1 = arith.constant 0 : i32
    return %c0_i32, %c0_i32_0 : i32, i32
  }
  func.func @transform_11(%arg0: i32) -> (i32, i32, i32) {
    %c0_i32 = arith.constant 0 : i32
    %c0_i32_0 = arith.constant 0 : i32
    %c0_i32_1 = arith.constant 0 : i32
    return %c0_i32, %arg0, %c0_i32_0 : i32, i32, i32
  }
}

</mosaic_0001>

<llo_original>
// kernel: _forward_impl.3
$region0: #{_forward_impl.3}
  #allocation0 [shape = 'u32[]', space=smem, size = 0x4, offset = 0x4, fixed_abs, tag = 'smem constant byte address 0x4 - core index']
  #allocation1 [shape = 'u32[144,128]{1,0:T(1,128)}', space=vmem, size = 0x12000, scoped, tag = 'internal scratch']
  #allocation2 [shape = 'f32[8,8,128]{2,1,0:T(8,128)}', space=vmem, size = 0x8000, scoped, tag = 'scratch operand']
  #allocation3 [shape = 'f32[8,8,32]{2,1,0:T(8,128)}', space=vmem, size = 0x8000, scoped, tag = 'scratch operand']
  %s0 = inlined_call_operand.vmem [shape: f32[8,8,32], index: 0, kind: input, shape index: {}]
  %s1 = inlined_call_operand.vmem [shape: f32[8,8,32], index: 1, kind: input, shape index: {}]
  %s2 = inlined_call_operand.vmem [shape: bf16[32,32], index: 2, kind: input, shape index: {}]
  %s3 = inlined_call_operand.vmem [shape: f32[1,32], index: 3, kind: input, shape index: {}]
  %s4 = inlined_call_operand.vmem [shape: bf16[32,32], index: 4, kind: input, shape index: {}]
  %s5 = inlined_call_operand.vmem [shape: f32[1,32], index: 5, kind: input, shape index: {}]
  %s6 = inlined_call_operand.vmem [shape: bf16[32,128], index: 6, kind: input, shape index: {}]
  %s7 = inlined_call_operand.vmem [shape: bf16[32,128], index: 7, kind: input, shape index: {}]
  %s8 = inlined_call_operand.vmem [shape: bf16[32,128], index: 8, kind: input, shape index: {}]
  %s9 = inlined_call_operand.vmem [shape: bf16[32,128], index: 9, kind: input, shape index: {}]
  %s10 = inlined_call_operand.vmem [shape: f32[1,128], index: 10, kind: input, shape index: {}]
  %s11 = inlined_call_operand.vmem [shape: f32[8,8,128], index: 11, kind: output, shape index: {}]
  %s12 = sld [smem:[#allocation0]]
  $region54: #{_forward_impl.3} parent=0
    _
  %s14 = ssub.s32 1, %s12
  %s15 = scalar_select 0, %s14, %s12
  // Predicated region
  $region2: #{_forward_impl.3} parent=0 // pred_check
    _
  $region3: #{_forward_impl.3} parent=0 // pred_check_branch
    %17 = sbr.rel (0) target = $region5
  $region4: #{_forward_impl.3} parent=0 // pred_region
    _
  $region5: #{_forward_impl.3} parent=0 // pred_fallthru
    _
  // Predicated region
  $region6: #{_forward_impl.3} parent=0 // pred_check
    _
  $region7: #{_forward_impl.3} parent=0 // pred_check_branch
    %19 = sbr.rel (0) target = $region9
  $region8: #{_forward_impl.3} parent=0 // pred_region
    _
  $region9: #{_forward_impl.3} parent=0 // pred_fallthru
    _
  // Predicated region
  $region10: #{_forward_impl.3} parent=0 // pred_check
    _
  $region11: #{_forward_impl.3} parent=0 // pred_check_branch
    %21 = sbr.rel (0) target = $region13
  $region12: #{_forward_impl.3} parent=0 // pred_region
    _
  $region13: #{_forward_impl.3} parent=0 // pred_fallthru
    _
  // Predicated region
  $region14: #{_forward_impl.3} parent=0 // pred_check
    _
  $region15: #{_forward_impl.3} parent=0 // pred_check_branch
    %23 = sbr.rel (0) target = $region17
  $region16: #{_forward_impl.3} parent=0 // pred_region
    _
  $region17: #{_forward_impl.3} parent=0 // pred_fallthru
    _
  // Predicated region
  $region18: #{_forward_impl.3} parent=0 // pred_check
    _
  $region19: #{_forward_impl.3} parent=0 // pred_check_branch
    %25 = sbr.rel (0) target = $region21
  $region20: #{_forward_impl.3} parent=0 // pred_region
    _
  $region21: #{_forward_impl.3} parent=0 // pred_fallthru
    _
  // Predicated region
  $region22: #{_forward_impl.3} parent=0 // pred_check
    _
  $region23: #{_forward_impl.3} parent=0 // pred_check_branch
    %27 = sbr.rel (0) target = $region25
  $region24: #{_forward_impl.3} parent=0 // pred_region
    _
  $region25: #{_forward_impl.3} parent=0 // pred_fallthru
    _
  // Predicated region
  $region26: #{_forward_impl.3} parent=0 // pred_check
    _
  $region27: #{_forward_impl.3} parent=0 // pred_check_branch
    %29 = sbr.rel (0) target = $region29
  $region28: #{_forward_impl.3} parent=0 // pred_region
    _
  $region29: #{_forward_impl.3} parent=0 // pred_fallthru
    _
  // Predicated region
  $region30: #{_forward_impl.3} parent=0 // pred_check
    _
  $region31: #{_forward_impl.3} parent=0 // pred_check_branch
    %31 = sbr.rel (0) target = $region33
  $region32: #{_forward_impl.3} parent=0 // pred_region
    _
  $region33: #{_forward_impl.3} parent=0 // pred_fallthru
    _
  // Predicated region
  $region34: #{_forward_impl.3} parent=0 // pred_check
    _
  $region35: #{_forward_impl.3} parent=0 // pred_check_branch
    %33 = sbr.rel (0) target = $region37
  $region36: #{_forward_impl.3} parent=0 // pred_region
    _
  $region37: #{_forward_impl.3} parent=0 // pred_fallthru
    _
  // Predicated region
  $region38: #{_forward_impl.3} parent=0 // pred_check
    _
  $region39: #{_forward_impl.3} parent=0 // pred_check_branch
    %35 = sbr.rel (0) target = $region41
  $region40: #{_forward_impl.3} parent=0 // pred_region
    _
  $region41: #{_forward_impl.3} parent=0 // pred_fallthru
    _
  // Predicated region
  $region42: #{_forward_impl.3} parent=0 // pred_check
    _
  $region43: #{_forward_impl.3} parent=0 // pred_check_branch
    %37 = sbr.rel (0) target = $region45
  $region44: #{_forward_impl.3} parent=0 // pred_region
    _
  $region45: #{_forward_impl.3} parent=0 // pred_fallthru
    _
  %v39 = vld [vmem:[%s1] sm:$0xff]
  %v40 = vld [vmem:[%s1 + $0x8] sm:$0xff]
  %v41 = vld [vmem:[%s1 + $0x10] sm:$0xff]
  %v42 = vld [vmem:[%s1 + $0x18] sm:$0xff]
  %v43 = vld [vmem:[%s1 + $0x20] sm:$0xff]
  %v44 = vld [vmem:[%s1 + $0x28] sm:$0xff]
  %v45 = vld [vmem:[%s1 + $0x30] sm:$0xff]
  %v46 = vld [vmem:[%s1 + $0x38] sm:$0xff]
  %v47 = vpack.c.bf16 %v40, %v39
  %v48 = vpack.c.bf16 %v42, %v41
  %v49 = vpack.c.bf16 %v44, %v43
  %v50 = vpack.c.bf16 %v46, %v45
  %v51 = vld [vmem:[%s2] sm:$0xf]
  %v52 = vld [vmem:[%s2 + $0x4] sm:$0xf]
  %v53 = vld [vmem:[%s2 + $0x8] sm:$0xf]
  %v54 = vld [vmem:[%s2 + $0xc] sm:$0xf]
  %v55 = vld [vmem:[%s3] sm:$0x1]
  %v57 = vlaneseq
  %v58 = vshrl.u32 %v57, 7
  %v59 = vsub.s32 0, %v58
  %v60 = vrot.slane %v55, %v59
  %v66 = vunpack.c.l.b16 %v51
  %v67 = vunpack.c.l.b16 %v52
  %v68 = vunpack.c.l.b16 %v53
  %v69 = vunpack.c.l.b16 %v54
  %v70 = vpack.c.b16 %v67, %v66
  %v71 = vpack.c.b16 %v69, %v68
  %vm74 = vcmask 261120
  %v76 = vsel %vm74, %v47, 0
  %v79 = vsel %vm74, %v48, 0
  %v82 = vsel %vm74, %v49, 0
  %v85 = vsel %vm74, %v50, 0
  %87 = vmatprep.subr.bf16.mxu0 0
  %88 = vmatpush1.bf16.msra.mxu0 %v70
  %89 = vmatprep.subr.bf16.mxu0 0
  %90 = vmatpush1.bf16.msra.mxu0 %v71
  %91 = vmatprep.subr.bf16.mxu0 0
  %92 = vmatpush1.bf16.msra.mxu0 0
  %93 = vmatprep.subr.bf16.mxu0 0
  %94 = vmatpush1.bf16.msra.mxu0 0
  %95 = vmatprep.subr.bf16.mxu0 0
  %96 = vmatpush1.bf16.msra.mxu0 0
  %97 = vmatprep.subr.bf16.mxu0 0
  %98 = vmatpush1.bf16.msra.mxu0 0
  %99 = vmatprep.subr.bf16.mxu0 0
  %100 = vmatpush1.bf16.msra.mxu0 0
  %101 = vmatprep.subr.bf16.mxu0 0
  %102 = vmatpush1.bf16.msra.mxu0 0
  %103 = vmatprep.subr.bf16.mxu0 0
  %104 = vmatpush1.bf16.msra.mxu0 0
  %105 = vmatprep.subr.bf16.mxu0 0
  %106 = vmatpush1.bf16.msra.mxu0 0
  %107 = vmatprep.subr.bf16.mxu0 0
  %108 = vmatpush1.bf16.msra.mxu0 0
  %109 = vmatprep.subr.bf16.mxu0 0
  %110 = vmatpush1.bf16.msra.mxu0 0
  %111 = vmatprep.subr.bf16.mxu0 0
  %112 = vmatpush1.bf16.msra.mxu0 0
  %113 = vmatprep.subr.bf16.mxu0 0
  %114 = vmatpush1.bf16.msra.mxu0 0
  %115 = vmatprep.subr.bf16.mxu0 0
  %116 = vmatpush1.bf16.msra.mxu0 0
  %117 = vmatprep.subr.bf16.mxu0 0
  %118 = vmatpush1.bf16.msra.mxu0 0
  %119 = vmatprep.mubr.bf16.mxu0 0
  %120 = vmatmul.mubr.bf16.gmra.mrb[0].mxu0 %v76
  %v121 = vpop.f32.mrb[0].mxu0
  %v122 = vadd.f32 %v60, %v121
  %v123 = vpop.f32.mrb[0].mxu0
  %v124 = vpop.f32.mrb[0].mxu0
  %v125 = vadd.f32 %v60, %v124
  %v126 = vpop.f32.mrb[0].mxu0
  %127 = vmatprep.mubr.bf16.mxu0 0
  %128 = vmatmul.mubr.bf16.gmra.mrb[0].mxu0 %v79
  %v129 = vpop.f32.mrb[0].mxu0
  %v130 = vadd.f32 %v60, %v129
  %v131 = vpop.f32.mrb[0].mxu0
  %v132 = vpop.f32.mrb[0].mxu0
  %v133 = vadd.f32 %v60, %v132
  %v134 = vpop.f32.mrb[0].mxu0
  %135 = vmatprep.mubr.bf16.mxu0 0
  %136 = vmatmul.mubr.bf16.gmra.mrb[0].mxu0 %v82
  %v137 = vpop.f32.mrb[0].mxu0
  %v138 = vadd.f32 %v60, %v137
  %v139 = vpop.f32.mrb[0].mxu0
  %v140 = vpop.f32.mrb[0].mxu0
  %v141 = vadd.f32 %v60, %v140
  %v142 = vpop.f32.mrb[0].mxu0
  %143 = vmatprep.mubr.bf16.mxu0 0
  %144 = vmatmul.mubr.bf16.gmra.mrb[0].mxu0 %v85
  %v145 = vpop.f32.mrb[0].mxu0
  %v146 = vadd.f32 %v60, %v145
  %v147 = vpop.f32.mrb[0].mxu0
  %v148 = vpop.f32.mrb[0].mxu0
  %v149 = vadd.f32 %v60, %v148
  %v150 = vpop.f32.mrb[0].mxu0
  %151 = vdwg.mxu0
  %v152 = vmax.f32 %v122, 0.0
  %v153 = vmax.f32 %v125, 0.0
  %v154 = vmax.f32 %v130, 0.0
  %v155 = vmax.f32 %v133, 0.0
  %v156 = vmax.f32 %v138, 0.0
  %v157 = vmax.f32 %v141, 0.0
  %v158 = vmax.f32 %v146, 0.0
  %v159 = vmax.f32 %v149, 0.0
  %v160 = vld [vmem:[%s4] sm:$0xf]
  %v161 = vld [vmem:[%s4 + $0x4] sm:$0xf]
  %v162 = vld [vmem:[%s4 + $0x8] sm:$0xf]
  %v163 = vld [vmem:[%s4 + $0xc] sm:$0xf]
  %v164 = vld [vmem:[%s5] sm:$0x1]
  %v166 = vlaneseq
  %v167 = vshrl.u32 %v166, 7
  %v168 = vsub.s32 0, %v167
  %v169 = vrot.slane %v164, %v168
  %v175 = vunpack.c.l.b16 %v160
  %v176 = vunpack.c.l.b16 %v161
  %v177 = vunpack.c.l.b16 %v162
  %v178 = vunpack.c.l.b16 %v163
  %v179 = vpack.c.b16 %v176, %v175
  %v180 = vpack.c.b16 %v178, %v177
  %183 = vmatprep.subr.bf16.mxu0 0
  %184 = vmatpush1.bf16.msra.mxu0 %v179
  %185 = vmatprep.subr.bf16.mxu0 0
  %186 = vmatpush1.bf16.msra.mxu0 %v180
  %187 = vmatprep.subr.bf16.mxu0 0
  %188 = vmatpush1.bf16.msra.mxu0 0
  %189 = vmatprep.subr.bf16.mxu0 0
  %190 = vmatpush1.bf16.msra.mxu0 0
  %191 = vmatprep.subr.bf16.mxu0 0
  %192 = vmatpush1.bf16.msra.mxu0 0
  %193 = vmatprep.subr.bf16.mxu0 0
  %194 = vmatpush1.bf16.msra.mxu0 0
  %195 = vmatprep.subr.bf16.mxu0 0
  %196 = vmatpush1.bf16.msra.mxu0 0
  %197 = vmatprep.subr.bf16.mxu0 0
  %198 = vmatpush1.bf16.msra.mxu0 0
  %199 = vmatprep.subr.bf16.mxu0 0
  %200 = vmatpush1.bf16.msra.mxu0 0
  %201 = vmatprep.subr.bf16.mxu0 0
  %202 = vmatpush1.bf16.msra.mxu0 0
  %203 = vmatprep.subr.bf16.mxu0 0
  %204 = vmatpush1.bf16.msra.mxu0 0
  %205 = vmatprep.subr.bf16.mxu0 0
  %206 = vmatpush1.bf16.msra.mxu0 0
  %207 = vmatprep.subr.bf16.mxu0 0
  %208 = vmatpush1.bf16.msra.mxu0 0
  %209 = vmatprep.subr.bf16.mxu0 0
  %210 = vmatpush1.bf16.msra.mxu0 0
  %211 = vmatprep.subr.bf16.mxu0 0
  %212 = vmatpush1.bf16.msra.mxu0 0
  %213 = vmatprep.subr.bf16.mxu0 0
  %214 = vmatpush1.bf16.msra.mxu0 0
  %215 = vmatprep.mubr.bf16.mxu0 0
  %216 = vmatmul.mubr.bf16.gmra.mrb[0].mxu0 %v76
  %v217 = vpop.f32.mrb[0].mxu0
  %v218 = vadd.f32 %v169, %v217
  %v219 = vpop.f32.mrb[0].mxu0
  %v220 = vpop.f32.mrb[0].mxu0
  %v221 = vadd.f32 %v169, %v220
  %v222 = vpop.f32.mrb[0].mxu0
  %223 = vmatprep.mubr.bf16.mxu0 0
  %224 = vmatmul.mubr.bf16.gmra.mrb[0].mxu0 %v79
  %v225 = vpop.f32.mrb[0].mxu0
  %v226 = vadd.f32 %v169, %v225
  %v227 = vpop.f32.mrb[0].mxu0
  %v228 = vpop.f32.mrb[0].mxu0
  %v229 = vadd.f32 %v169, %v228
  %v230 = vpop.f32.mrb[0].mxu0
  %231 = vmatprep.mubr.bf16.mxu0 0
  %232 = vmatmul.mubr.bf16.gmra.mrb[0].mxu0 %v82
  %v233 = vpop.f32.mrb[0].mxu0
  %v234 = vadd.f32 %v169, %v233
  %v235 = vpop.f32.mrb[0].mxu0
  %v236 = vpop.f32.mrb[0].mxu0
  %v237 = vadd.f32 %v169, %v236
  %v238 = vpop.f32.mrb[0].mxu0
  %239 = vmatprep.mubr.bf16.mxu0 0
  %240 = vmatmul.mubr.bf16.gmra.mrb[0].mxu0 %v85
  %v241 = vpop.f32.mrb[0].mxu0
  %v242 = vadd.f32 %v169, %v241
  %v243 = vpop.f32.mrb[0].mxu0
  %v244 = vpop.f32.mrb[0].mxu0
  %v245 = vadd.f32 %v169, %v244
  %v246 = vpop.f32.mrb[0].mxu0
  %247 = vdwg.mxu0
  %v248 = vxor.u32 %v218, 2147483648
  %v249 = vxor.u32 %v221, 2147483648
  %v250 = vxor.u32 %v226, 2147483648
  %v251 = vxor.u32 %v229, 2147483648
  %v252 = vxor.u32 %v234, 2147483648
  %v253 = vxor.u32 %v237, 2147483648
  %v254 = vxor.u32 %v242, 2147483648
  %v255 = vxor.u32 %v245, 2147483648
  %v256 = vmul.f32 %v248, 1.442695
  %v257 = vpow.pop %v256
  %v258 = vmul.f32 %v249, 1.442695
  %v259 = vpow.pop %v258
  %v260 = vmul.f32 %v250, 1.442695
  %v261 = vpow.pop %v260
  %v262 = vmul.f32 %v251, 1.442695
  %v263 = vpow.pop %v262
  %v264 = vmul.f32 %v252, 1.442695
  %v265 = vpow.pop %v264
  %v266 = vmul.f32 %v253, 1.442695
  %v267 = vpow.pop %v266
  %v268 = vmul.f32 %v254, 1.442695
  %v269 = vpow.pop %v268
  %v270 = vmul.f32 %v255, 1.442695
  %v271 = vpow.pop %v270
  %v272 = vadd.f32 %v257, 1.0
  %v273 = vadd.f32 %v259, 1.0
  %v274 = vadd.f32 %v261, 1.0
  %v275 = vadd.f32 %v263, 1.0
  %v276 = vadd.f32 %v265, 1.0
  %v277 = vadd.f32 %v267, 1.0
  %v278 = vadd.f32 %v269, 1.0
  %v279 = vadd.f32 %v271, 1.0
  %v280 = vrcp.pop %v272
  %v281 = vmul.f32 1.0, %v280
  %v282 = vrcp.pop %v273
  %v283 = vmul.f32 1.0, %v282
  %v284 = vrcp.pop %v274
  %v285 = vmul.f32 1.0, %v284
  %v286 = vrcp.pop %v275
  %v287 = vmul.f32 1.0, %v286
  %v288 = vrcp.pop %v276
  %v289 = vmul.f32 1.0, %v288
  %v290 = vrcp.pop %v277
  %v291 = vmul.f32 1.0, %v290
  %v292 = vrcp.pop %v278
  %v293 = vmul.f32 1.0, %v292
  %v294 = vrcp.pop %v279
  %v295 = vmul.f32 1.0, %v294
  %v296 = vmul.f32 %v281, %v152
  %v297 = vmul.f32 %v283, %v153
  %v298 = vmul.f32 %v285, %v154
  %v299 = vmul.f32 %v287, %v155
  %v300 = vmul.f32 %v289, %v156
  %v301 = vmul.f32 %v291, %v157
  %v302 = vmul.f32 %v293, %v158
  %v303 = vmul.f32 %v295, %v159
  %v304 = vsub.f32 1.0, %v281
  %v305 = vsub.f32 1.0, %v283
  %v306 = vsub.f32 1.0, %v285
  %v307 = vsub.f32 1.0, %v287
  %v308 = vsub.f32 1.0, %v289
  %v309 = vsub.f32 1.0, %v291
  %v310 = vsub.f32 1.0, %v293
  %v311 = vsub.f32 1.0, %v295
  %v312 = vmul.f32 %v304, %v39
  %v313 = vmul.f32 %v305, %v40
  %v314 = vmul.f32 %v306, %v41
  %v315 = vmul.f32 %v307, %v42
  %v316 = vmul.f32 %v308, %v43
  %v317 = vmul.f32 %v309, %v44
  %v318 = vmul.f32 %v310, %v45
  %v319 = vmul.f32 %v311, %v46
  %v320 = vadd.f32 %v296, %v312
  %v321 = vadd.f32 %v297, %v313
  %v322 = vadd.f32 %v298, %v314
  %v323 = vadd.f32 %v299, %v315
  %v324 = vadd.f32 %v300, %v316
  %v325 = vadd.f32 %v301, %v317
  %v326 = vadd.f32 %v302, %v318
  %v327 = vadd.f32 %v303, %v319
  %v328 = vld [vmem:[%s0] sm:$0xff]
  %v329 = vld [vmem:[%s0 + $0x8] sm:$0xff]
  %v330 = vld [vmem:[%s0 + $0x10] sm:$0xff]
  %v331 = vld [vmem:[%s0 + $0x18] sm:$0xff]
  %v332 = vld [vmem:[%s0 + $0x20] sm:$0xff]
  %v333 = vld [vmem:[%s0 + $0x28] sm:$0xff]
  %v334 = vld [vmem:[%s0 + $0x30] sm:$0xff]
  %v335 = vld [vmem:[%s0 + $0x38] sm:$0xff]
  %v336 = vpack.c.bf16 %v329, %v328
  %v337 = vpack.c.bf16 %v331, %v330
  %v338 = vpack.c.bf16 %v333, %v332
  %v339 = vpack.c.bf16 %v335, %v334
  %v340 = vld [vmem:[%s6] sm:$0xf]
  %v341 = vld [vmem:[%s6 + $0x4] sm:$0xf]
  %v342 = vld [vmem:[%s6 + $0x8] sm:$0xf]
  %v343 = vld [vmem:[%s6 + $0xc] sm:$0xf]
  %v344 = vpack.c.bf16 %v321, %v320
  %v345 = vpack.c.bf16 %v323, %v322
  %v346 = vpack.c.bf16 %v325, %v324
  %v347 = vpack.c.bf16 %v327, %v326
  %v348 = vld [vmem:[%s7] sm:$0xf]
  %v349 = vld [vmem:[%s7 + $0x4] sm:$0xf]
  %v350 = vld [vmem:[%s7 + $0x8] sm:$0xf]
  %v351 = vld [vmem:[%s7 + $0xc] sm:$0xf]
  %v356 = vunpack.c.l.b16 %v348
  %v357 = vunpack.c.l.b16 %v349
  %v358 = vunpack.c.l.b16 %v350
  %v359 = vunpack.c.l.b16 %v351
  %v360 = vpack.c.b16 %v357, %v356
  %v361 = vpack.c.b16 %v359, %v358
  %v365 = vsel %vm74, %v344, 0
  %v368 = vsel %vm74, %v345, 0
  %v371 = vsel %vm74, %v346, 0
  %v374 = vsel %vm74, %v347, 0
  %376 = vmatprep.subr.bf16.mxu0 0
  %377 = vmatpush1.bf16.msra.mxu0 %v360
  %378 = vmatprep.subr.bf16.mxu0 0
  %379 = vmatpush1.bf16.msra.mxu0 %v361
  %380 = vmatprep.subr.bf16.mxu0 0
  %381 = vmatpush1.bf16.msra.mxu0 0
  %382 = vmatprep.subr.bf16.mxu0 0
  %383 = vmatpush1.bf16.msra.mxu0 0
  %384 = vmatprep.subr.bf16.mxu0 0
  %385 = vmatpush1.bf16.msra.mxu0 0
  %386 = vmatprep.subr.bf16.mxu0 0
  %387 = vmatpush1.bf16.msra.mxu0 0
  %388 = vmatprep.subr.bf16.mxu0 0
  %389 = vmatpush1.bf16.msra.mxu0 0
  %390 = vmatprep.subr.bf16.mxu0 0
  %391 = vmatpush1.bf16.msra.mxu0 0
  %392 = vmatprep.subr.bf16.mxu0 0
  %393 = vmatpush1.bf16.msra.mxu0 0
  %394 = vmatprep.subr.bf16.mxu0 0
  %395 = vmatpush1.bf16.msra.mxu0 0
  %396 = vmatprep.subr.bf16.mxu0 0
  %397 = vmatpush1.bf16.msra.mxu0 0
  %398 = vmatprep.subr.bf16.mxu0 0
  %399 = vmatpush1.bf16.msra.mxu0 0
  %400 = vmatprep.subr.bf16.mxu0 0
  %401 = vmatpush1.bf16.msra.mxu0 0
  %402 = vmatprep.subr.bf16.mxu0 0
  %403 = vmatpush1.bf16.msra.mxu0 0
  %404 = vmatprep.subr.bf16.mxu0 0
  %405 = vmatpush1.bf16.msra.mxu0 0
  %406 = vmatprep.subr.bf16.mxu0 0
  %407 = vmatpush1.bf16.msra.mxu0 0
  %408 = vmatprep.mubr.bf16.mxu0 0
  %409 = vmatmul.mubr.bf16.gmra.mrb[0].mxu0 %v365
  %v410 = vpop.f32.mrb[0].mxu0
  %v411 = vadd.f32 0.0, %v410
  %v412 = vpop.f32.mrb[0].mxu0
  %v413 = vpop.f32.mrb[0].mxu0
  %v414 = vadd.f32 0.0, %v413
  %v415 = vpop.f32.mrb[0].mxu0
  %416 = vmatprep.mubr.bf16.mxu0 0
  %417 = vmatmul.mubr.bf16.gmra.mrb[0].mxu0 %v368
  %v418 = vpop.f32.mrb[0].mxu0
  %v419 = vadd.f32 0.0, %v418
  %v420 = vpop.f32.mrb[0].mxu0
  %v421 = vpop.f32.mrb[0].mxu0
  %v422 = vadd.f32 0.0, %v421
  %v423 = vpop.f32.mrb[0].mxu0
  %424 = vmatprep.mubr.bf16.mxu0 0
  %425 = vmatmul.mubr.bf16.gmra.mrb[0].mxu0 %v371
  %v426 = vpop.f32.mrb[0].mxu0
  %v427 = vadd.f32 0.0, %v426
  %v428 = vpop.f32.mrb[0].mxu0
  %v429 = vpop.f32.mrb[0].mxu0
  %v430 = vadd.f32 0.0, %v429
  %v431 = vpop.f32.mrb[0].mxu0
  %432 = vmatprep.mubr.bf16.mxu0 0
  %433 = vmatmul.mubr.bf16.gmra.mrb[0].mxu0 %v374
  %v434 = vpop.f32.mrb[0].mxu0
  %v435 = vadd.f32 0.0, %v434
  %v436 = vpop.f32.mrb[0].mxu0
  %v437 = vpop.f32.mrb[0].mxu0
  %v438 = vadd.f32 0.0, %v437
  %v439 = vpop.f32.mrb[0].mxu0
  %440 = vdwg.mxu0
  %v445 = vunpack.c.l.b16 %v340
  %v446 = vunpack.c.l.b16 %v341
  %v447 = vunpack.c.l.b16 %v342
  %v448 = vunpack.c.l.b16 %v343
  %v449 = vpack.c.b16 %v446, %v445
  %v450 = vpack.c.b16 %v448, %v447
  %v454 = vsel %vm74, %v336, 0
  %v457 = vsel %vm74, %v337, 0
  %v460 = vsel %vm74, %v338, 0
  %v463 = vsel %vm74, %v339, 0
  %465 = vmatprep.subr.bf16.mxu0 0
  %466 = vmatpush1.bf16.msra.mxu0 %v449
  %467 = vmatprep.subr.bf16.mxu0 0
  %468 = vmatpush1.bf16.msra.mxu0 %v450
  %469 = vmatprep.subr.bf16.mxu0 0
  %470 = vmatpush1.bf16.msra.mxu0 0
  %471 = vmatprep.subr.bf16.mxu0 0
  %472 = vmatpush1.bf16.msra.mxu0 0
  %473 = vmatprep.subr.bf16.mxu0 0
  %474 = vmatpush1.bf16.msra.mxu0 0
  %475 = vmatprep.subr.bf16.mxu0 0
  %476 = vmatpush1.bf16.msra.mxu0 0
  %477 = vmatprep.subr.bf16.mxu0 0
  %478 = vmatpush1.bf16.msra.mxu0 0
  %479 = vmatprep.subr.bf16.mxu0 0
  %480 = vmatpush1.bf16.msra.mxu0 0
  %481 = vmatprep.subr.bf16.mxu0 0
  %482 = vmatpush1.bf16.msra.mxu0 0
  %483 = vmatprep.subr.bf16.mxu0 0
  %484 = vmatpush1.bf16.msra.mxu0 0
  %485 = vmatprep.subr.bf16.mxu0 0
  %486 = vmatpush1.bf16.msra.mxu0 0
  %487 = vmatprep.subr.bf16.mxu0 0
  %488 = vmatpush1.bf16.msra.mxu0 0
  %489 = vmatprep.subr.bf16.mxu0 0
  %490 = vmatpush1.bf16.msra.mxu0 0
  %491 = vmatprep.subr.bf16.mxu0 0
  %492 = vmatpush1.bf16.msra.mxu0 0
  %493 = vmatprep.subr.bf16.mxu0 0
  %494 = vmatpush1.bf16.msra.mxu0 0
  %495 = vmatprep.subr.bf16.mxu0 0
  %496 = vmatpush1.bf16.msra.mxu0 0
  %497 = vmatprep.mubr.bf16.mxu0 0
  %498 = vmatmul.mubr.bf16.gmra.mrb[0].mxu0 %v454
  %v499 = vpop.f32.mrb[0].mxu0
  %v500 = vadd.f32 %v411, %v499
  %v501 = vpop.f32.mrb[0].mxu0
  %v502 = vpop.f32.mrb[0].mxu0
  %v503 = vadd.f32 %v414, %v502
  %v504 = vpop.f32.mrb[0].mxu0
  %505 = vmatprep.mubr.bf16.mxu0 0
  %506 = vmatmul.mubr.bf16.gmra.mrb[0].mxu0 %v457
  %v507 = vpop.f32.mrb[0].mxu0
  %v508 = vadd.f32 %v419, %v507
  %v509 = vpop.f32.mrb[0].mxu0
  %v510 = vpop.f32.mrb[0].mxu0
  %v511 = vadd.f32 %v422, %v510
  %v512 = vpop.f32.mrb[0].mxu0
  %513 = vmatprep.mubr.bf16.mxu0 0
  %514 = vmatmul.mubr.bf16.gmra.mrb[0].mxu0 %v460
  %v515 = vpop.f32.mrb[0].mxu0
  %v516 = vadd.f32 %v427, %v515
  %v517 = vpop.f32.mrb[0].mxu0
  %v518 = vpop.f32.mrb[0].mxu0
  %v519 = vadd.f32 %v430, %v518
  %v520 = vpop.f32.mrb[0].mxu0
  %521 = vmatprep.mubr.bf16.mxu0 0
  %522 = vmatmul.mubr.bf16.gmra.mrb[0].mxu0 %v463
  %v523 = vpop.f32.mrb[0].mxu0
  %v524 = vadd.f32 %v435, %v523
  %v525 = vpop.f32.mrb[0].mxu0
  %v526 = vpop.f32.mrb[0].mxu0
  %v527 = vadd.f32 %v438, %v526
  %v528 = vpop.f32.mrb[0].mxu0
  %529 = vdwg.mxu0
  %530 = vst [vmem:[#allocation2] sm:$0xff] %v500
  %531 = vst [vmem:[#allocation2 + $0x8] sm:$0xff] %v503
  %532 = vst [vmem:[#allocation2 + $0x10] sm:$0xff] %v508
  %533 = vst [vmem:[#allocation2 + $0x18] sm:$0xff] %v511
  %534 = vst [vmem:[#allocation2 + $0x20] sm:$0xff] %v516
  %535 = vst [vmem:[#allocation2 + $0x28] sm:$0xff] %v519
  %536 = vst [vmem:[#allocation2 + $0x30] sm:$0xff] %v524
  %537 = vst [vmem:[#allocation2 + $0x38] sm:$0xff] %v527
  %v538 = vld [vmem:[%s8] sm:$0xf]
  %v539 = vld [vmem:[%s8 + $0x4] sm:$0xf]
  %v540 = vld [vmem:[%s8 + $0x8] sm:$0xf]
  %v541 = vld [vmem:[%s8 + $0xc] sm:$0xf]
  %v542 = vld [vmem:[#allocation2] sm:$0xff]
  %v547 = vunpack.c.l.b16 %v538
  %v548 = vunpack.c.l.b16 %v539
  %v549 = vunpack.c.l.b16 %v540
  %v550 = vunpack.c.l.b16 %v541
  %v551 = vpack.c.b16 %v548, %v547
  %v552 = vpack.c.b16 %v550, %v549
  %v556 = vsel %vm74, 0, 0
  %558 = vmatprep.subr.bf16.mxu0 0
  %559 = vmatpush1.bf16.msra.mxu0 %v551
  %560 = vmatprep.subr.bf16.mxu0 0
  %561 = vmatpush1.bf16.msra.mxu0 %v552
  %562 = vmatprep.subr.bf16.mxu0 0
  %563 = vmatpush1.bf16.msra.mxu0 0
  %564 = vmatprep.subr.bf16.mxu0 0
  %565 = vmatpush1.bf16.msra.mxu0 0
  %566 = vmatprep.subr.bf16.mxu0 0
  %567 = vmatpush1.bf16.msra.mxu0 0
  %568 = vmatprep.subr.bf16.mxu0 0
  %569 = vmatpush1.bf16.msra.mxu0 0
  %570 = vmatprep.subr.bf16.mxu0 0
  %571 = vmatpush1.bf16.msra.mxu0 0
  %572 = vmatprep.subr.bf16.mxu0 0
  %573 = vmatpush1.bf16.msra.mxu0 0
  %574 = vmatprep.subr.bf16.mxu0 0
  %575 = vmatpush1.bf16.msra.mxu0 0
  %576 = vmatprep.subr.bf16.mxu0 0
  %577 = vmatpush1.bf16.msra.mxu0 0
  %578 = vmatprep.subr.bf16.mxu0 0
  %579 = vmatpush1.bf16.msra.mxu0 0
  %580 = vmatprep.subr.bf16.mxu0 0
  %581 = vmatpush1.bf16.msra.mxu0 0
  %582 = vmatprep.subr.bf16.mxu0 0
  %583 = vmatpush1.bf16.msra.mxu0 0
  %584 = vmatprep.subr.bf16.mxu0 0
  %585 = vmatpush1.bf16.msra.mxu0 0
  %586 = vmatprep.subr.bf16.mxu0 0
  %587 = vmatpush1.bf16.msra.mxu0 0
  %588 = vmatprep.subr.bf16.mxu0 0
  %589 = vmatpush1.bf16.msra.mxu0 0
  %590 = vmatprep.mubr.bf16.mxu0 0
  %591 = vmatmul.mubr.bf16.gmra.mrb[0].mxu0 %v556
  %v592 = vpop.f32.mrb[0].mxu0
  %v593 = vadd.f32 0.0, %v592
  %v594 = vpop.f32.mrb[0].mxu0
  %v595 = vpop.f32.mrb[0].mxu0
  %v596 = vpop.f32.mrb[0].mxu0
  %597 = vdwg.mxu0
  %v598 = vadd.f32 %v542, %v593
  %v599 = vxor.u32 %v598, 2147483648
  %v600 = vmul.f32 %v599, 1.442695
  %v601 = vpow.pop %v600
  %v602 = vadd.f32 %v601, 1.0
  %v603 = vrcp.pop %v602
  %v604 = vmul.f32 1.0, %v603
  %v605 = vtanh.pop %v598
  %v606 = vmul.f32 %v604, 0.0
  %608 = vrot.lane.b32.xlu0 %v605, 64
  %v609 = vpop.permute.xlu0 %608
  %v611 = vmul.f32 %v604, %v609
  %613 = vrot.lane.b32.xlu0 %v611, 32
  %v614 = vpop.permute.xlu0 %613
  %v616 = vadd.f32 %v606, %v614
  %v617 = vtanh.pop %v616
  %619 = vrot.lane.b32.xlu0 %v617, 64
  %v620 = vpop.permute.xlu0 %619
  %v622 = vmul.f32 %v604, %v620
  %624 = vrot.lane.b32.xlu0 %v622, 32
  %v625 = vpop.permute.xlu0 %624
  %627 = vst.msk [vmem:[#allocation3] sm:$0xff] %vm74, %v625
  %s628 = scalar_lea.vmem [#allocation2], 8
  %v629 = vld [vmem:[%s628] sm:$0xff]
  %v630 = vpack.c.bf16 %v622, %v622
  %632 = vrot.lane.b32.xlu0 %v630, 32
  %v633 = vpop.permute.xlu0 %632
  %v635 = vsel %vm74, %v633, 0
  %637 = vmatprep.subr.bf16.mxu0 0
  %638 = vmatpush1.bf16.msra.mxu0 %v551
  %639 = vmatprep.subr.bf16.mxu0 0
  %640 = vmatpush1.bf16.msra.mxu0 %v552
  %641 = vmatprep.subr.bf16.mxu0 0
  %642 = vmatpush1.bf16.msra.mxu0 0
  %643 = vmatprep.subr.bf16.mxu0 0
  %644 = vmatpush1.bf16.msra.mxu0 0
  %645 = vmatprep.subr.bf16.mxu0 0
  %646 = vmatpush1.bf16.msra.mxu0 0
  %647 = vmatprep.subr.bf16.mxu0 0
  %648 = vmatpush1.bf16.msra.mxu0 0
  %649 = vmatprep.subr.bf16.mxu0 0
  %650 = vmatpush1.bf16.msra.mxu0 0
  %651 = vmatprep.subr.bf16.mxu0 0
  %652 = vmatpush1.bf16.msra.mxu0 0
  %653 = vmatprep.subr.bf16.mxu0 0
  %654 = vmatpush1.bf16.msra.mxu0 0
  %655 = vmatprep.subr.bf16.mxu0 0
  %656 = vmatpush1.bf16.msra.mxu0 0
  %657 = vmatprep.subr.bf16.mxu0 0
  %658 = vmatpush1.bf16.msra.mxu0 0
  %659 = vmatprep.subr.bf16.mxu0 0
  %660 = vmatpush1.bf16.msra.mxu0 0
  %661 = vmatprep.subr.bf16.mxu0 0
  %662 = vmatpush1.bf16.msra.mxu0 0
  %663 = vmatprep.subr.bf16.mxu0 0
  %664 = vmatpush1.bf16.msra.mxu0 0
  %665 = vmatprep.subr.bf16.mxu0 0
  %666 = vmatpush1.bf16.msra.mxu0 0
  %667 = vmatprep.subr.bf16.mxu0 0
  %668 = vmatpush1.bf16.msra.mxu0 0
  %669 = vmatprep.mubr.bf16.mxu0 0
  %670 = vmatmul.mubr.bf16.gmra.mrb[0].mxu0 %v635
  %v671 = vpop.f32.mrb[0].mxu0
  %v672 = vadd.f32 0.0, %v671
  %v673 = vpop.f32.mrb[0].mxu0
  %v674 = vpop.f32.mrb[0].mxu0
  %v675 = vpop.f32.mrb[0].mxu0
  %676 = vdwg.mxu0
  %v677 = vadd.f32 %v629, %v672
  %v678 = vxor.u32 %v677, 2147483648
  %v679 = vmul.f32 %v678, 1.442695
  %v680 = vpow.pop %v679
  %v681 = vadd.f32 %v680, 1.0
  %v682 = vrcp.pop %v681
  %v683 = vmul.f32 1.0, %v682
  %v684 = vtanh.pop %v677
  %v685 = vmul.f32 %v683, %v616
  %687 = vrot.lane.b32.xlu0 %v684, 64
  %v688 = vpop.permute.xlu0 %687
  %v690 = vmul.f32 %v683, %v688
  %692 = vrot.lane.b32.xlu0 %v690, 32
  %v693 = vpop.permute.xlu0 %692
  %v695 = vadd.f32 %v685, %v693
  %v696 = vtanh.pop %v695
  %698 = vrot.lane.b32.xlu0 %v696, 64
  %v699 = vpop.permute.xlu0 %698
  %v701 = vmul.f32 %v683, %v699
  %703 = vrot.lane.b32.xlu0 %v701, 32
  %v704 = vpop.permute.xlu0 %703
  %s706 = scalar_lea.vmem [#allocation3], 8
  %707 = vst.msk [vmem:[%s706] sm:$0xff] %vm74, %v704
  %s708 = scalar_lea.vmem [#allocation2], 16
  %v709 = vld [vmem:[%s708] sm:$0xff]
  %v710 = vpack.c.bf16 %v701, %v701
  %712 = vrot.lane.b32.xlu0 %v710, 32
  %v713 = vpop.permute.xlu0 %712
  %v715 = vsel %vm74, %v713, 0
  %717 = vmatprep.subr.bf16.mxu0 0
  %718 = vmatpush1.bf16.msra.mxu0 %v551
  %719 = vmatprep.subr.bf16.mxu0 0
  %720 = vmatpush1.bf16.msra.mxu0 %v552
  %721 = vmatprep.subr.bf16.mxu0 0
  %722 = vmatpush1.bf16.msra.mxu0 0
  %723 = vmatprep.subr.bf16.mxu0 0
  %724 = vmatpush1.bf16.msra.mxu0 0
  %725 = vmatprep.subr.bf16.mxu0 0
  %726 = vmatpush1.bf16.msra.mxu0 0
  %727 = vmatprep.subr.bf16.mxu0 0
  %728 = vmatpush1.bf16.msra.mxu0 0
  %729 = vmatprep.subr.bf16.mxu0 0
  %730 = vmatpush1.bf16.msra.mxu0 0
  %731 = vmatprep.subr.bf16.mxu0 0
  %732 = vmatpush1.bf16.msra.mxu0 0
  %733 = vmatprep.subr.bf16.mxu0 0
  %734 = vmatpush1.bf16.msra.mxu0 0
  %735 = vmatprep.subr.bf16.mxu0 0
  %736 = vmatpush1.bf16.msra.mxu0 0
  %737 = vmatprep.subr.bf16.mxu0 0
  %738 = vmatpush1.bf16.msra.mxu0 0
  %739 = vmatprep.subr.bf16.mxu0 0
  %740 = vmatpush1.bf16.msra.mxu0 0
  %741 = vmatprep.subr.bf16.mxu0 0
  %742 = vmatpush1.bf16.msra.mxu0 0
  %743 = vmatprep.subr.bf16.mxu0 0
  %744 = vmatpush1.bf16.msra.mxu0 0
  %745 = vmatprep.subr.bf16.mxu0 0
  %746 = vmatpush1.bf16.msra.mxu0 0
  %747 = vmatprep.subr.bf16.mxu0 0
  %748 = vmatpush1.bf16.msra.mxu0 0
  %749 = vmatprep.mubr.bf16.mxu0 0
  %750 = vmatmul.mubr.bf16.gmra.mrb[0].mxu0 %v715
  %v751 = vpop.f32.mrb[0].mxu0
  %v752 = vadd.f32 0.0, %v751
  %v753 = vpop.f32.mrb[0].mxu0
  %v754 = vpop.f32.mrb[0].mxu0
  %v755 = vpop.f32.mrb[0].mxu0
  %756 = vdwg.mxu0
  %v757 = vadd.f32 %v709, %v752
  %v758 = vxor.u32 %v757, 2147483648
  %v759 = vmul.f32 %v758, 1.442695
  %v760 = vpow.pop %v759
  %v761 = vadd.f32 %v760, 1.0
  %v762 = vrcp.pop %v761
  %v763 = vmul.f32 1.0, %v762
  %v764 = vtanh.pop %v757
  %v765 = vmul.f32 %v763, %v695
  %767 = vrot.lane.b32.xlu0 %v764, 64
  %v768 = vpop.permute.xlu0 %767
  %v770 = vmul.f32 %v763, %v768
  %772 = vrot.lane.b32.xlu0 %v770, 32
  %v773 = vpop.permute.xlu0 %772
  %v775 = vadd.f32 %v765, %v773
  %v776 = vtanh.pop %v775
  %778 = vrot.lane.b32.xlu0 %v776, 64
  %v779 = vpop.permute.xlu0 %778
  %v781 = vmul.f32 %v763, %v779
  %783 = vrot.lane.b32.xlu0 %v781, 32
  %v784 = vpop.permute.xlu0 %783
  %s786 = scalar_lea.vmem [#allocation3], 16
  %787 = vst.msk [vmem:[%s786] sm:$0xff] %vm74, %v784
  %s788 = scalar_lea.vmem [#allocation2], 24
  %v789 = vld [vmem:[%s788] sm:$0xff]
  %v790 = vpack.c.bf16 %v781, %v781
  %792 = vrot.lane.b32.xlu0 %v790, 32
  %v793 = vpop.permute.xlu0 %792
  %v795 = vsel %vm74, %v793, 0
  %797 = vmatprep.subr.bf16.mxu0 0
  %798 = vmatpush1.bf16.msra.mxu0 %v551
  %799 = vmatprep.subr.bf16.mxu0 0
  %800 = vmatpush1.bf16.msra.mxu0 %v552
  %801 = vmatprep.subr.bf16.mxu0 0
  %802 = vmatpush1.bf16.msra.mxu0 0
  %803 = vmatprep.subr.bf16.mxu0 0
  %804 = vmatpush1.bf16.msra.mxu0 0
  %805 = vmatprep.subr.bf16.mxu0 0
  %806 = vmatpush1.bf16.msra.mxu0 0
  %807 = vmatprep.subr.bf16.mxu0 0
  %808 = vmatpush1.bf16.msra.mxu0 0
  %809 = vmatprep.subr.bf16.mxu0 0
  %810 = vmatpush1.bf16.msra.mxu0 0
  %811 = vmatprep.subr.bf16.mxu0 0
  %812 = vmatpush1.bf16.msra.mxu0 0
  %813 = vmatprep.subr.bf16.mxu0 0
  %814 = vmatpush1.bf16.msra.mxu0 0
  %815 = vmatprep.subr.bf16.mxu0 0
  %816 = vmatpush1.bf16.msra.mxu0 0
  %817 = vmatprep.subr.bf16.mxu0 0
  %818 = vmatpush1.bf16.msra.mxu0 0
  %819 = vmatprep.subr.bf16.mxu0 0
  %820 = vmatpush1.bf16.msra.mxu0 0
  %821 = vmatprep.subr.bf16.mxu0 0
  %822 = vmatpush1.bf16.msra.mxu0 0
  %823 = vmatprep.subr.bf16.mxu0 0
  %824 = vmatpush1.bf16.msra.mxu0 0
  %825 = vmatprep.subr.bf16.mxu0 0
  %826 = vmatpush1.bf16.msra.mxu0 0
  %827 = vmatprep.subr.bf16.mxu0 0
  %828 = vmatpush1.bf16.msra.mxu0 0
  %829 = vmatprep.mubr.bf16.mxu0 0
  %830 = vmatmul.mubr.bf16.gmra.mrb[0].mxu0 %v795
  %v831 = vpop.f32.mrb[0].mxu0
  %v832 = vadd.f32 0.0, %v831
  %v833 = vpop.f32.mrb[0].mxu0
  %v834 = vpop.f32.mrb[0].mxu0
  %v835 = vpop.f32.mrb[0].mxu0
  %836 = vdwg.mxu0
  %v837 = vadd.f32 %v789, %v832
  %v838 = vxor.u32 %v837, 2147483648
  %v839 = vmul.f32 %v838, 1.442695
  %v840 = vpow.pop %v839
  %v841 = vadd.f32 %v840, 1.0
  %v842 = vrcp.pop %v841
  %v843 = vmul.f32 1.0, %v842
  %v844 = vtanh.pop %v837
  %v845 = vmul.f32 %v843, %v775
  %847 = vrot.lane.b32.xlu0 %v844, 64
  %v848 = vpop.permute.xlu0 %847
  %v850 = vmul.f32 %v843, %v848
  %852 = vrot.lane.b32.xlu0 %v850, 32
  %v853 = vpop.permute.xlu0 %852
  %v855 = vadd.f32 %v845, %v853
  %v856 = vtanh.pop %v855
  %858 = vrot.lane.b32.xlu0 %v856, 64
  %v859 = vpop.permute.xlu0 %858
  %v861 = vmul.f32 %v843, %v859
  %863 = vrot.lane.b32.xlu0 %v861, 32
  %v864 = vpop.permute.xlu0 %863
  %s866 = scalar_lea.vmem [#allocation3], 24
  %867 = vst.msk [vmem:[%s866] sm:$0xff] %vm74, %v864
  %s868 = scalar_lea.vmem [#allocation2], 32
  %v869 = vld [vmem:[%s868] sm:$0xff]
  %v870 = vpack.c.bf16 %v861, %v861
  %872 = vrot.lane.b32.xlu0 %v870, 32
  %v873 = vpop.permute.xlu0 %872
  %v875 = vsel %vm74, %v873, 0
  %877 = vmatprep.subr.bf16.mxu0 0
  %878 = vmatpush1.bf16.msra.mxu0 %v551
  %879 = vmatprep.subr.bf16.mxu0 0
  %880 = vmatpush1.bf16.msra.mxu0 %v552
  %881 = vmatprep.subr.bf16.mxu0 0
  %882 = vmatpush1.bf16.msra.mxu0 0
  %883 = vmatprep.subr.bf16.mxu0 0
  %884 = vmatpush1.bf16.msra.mxu0 0
  %885 = vmatprep.subr.bf16.mxu0 0
  %886 = vmatpush1.bf16.msra.mxu0 0
  %887 = vmatprep.subr.bf16.mxu0 0
  %888 = vmatpush1.bf16.msra.mxu0 0
  %889 = vmatprep.subr.bf16.mxu0 0
  %890 = vmatpush1.bf16.msra.mxu0 0
  %891 = vmatprep.subr.bf16.mxu0 0
  %892 = vmatpush1.bf16.msra.mxu0 0
  %893 = vmatprep.subr.bf16.mxu0 0
  %894 = vmatpush1.bf16.msra.mxu0 0
  %895 = vmatprep.subr.bf16.mxu0 0
  %896 = vmatpush1.bf16.msra.mxu0 0
  %897 = vmatprep.subr.bf16.mxu0 0
  %898 = vmatpush1.bf16.msra.mxu0 0
  %899 = vmatprep.subr.bf16.mxu0 0
  %900 = vmatpush1.bf16.msra.mxu0 0
  %901 = vmatprep.subr.bf16.mxu0 0
  %902 = vmatpush1.bf16.msra.mxu0 0
  %903 = vmatprep.subr.bf16.mxu0 0
  %904 = vmatpush1.bf16.msra.mxu0 0
  %905 = vmatprep.subr.bf16.mxu0 0
  %906 = vmatpush1.bf16.msra.mxu0 0
  %907 = vmatprep.subr.bf16.mxu0 0
  %908 = vmatpush1.bf16.msra.mxu0 0
  %909 = vmatprep.mubr.bf16.mxu0 0
  %910 = vmatmul.mubr.bf16.gmra.mrb[0].mxu0 %v875
  %v911 = vpop.f32.mrb[0].mxu0
  %v912 = vadd.f32 0.0, %v911
  %v913 = vpop.f32.mrb[0].mxu0
  %v914 = vpop.f32.mrb[0].mxu0
  %v915 = vpop.f32.mrb[0].mxu0
  %916 = vdwg.mxu0
  %v917 = vadd.f32 %v869, %v912
  %v918 = vxor.u32 %v917, 2147483648
  %v919 = vmul.f32 %v918, 1.442695
  %v920 = vpow.pop %v919
  %v921 = vadd.f32 %v920, 1.0
  %v922 = vrcp.pop %v921
  %v923 = vmul.f32 1.0, %v922
  %v924 = vtanh.pop %v917
  %v925 = vmul.f32 %v923, %v855
  %927 = vrot.lane.b32.xlu0 %v924, 64
  %v928 = vpop.permute.xlu0 %927
  %v930 = vmul.f32 %v923, %v928
  %932 = vrot.lane.b32.xlu0 %v930, 32
  %v933 = vpop.permute.xlu0 %932
  %v935 = vadd.f32 %v925, %v933
  %v936 = vtanh.pop %v935
  %938 = vrot.lane.b32.xlu0 %v936, 64
  %v939 = vpop.permute.xlu0 %938
  %v941 = vmul.f32 %v923, %v939
  %943 = vrot.lane.b32.xlu0 %v941, 32
  %v944 = vpop.permute.xlu0 %943
  %s946 = scalar_lea.vmem [#allocation3], 32
  %947 = vst.msk [vmem:[%s946] sm:$0xff] %vm74, %v944
  %s948 = scalar_lea.vmem [#allocation2], 40
  %v949 = vld [vmem:[%s948] sm:$0xff]
  %v950 = vpack.c.bf16 %v941, %v941
  %952 = vrot.lane.b32.xlu0 %v950, 32
  %v953 = vpop.permute.xlu0 %952
  %v955 = vsel %vm74, %v953, 0
  %957 = vmatprep.subr.bf16.mxu0 0
  %958 = vmatpush1.bf16.msra.mxu0 %v551
  %959 = vmatprep.subr.bf16.mxu0 0
  %960 = vmatpush1.bf16.msra.mxu0 %v552
  %961 = vmatprep.subr.bf16.mxu0 0
  %962 = vmatpush1.bf16.msra.mxu0 0
  %963 = vmatprep.subr.bf16.mxu0 0
  %964 = vmatpush1.bf16.msra.mxu0 0
  %965 = vmatprep.subr.bf16.mxu0 0
  %966 = vmatpush1.bf16.msra.mxu0 0
  %967 = vmatprep.subr.bf16.mxu0 0
  %968 = vmatpush1.bf16.msra.mxu0 0
  %969 = vmatprep.subr.bf16.mxu0 0
  %970 = vmatpush1.bf16.msra.mxu0 0
  %971 = vmatprep.subr.bf16.mxu0 0
  %972 = vmatpush1.bf16.msra.mxu0 0
  %973 = vmatprep.subr.bf16.mxu0 0
  %974 = vmatpush1.bf16.msra.mxu0 0
  %975 = vmatprep.subr.bf16.mxu0 0
  %976 = vmatpush1.bf16.msra.mxu0 0
  %977 = vmatprep.subr.bf16.mxu0 0
  %978 = vmatpush1.bf16.msra.mxu0 0
  %979 = vmatprep.subr.bf16.mxu0 0
  %980 = vmatpush1.bf16.msra.mxu0 0
  %981 = vmatprep.subr.bf16.mxu0 0
  %982 = vmatpush1.bf16.msra.mxu0 0
  %983 = vmatprep.subr.bf16.mxu0 0
  %984 = vmatpush1.bf16.msra.mxu0 0
  %985 = vmatprep.subr.bf16.mxu0 0
  %986 = vmatpush1.bf16.msra.mxu0 0
  %987 = vmatprep.subr.bf16.mxu0 0
  %988 = vmatpush1.bf16.msra.mxu0 0
  %989 = vmatprep.mubr.bf16.mxu0 0
  %990 = vmatmul.mubr.bf16.gmra.mrb[0].mxu0 %v955
  %v991 = vpop.f32.mrb[0].mxu0
  %v992 = vadd.f32 0.0, %v991
  %v993 = vpop.f32.mrb[0].mxu0
  %v994 = vpop.f32.mrb[0].mxu0
  %v995 = vpop.f32.mrb[0].mxu0
  %996 = vdwg.mxu0
  %v997 = vadd.f32 %v949, %v992
  %v998 = vxor.u32 %v997, 2147483648
  %v999 = vmul.f32 %v998, 1.442695
  %v1000 = vpow.pop %v999
  %v1001 = vadd.f32 %v1000, 1.0
  %v1002 = vrcp.pop %v1001
  %v1003 = vmul.f32 1.0, %v1002
  %v1004 = vtanh.pop %v997
  %v1005 = vmul.f32 %v1003, %v935
  %1007 = vrot.lane.b32.xlu0 %v1004, 64
  %v1008 = vpop.permute.xlu0 %1007
  %v1010 = vmul.f32 %v1003, %v1008
  %1012 = vrot.lane.b32.xlu0 %v1010, 32
  %v1013 = vpop.permute.xlu0 %1012
  %v1015 = vadd.f32 %v1005, %v1013
  %v1016 = vtanh.pop %v1015
  %1018 = vrot.lane.b32.xlu0 %v1016, 64
  %v1019 = vpop.permute.xlu0 %1018
  %v1021 = vmul.f32 %v1003, %v1019
  %1023 = vrot.lane.b32.xlu0 %v1021, 32
  %v1024 = vpop.permute.xlu0 %1023
  %s1026 = scalar_lea.vmem [#allocation3], 40
  %1027 = vst.msk [vmem:[%s1026] sm:$0xff] %vm74, %v1024
  %s1028 = scalar_lea.vmem [#allocation2], 48
  %v1029 = vld [vmem:[%s1028] sm:$0xff]
  %v1030 = vpack.c.bf16 %v1021, %v1021
  %1032 = vrot.lane.b32.xlu0 %v1030, 32
  %v1033 = vpop.permute.xlu0 %1032
  %v1035 = vsel %vm74, %v1033, 0
  %1037 = vmatprep.subr.bf16.mxu0 0
  %1038 = vmatpush1.bf16.msra.mxu0 %v551
  %1039 = vmatprep.subr.bf16.mxu0 0
  %1040 = vmatpush1.bf16.msra.mxu0 %v552
  %1041 = vmatprep.subr.bf16.mxu0 0
  %1042 = vmatpush1.bf16.msra.mxu0 0
  %1043 = vmatprep.subr.bf16.mxu0 0
  %1044 = vmatpush1.bf16.msra.mxu0 0
  %1045 = vmatprep.subr.bf16.mxu0 0
  %1046 = vmatpush1.bf16.msra.mxu0 0
  %1047 = vmatprep.subr.bf16.mxu0 0
  %1048 = vmatpush1.bf16.msra.mxu0 0
  %1049 = vmatprep.subr.bf16.mxu0 0
  %1050 = vmatpush1.bf16.msra.mxu0 0
  %1051 = vmatprep.subr.bf16.mxu0 0
  %1052 = vmatpush1.bf16.msra.mxu0 0
  %1053 = vmatprep.subr.bf16.mxu0 0
  %1054 = vmatpush1.bf16.msra.mxu0 0
  %1055 = vmatprep.subr.bf16.mxu0 0
  %1056 = vmatpush1.bf16.msra.mxu0 0
  %1057 = vmatprep.subr.bf16.mxu0 0
  %1058 = vmatpush1.bf16.msra.mxu0 0
  %1059 = vmatprep.subr.bf16.mxu0 0
  %1060 = vmatpush1.bf16.msra.mxu0 0
  %1061 = vmatprep.subr.bf16.mxu0 0
  %1062 = vmatpush1.bf16.msra.mxu0 0
  %1063 = vmatprep.subr.bf16.mxu0 0
  %1064 = vmatpush1.bf16.msra.mxu0 0
  %1065 = vmatprep.subr.bf16.mxu0 0
  %1066 = vmatpush1.bf16.msra.mxu0 0
  %1067 = vmatprep.subr.bf16.mxu0 0
  %1068 = vmatpush1.bf16.msra.mxu0 0
  %1069 = vmatprep.mubr.bf16.mxu0 0
  %1070 = vmatmul.mubr.bf16.gmra.mrb[0].mxu0 %v1035
  %v1071 = vpop.f32.mrb[0].mxu0
  %v1072 = vadd.f32 0.0, %v1071
  %v1073 = vpop.f32.mrb[0].mxu0
  %v1074 = vpop.f32.mrb[0].mxu0
  %v1075 = vpop.f32.mrb[0].mxu0
  %1076 = vdwg.mxu0
  %v1077 = vadd.f32 %v1029, %v1072
  %v1078 = vxor.u32 %v1077, 2147483648
  %v1079 = vmul.f32 %v1078, 1.442695
  %v1080 = vpow.pop %v1079
  %v1081 = vadd.f32 %v1080, 1.0
  %v1082 = vrcp.pop %v1081
  %v1083 = vmul.f32 1.0, %v1082
  %v1084 = vtanh.pop %v1077
  %v1085 = vmul.f32 %v1083, %v1015
  %1087 = vrot.lane.b32.xlu0 %v1084, 64
  %v1088 = vpop.permute.xlu0 %1087
  %v1090 = vmul.f32 %v1083, %v1088
  %1092 = vrot.lane.b32.xlu0 %v1090, 32
  %v1093 = vpop.permute.xlu0 %1092
  %v1095 = vadd.f32 %v1085, %v1093
  %v1096 = vtanh.pop %v1095
  %1098 = vrot.lane.b32.xlu0 %v1096, 64
  %v1099 = vpop.permute.xlu0 %1098
  %v1101 = vmul.f32 %v1083, %v1099
  %1103 = vrot.lane.b32.xlu0 %v1101, 32
  %v1104 = vpop.permute.xlu0 %1103
  %s1106 = scalar_lea.vmem [#allocation3], 48
  %1107 = vst.msk [vmem:[%s1106] sm:$0xff] %vm74, %v1104
  %s1108 = scalar_lea.vmem [#allocation2], 56
  %v1109 = vld [vmem:[%s1108] sm:$0xff]
  %v1110 = vpack.c.bf16 %v1101, %v1101
  %1112 = vrot.lane.b32.xlu0 %v1110, 32
  %v1113 = vpop.permute.xlu0 %1112
  %v1115 = vsel %vm74, %v1113, 0
  %1117 = vmatprep.subr.bf16.mxu0 0
  %1118 = vmatpush1.bf16.msra.mxu0 %v551
  %1119 = vmatprep.subr.bf16.mxu0 0
  %1120 = vmatpush1.bf16.msra.mxu0 %v552
  %1121 = vmatprep.subr.bf16.mxu0 0
  %1122 = vmatpush1.bf16.msra.mxu0 0
  %1123 = vmatprep.subr.bf16.mxu0 0
  %1124 = vmatpush1.bf16.msra.mxu0 0
  %1125 = vmatprep.subr.bf16.mxu0 0
  %1126 = vmatpush1.bf16.msra.mxu0 0
  %1127 = vmatprep.subr.bf16.mxu0 0
  %1128 = vmatpush1.bf16.msra.mxu0 0
  %1129 = vmatprep.subr.bf16.mxu0 0
  %1130 = vmatpush1.bf16.msra.mxu0 0
  %1131 = vmatprep.subr.bf16.mxu0 0
  %1132 = vmatpush1.bf16.msra.mxu0 0
  %1133 = vmatprep.subr.bf16.mxu0 0
  %1134 = vmatpush1.bf16.msra.mxu0 0
  %1135 = vmatprep.subr.bf16.mxu0 0
  %1136 = vmatpush1.bf16.msra.mxu0 0
  %1137 = vmatprep.subr.bf16.mxu0 0
  %1138 = vmatpush1.bf16.msra.mxu0 0
  %1139 = vmatprep.subr.bf16.mxu0 0
  %1140 = vmatpush1.bf16.msra.mxu0 0
  %1141 = vmatprep.subr.bf16.mxu0 0
  %1142 = vmatpush1.bf16.msra.mxu0 0
  %1143 = vmatprep.subr.bf16.mxu0 0
  %1144 = vmatpush1.bf16.msra.mxu0 0
  %1145 = vmatprep.subr.bf16.mxu0 0
  %1146 = vmatpush1.bf16.msra.mxu0 0
  %1147 = vmatprep.subr.bf16.mxu0 0
  %1148 = vmatpush1.bf16.msra.mxu0 0
  %1149 = vmatprep.mubr.bf16.mxu0 0
  %1150 = vmatmul.mubr.bf16.gmra.mrb[0].mxu0 %v1115
  %v1151 = vpop.f32.mrb[0].mxu0
  %v1152 = vadd.f32 0.0, %v1151
  %v1153 = vpop.f32.mrb[0].mxu0
  %v1154 = vpop.f32.mrb[0].mxu0
  %v1155 = vpop.f32.mrb[0].mxu0
  %1156 = vdwg.mxu0
  %v1157 = vadd.f32 %v1109, %v1152
  %v1158 = vxor.u32 %v1157, 2147483648
  %v1159 = vmul.f32 %v1158, 1.442695
  %v1160 = vpow.pop %v1159
  %v1161 = vadd.f32 %v1160, 1.0
  %v1162 = vrcp.pop %v1161
  %v1163 = vmul.f32 1.0, %v1162
  %v1164 = vtanh.pop %v1157
  %v1165 = vmul.f32 %v1163, %v1095
  %1167 = vrot.lane.b32.xlu0 %v1164, 64
  %v1168 = vpop.permute.xlu0 %1167
  %v1170 = vmul.f32 %v1163, %v1168
  %1172 = vrot.lane.b32.xlu0 %v1170, 32
  %v1173 = vpop.permute.xlu0 %1172
  %v1175 = vadd.f32 %v1165, %v1173
  %v1176 = vtanh.pop %v1175
  %1178 = vrot.lane.b32.xlu0 %v1176, 64
  %v1179 = vpop.permute.xlu0 %1178
  %v1181 = vmul.f32 %v1163, %v1179
  %1183 = vrot.lane.b32.xlu0 %v1181, 32
  %v1184 = vpop.permute.xlu0 %1183
  %s1186 = scalar_lea.vmem [#allocation3], 56
  %1187 = vst.msk [vmem:[%s1186] sm:$0xff] %vm74, %v1184
  %v1188 = vld [vmem:[#allocation3] sm:$0xff]
  %v1189 = vld [vmem:[#allocation3 + $0x8] sm:$0xff]
  %v1190 = vld [vmem:[#allocation3 + $0x10] sm:$0xff]
  %v1191 = vld [vmem:[#allocation3 + $0x18] sm:$0xff]
  %v1192 = vld [vmem:[#allocation3 + $0x20] sm:$0xff]
  %v1193 = vld [vmem:[#allocation3 + $0x28] sm:$0xff]
  %v1194 = vld [vmem:[#allocation3 + $0x30] sm:$0xff]
  %v1195 = vld [vmem:[#allocation3 + $0x38] sm:$0xff]
  %v1196 = vpack.c.bf16 %v1189, %v1188
  %v1197 = vpack.c.bf16 %v1191, %v1190
  %v1198 = vpack.c.bf16 %v1193, %v1192
  %v1199 = vpack.c.bf16 %v1195, %v1194
  %v1200 = vld [vmem:[%s9] sm:$0xf]
  %v1201 = vld [vmem:[%s9 + $0x4] sm:$0xf]
  %v1202 = vld [vmem:[%s9 + $0x8] sm:$0xf]
  %v1203 = vld [vmem:[%s9 + $0xc] sm:$0xf]
  %v1204 = vld [vmem:[%s10] sm:$0x1]
  %v1206 = vlaneseq
  %v1207 = vshrl.u32 %v1206, 7
  %v1208 = vsub.s32 0, %v1207
  %v1209 = vrot.slane %v1204, %v1208
  %v1215 = vunpack.c.l.b16 %v1200
  %v1216 = vunpack.c.l.b16 %v1201
  %v1217 = vunpack.c.l.b16 %v1202
  %v1218 = vunpack.c.l.b16 %v1203
  %v1219 = vpack.c.b16 %v1216, %v1215
  %v1220 = vpack.c.b16 %v1218, %v1217
  %v1224 = vsel %vm74, %v1196, 0
  %v1227 = vsel %vm74, %v1197, 0
  %v1230 = vsel %vm74, %v1198, 0
  %v1233 = vsel %vm74, %v1199, 0
  %1235 = vmatprep.subr.bf16.mxu0 0
  %1236 = vmatpush1.bf16.msra.mxu0 %v1219
  %1237 = vmatprep.subr.bf16.mxu0 0
  %1238 = vmatpush1.bf16.msra.mxu0 %v1220
  %1239 = vmatprep.subr.bf16.mxu0 0
  %1240 = vmatpush1.bf16.msra.mxu0 0
  %1241 = vmatprep.subr.bf16.mxu0 0
  %1242 = vmatpush1.bf16.msra.mxu0 0
  %1243 = vmatprep.subr.bf16.mxu0 0
  %1244 = vmatpush1.bf16.msra.mxu0 0
  %1245 = vmatprep.subr.bf16.mxu0 0
  %1246 = vmatpush1.bf16.msra.mxu0 0
  %1247 = vmatprep.subr.bf16.mxu0 0
  %1248 = vmatpush1.bf16.msra.mxu0 0
  %1249 = vmatprep.subr.bf16.mxu0 0
  %1250 = vmatpush1.bf16.msra.mxu0 0
  %1251 = vmatprep.subr.bf16.mxu0 0
  %1252 = vmatpush1.bf16.msra.mxu0 0
  %1253 = vmatprep.subr.bf16.mxu0 0
  %1254 = vmatpush1.bf16.msra.mxu0 0
  %1255 = vmatprep.subr.bf16.mxu0 0
  %1256 = vmatpush1.bf16.msra.mxu0 0
  %1257 = vmatprep.subr.bf16.mxu0 0
  %1258 = vmatpush1.bf16.msra.mxu0 0
  %1259 = vmatprep.subr.bf16.mxu0 0
  %1260 = vmatpush1.bf16.msra.mxu0 0
  %1261 = vmatprep.subr.bf16.mxu0 0
  %1262 = vmatpush1.bf16.msra.mxu0 0
  %1263 = vmatprep.subr.bf16.mxu0 0
  %1264 = vmatpush1.bf16.msra.mxu0 0
  %1265 = vmatprep.subr.bf16.mxu0 0
  %1266 = vmatpush1.bf16.msra.mxu0 0
  %1267 = vmatprep.mubr.bf16.mxu0 0
  %1268 = vmatmul.mubr.bf16.gmra.mrb[0].mxu0 %v1224
  %v1269 = vpop.f32.mrb[0].mxu0
  %v1270 = vadd.f32 %v1209, %v1269
  %v1271 = vpop.f32.mrb[0].mxu0
  %v1272 = vpop.f32.mrb[0].mxu0
  %v1273 = vadd.f32 %v1209, %v1272
  %v1274 = vpop.f32.mrb[0].mxu0
  %1275 = vmatprep.mubr.bf16.mxu0 0
  %1276 = vmatmul.mubr.bf16.gmra.mrb[0].mxu0 %v1227
  %v1277 = vpop.f32.mrb[0].mxu0
  %v1278 = vadd.f32 %v1209, %v1277
  %v1279 = vpop.f32.mrb[0].mxu0
  %v1280 = vpop.f32.mrb[0].mxu0
  %v1281 = vadd.f32 %v1209, %v1280
  %v1282 = vpop.f32.mrb[0].mxu0
  %1283 = vmatprep.mubr.bf16.mxu0 0
  %1284 = vmatmul.mubr.bf16.gmra.mrb[0].mxu0 %v1230
  %v1285 = vpop.f32.mrb[0].mxu0
  %v1286 = vadd.f32 %v1209, %v1285
  %v1287 = vpop.f32.mrb[0].mxu0
  %v1288 = vpop.f32.mrb[0].mxu0
  %v1289 = vadd.f32 %v1209, %v1288
  %v1290 = vpop.f32.mrb[0].mxu0
  %1291 = vmatprep.mubr.bf16.mxu0 0
  %1292 = vmatmul.mubr.bf16.gmra.mrb[0].mxu0 %v1233
  %v1293 = vpop.f32.mrb[0].mxu0
  %v1294 = vadd.f32 %v1209, %v1293
  %v1295 = vpop.f32.mrb[0].mxu0
  %v1296 = vpop.f32.mrb[0].mxu0
  %v1297 = vadd.f32 %v1209, %v1296
  %v1298 = vpop.f32.mrb[0].mxu0
  %1299 = vdwg.mxu0
  %1300 = vst [vmem:[%s11] sm:$0xff] %v1270
  %1301 = vst [vmem:[%s11 + $0x8] sm:$0xff] %v1273
  %1302 = vst [vmem:[%s11 + $0x10] sm:$0xff] %v1278
  %1303 = vst [vmem:[%s11 + $0x18] sm:$0xff] %v1281
  %1304 = vst [vmem:[%s11 + $0x20] sm:$0xff] %v1286
  %1305 = vst [vmem:[%s11 + $0x28] sm:$0xff] %v1289
  %1306 = vst [vmem:[%s11 + $0x30] sm:$0xff] %v1294
  %1307 = vst [vmem:[%s11 + $0x38] sm:$0xff] %v1297
  // Predicated region
  $region46: #{_forward_impl.3} parent=0 // pred_check
    _
  $region47: #{_forward_impl.3} parent=0 // pred_check_branch
    %1309 = sbr.rel (0) target = $region49
  $region48: #{_forward_impl.3} parent=0 // pred_region
    _
  $region49: #{_forward_impl.3} parent=0 // pred_fallthru
    _
  // Predicated region
  $region50: #{_forward_impl.3} parent=0 // pred_check
    _
  $region51: #{_forward_impl.3} parent=0 // pred_check_branch
    %1311 = sbr.rel (0) target = $region53
  $region52: #{_forward_impl.3} parent=0 // pred_region
    _
  $region53: #{_forward_impl.3} parent=0 // pred_fallthru
    _

// kernel: _forward_impl.2
$region0: #{_forward_impl.2}
  #allocation0 [shape = 'u32[]', space=smem, size = 0x4, offset = 0x4, fixed_abs, tag = 'smem constant byte address 0x4 - core index']
  #allocation1 [shape = 'u32[144,128]{1,0:T(1,128)}', space=vmem, size = 0x12000, scoped, tag = 'internal scratch']
  #allocation2 [shape = 'f32[24,8,128]{2,1,0:T(8,128)}', space=vmem, size = 0x18000, scoped, tag = 'scratch operand']
  %s0 = inlined_call_operand.vmem [shape: f32[24,8,32], index: 0, kind: input, shape index: {}]
  %s1 = inlined_call_operand.vmem [shape: f32[24,8,1], index: 1, kind: input, shape index: {}]
  %s2 = inlined_call_operand.vmem [shape: bf16[32,128], index: 2, kind: input, shape index: {}]
  %s3 = inlined_call_operand.vmem [shape: bf16[32,128], index: 3, kind: input, shape index: {}]
  %s4 = inlined_call_operand.vmem [shape: f32[24,8,32], index: 4, kind: output, shape index: {}]
  %s5 = sld [smem:[#allocation0]]
  $region26: #{_forward_impl.2} parent=0
    _
  %s7 = ssub.s32 1, %s5
  %s8 = scalar_select 0, %s7, %s5
  // Predicated region
  $region2: #{_forward_impl.2} parent=0 // pred_check
    _
  $region3: #{_forward_impl.2} parent=0 // pred_check_branch
    %10 = sbr.rel (0) target = $region5
  $region4: #{_forward_impl.2} parent=0 // pred_region
    _
  $region5: #{_forward_impl.2} parent=0 // pred_fallthru
    _
  // Predicated region
  $region6: #{_forward_impl.2} parent=0 // pred_check
    _
  $region7: #{_forward_impl.2} parent=0 // pred_check_branch
    %12 = sbr.rel (0) target = $region9
  $region8: #{_forward_impl.2} parent=0 // pred_region
    _
  $region9: #{_forward_impl.2} parent=0 // pred_fallthru
    _
  // Predicated region
  $region10: #{_forward_impl.2} parent=0 // pred_check
    _
  $region11: #{_forward_impl.2} parent=0 // pred_check_branch
    %14 = sbr.rel (0) target = $region13
  $region12: #{_forward_impl.2} parent=0 // pred_region
    _
  $region13: #{_forward_impl.2} parent=0 // pred_fallthru
    _
  // Predicated region
  $region14: #{_forward_impl.2} parent=0 // pred_check
    _
  $region15: #{_forward_impl.2} parent=0 // pred_check_branch
    %16 = sbr.rel (0) target = $region17
  $region16: #{_forward_impl.2} parent=0 // pred_region
    _
  $region17: #{_forward_impl.2} parent=0 // pred_fallthru
    _
  %v18 = vld [vmem:[%s0] sm:$0xff]
  %v19 = vld [vmem:[%s0 + $0x8] sm:$0xff]
  %v20 = vld [vmem:[%s0 + $0x10] sm:$0xff]
  %v21 = vld [vmem:[%s0 + $0x18] sm:$0xff]
  %v22 = vld [vmem:[%s0 + $0x20] sm:$0xff]
  %v23 = vld [vmem:[%s0 + $0x28] sm:$0xff]
  %v24 = vld [vmem:[%s0 + $0x30] sm:$0xff]
  %v25 = vld [vmem:[%s0 + $0x38] sm:$0xff]
  %v26 = vld [vmem:[%s0 + $0x40] sm:$0xff]
  %v27 = vld [vmem:[%s0 + $0x48] sm:$0xff]
  %v28 = vld [vmem:[%s0 + $0x50] sm:$0xff]
  %v29 = vld [vmem:[%s0 + $0x58] sm:$0xff]
  %v30 = vld [vmem:[%s0 + $0x60] sm:$0xff]
  %v31 = vld [vmem:[%s0 + $0x68] sm:$0xff]
  %v32 = vld [vmem:[%s0 + $0x70] sm:$0xff]
  %v33 = vld [vmem:[%s0 + $0x78] sm:$0xff]
  %v34 = vld [vmem:[%s0 + $0x80] sm:$0xff]
  %v35 = vld [vmem:[%s0 + $0x88] sm:$0xff]
  %v36 = vld [vmem:[%s0 + $0x90] sm:$0xff]
  %v37 = vld [vmem:[%s0 + $0x98] sm:$0xff]
  %v38 = vld [vmem:[%s0 + $0xa0] sm:$0xff]
  %v39 = vld [vmem:[%s0 + $0xa8] sm:$0xff]
  %v40 = vld [vmem:[%s0 + $0xb0] sm:$0xff]
  %v41 = vld [vmem:[%s0 + $0xb8] sm:$0xff]
  %v42 = vpack.c.bf16 %v19, %v18
  %v43 = vpack.c.bf16 %v21, %v20
  %v44 = vpack.c.bf16 %v23, %v22
  %v45 = vpack.c.bf16 %v25, %v24
  %v46 = vpack.c.bf16 %v27, %v26
  %v47 = vpack.c.bf16 %v29, %v28
  %v48 = vpack.c.bf16 %v31, %v30
  %v49 = vpack.c.bf16 %v33, %v32
  %v50 = vpack.c.bf16 %v35, %v34
  %v51 = vpack.c.bf16 %v37, %v36
  %v52 = vpack.c.bf16 %v39, %v38
  %v53 = vpack.c.bf16 %v41, %v40
  %v54 = vld [vmem:[%s2] sm:$0xf]
  %v55 = vld [vmem:[%s2 + $0x4] sm:$0xf]
  %v56 = vld [vmem:[%s2 + $0x8] sm:$0xf]
  %v57 = vld [vmem:[%s2 + $0xc] sm:$0xf]
  %v62 = vunpack.c.l.b16 %v54
  %v63 = vunpack.c.l.b16 %v55
  %v64 = vunpack.c.l.b16 %v56
  %v65 = vunpack.c.l.b16 %v57
  %v66 = vpack.c.b16 %v63, %v62
  %v67 = vpack.c.b16 %v65, %v64
  %vm70 = vcmask 261120
  %v72 = vsel %vm70, %v42, 0
  %v75 = vsel %vm70, %v43, 0
  %v78 = vsel %vm70, %v44, 0
  %v81 = vsel %vm70, %v45, 0
  %v84 = vsel %vm70, %v46, 0
  %v87 = vsel %vm70, %v47, 0
  %v90 = vsel %vm70, %v48, 0
  %v93 = vsel %vm70, %v49, 0
  %v96 = vsel %vm70, %v50, 0
  %v99 = vsel %vm70, %v51, 0
  %v102 = vsel %vm70, %v52, 0
  %v105 = vsel %vm70, %v53, 0
  %107 = vmatprep.subr.bf16.mxu0 0
  %108 = vmatpush1.bf16.msra.mxu0 %v66
  %109 = vmatprep.subr.bf16.mxu0 0
  %110 = vmatpush1.bf16.msra.mxu0 %v67
  %111 = vmatprep.subr.bf16.mxu0 0
  %112 = vmatpush1.bf16.msra.mxu0 0
  %113 = vmatprep.subr.bf16.mxu0 0
  %114 = vmatpush1.bf16.msra.mxu0 0
  %115 = vmatprep.subr.bf16.mxu0 0
  %116 = vmatpush1.bf16.msra.mxu0 0
  %117 = vmatprep.subr.bf16.mxu0 0
  %118 = vmatpush1.bf16.msra.mxu0 0
  %119 = vmatprep.subr.bf16.mxu0 0
  %120 = vmatpush1.bf16.msra.mxu0 0
  %121 = vmatprep.subr.bf16.mxu0 0
  %122 = vmatpush1.bf16.msra.mxu0 0
  %123 = vmatprep.subr.bf16.mxu0 0
  %124 = vmatpush1.bf16.msra.mxu0 0
  %125 = vmatprep.subr.bf16.mxu0 0
  %126 = vmatpush1.bf16.msra.mxu0 0
  %127 = vmatprep.subr.bf16.mxu0 0
  %128 = vmatpush1.bf16.msra.mxu0 0
  %129 = vmatprep.subr.bf16.mxu0 0
  %130 = vmatpush1.bf16.msra.mxu0 0
  %131 = vmatprep.subr.bf16.mxu0 0
  %132 = vmatpush1.bf16.msra.mxu0 0
  %133 = vmatprep.subr.bf16.mxu0 0
  %134 = vmatpush1.bf16.msra.mxu0 0
  %135 = vmatprep.subr.bf16.mxu0 0
  %136 = vmatpush1.bf16.msra.mxu0 0
  %137 = vmatprep.subr.bf16.mxu0 0
  %138 = vmatpush1.bf16.msra.mxu0 0
  %139 = vmatprep.mubr.bf16.mxu0 0
  %140 = vmatmul.mubr.bf16.gmra.mrb[0].mxu0 %v72
  %v141 = vpop.f32.mrb[0].mxu0
  %v142 = vadd.f32 0.0, %v141
  %v143 = vpop.f32.mrb[0].mxu0
  %v144 = vpop.f32.mrb[0].mxu0
  %v145 = vadd.f32 0.0, %v144
  %v146 = vpop.f32.mrb[0].mxu0
  %147 = vmatprep.mubr.bf16.mxu0 0
  %148 = vmatmul.mubr.bf16.gmra.mrb[0].mxu0 %v75
  %v149 = vpop.f32.mrb[0].mxu0
  %v150 = vadd.f32 0.0, %v149
  %v151 = vpop.f32.mrb[0].mxu0
  %v152 = vpop.f32.mrb[0].mxu0
  %v153 = vadd.f32 0.0, %v152
  %v154 = vpop.f32.mrb[0].mxu0
  %155 = vmatprep.mubr.bf16.mxu0 0
  %156 = vmatmul.mubr.bf16.gmra.mrb[0].mxu0 %v78
  %v157 = vpop.f32.mrb[0].mxu0
  %v158 = vadd.f32 0.0, %v157
  %v159 = vpop.f32.mrb[0].mxu0
  %v160 = vpop.f32.mrb[0].mxu0
  %v161 = vadd.f32 0.0, %v160
  %v162 = vpop.f32.mrb[0].mxu0
  %163 = vmatprep.mubr.bf16.mxu0 0
  %164 = vmatmul.mubr.bf16.gmra.mrb[0].mxu0 %v81
  %v165 = vpop.f32.mrb[0].mxu0
  %v166 = vadd.f32 0.0, %v165
  %v167 = vpop.f32.mrb[0].mxu0
  %v168 = vpop.f32.mrb[0].mxu0
  %v169 = vadd.f32 0.0, %v168
  %v170 = vpop.f32.mrb[0].mxu0
  %171 = vmatprep.mubr.bf16.mxu0 0
  %172 = vmatmul.mubr.bf16.gmra.mrb[0].mxu0 %v84
  %v173 = vpop.f32.mrb[0].mxu0
  %v174 = vadd.f32 0.0, %v173
  %v175 = vpop.f32.mrb[0].mxu0
  %v176 = vpop.f32.mrb[0].mxu0
  %v177 = vadd.f32 0.0, %v176
  %v178 = vpop.f32.mrb[0].mxu0
  %179 = vmatprep.mubr.bf16.mxu0 0
  %180 = vmatmul.mubr.bf16.gmra.mrb[0].mxu0 %v87
  %v181 = vpop.f32.mrb[0].mxu0
  %v182 = vadd.f32 0.0, %v181
  %v183 = vpop.f32.mrb[0].mxu0
  %v184 = vpop.f32.mrb[0].mxu0
  %v185 = vadd.f32 0.0, %v184
  %v186 = vpop.f32.mrb[0].mxu0
  %187 = vmatprep.mubr.bf16.mxu0 0
  %188 = vmatmul.mubr.bf16.gmra.mrb[0].mxu0 %v90
  %v189 = vpop.f32.mrb[0].mxu0
  %v190 = vadd.f32 0.0, %v189
  %v191 = vpop.f32.mrb[0].mxu0
  %v192 = vpop.f32.mrb[0].mxu0
  %v193 = vadd.f32 0.0, %v192
  %v194 = vpop.f32.mrb[0].mxu0
  %195 = vmatprep.mubr.bf16.mxu0 0
  %196 = vmatmul.mubr.bf16.gmra.mrb[0].mxu0 %v93
  %v197 = vpop.f32.mrb[0].mxu0
  %v198 = vadd.f32 0.0, %v197
  %v199 = vpop.f32.mrb[0].mxu0
  %v200 = vpop.f32.mrb[0].mxu0
  %v201 = vadd.f32 0.0, %v200
  %v202 = vpop.f32.mrb[0].mxu0
  %203 = vmatprep.mubr.bf16.mxu0 0
  %204 = vmatmul.mubr.bf16.gmra.mrb[0].mxu0 %v96
  %v205 = vpop.f32.mrb[0].mxu0
  %v206 = vadd.f32 0.0, %v205
  %v207 = vpop.f32.mrb[0].mxu0
  %v208 = vpop.f32.mrb[0].mxu0
  %v209 = vadd.f32 0.0, %v208
  %v210 = vpop.f32.mrb[0].mxu0
  %211 = vmatprep.mubr.bf16.mxu0 0
  %212 = vmatmul.mubr.bf16.gmra.mrb[0].mxu0 %v99
  %v213 = vpop.f32.mrb[0].mxu0
  %v214 = vadd.f32 0.0, %v213
  %v215 = vpop.f32.mrb[0].mxu0
  %v216 = vpop.f32.mrb[0].mxu0
  %v217 = vadd.f32 0.0, %v216
  %v218 = vpop.f32.mrb[0].mxu0
  %219 = vmatprep.mubr.bf16.mxu0 0
  %220 = vmatmul.mubr.bf16.gmra.mrb[0].mxu0 %v102
  %v221 = vpop.f32.mrb[0].mxu0
  %v222 = vadd.f32 0.0, %v221
  %v223 = vpop.f32.mrb[0].mxu0
  %v224 = vpop.f32.mrb[0].mxu0
  %v225 = vadd.f32 0.0, %v224
  %v226 = vpop.f32.mrb[0].mxu0
  %227 = vmatprep.mubr.bf16.mxu0 0
  %228 = vmatmul.mubr.bf16.gmra.mrb[0].mxu0 %v105
  %v229 = vpop.f32.mrb[0].mxu0
  %v230 = vadd.f32 0.0, %v229
  %v231 = vpop.f32.mrb[0].mxu0
  %v232 = vpop.f32.mrb[0].mxu0
  %v233 = vadd.f32 0.0, %v232
  %v234 = vpop.f32.mrb[0].mxu0
  %235 = vdwg.mxu0
  %236 = vst [vmem:[#allocation2] sm:$0xff] %v142
  %237 = vst [vmem:[#allocation2 + $0x8] sm:$0xff] %v145
  %238 = vst [vmem:[#allocation2 + $0x10] sm:$0xff] %v150
  %239 = vst [vmem:[#allocation2 + $0x18] sm:$0xff] %v153
  %240 = vst [vmem:[#allocation2 + $0x20] sm:$0xff] %v158
  %241 = vst [vmem:[#allocation2 + $0x28] sm:$0xff] %v161
  %242 = vst [vmem:[#allocation2 + $0x30] sm:$0xff] %v166
  %243 = vst [vmem:[#allocation2 + $0x38] sm:$0xff] %v169
  %244 = vst [vmem:[#allocation2 + $0x40] sm:$0xff] %v174
  %245 = vst [vmem:[#allocation2 + $0x48] sm:$0xff] %v177
  %246 = vst [vmem:[#allocation2 + $0x50] sm:$0xff] %v182
  %247 = vst [vmem:[#allocation2 + $0x58] sm:$0xff] %v185
  %248 = vst [vmem:[#allocation2 + $0x60] sm:$0xff] %v190
  %249 = vst [vmem:[#allocation2 + $0x68] sm:$0xff] %v193
  %250 = vst [vmem:[#allocation2 + $0x70] sm:$0xff] %v198
  %251 = vst [vmem:[#allocation2 + $0x78] sm:$0xff] %v201
  %252 = vst [vmem:[#allocation2 + $0x80] sm:$0xff] %v206
  %253 = vst [vmem:[#allocation2 + $0x88] sm:$0xff] %v209
  %254 = vst [vmem:[#allocation2 + $0x90] sm:$0xff] %v214
  %255 = vst [vmem:[#allocation2 + $0x98] sm:$0xff] %v217
  %256 = vst [vmem:[#allocation2 + $0xa0] sm:$0xff] %v222
  %257 = vst [vmem:[#allocation2 + $0xa8] sm:$0xff] %v225
  %258 = vst [vmem:[#allocation2 + $0xb0] sm:$0xff] %v230
  %259 = vst [vmem:[#allocation2 + $0xb8] sm:$0xff] %v233
  %v260 = vld [vmem:[%s3] sm:$0xf]
  %v261 = vld [vmem:[%s3 + $0x4] sm:$0xf]
  %v262 = vld [vmem:[%s3 + $0x8] sm:$0xf]
  %v263 = vld [vmem:[%s3 + $0xc] sm:$0xf]
  %v264 = vld [vmem:[#allocation2] sm:$0xff]
  %v269 = vunpack.c.l.b16 %v260
  %v270 = vunpack.c.l.b16 %v261
  %v271 = vunpack.c.l.b16 %v262
  %v272 = vunpack.c.l.b16 %v263
  %v273 = vpack.c.b16 %v270, %v269
  %v274 = vpack.c.b16 %v272, %v271
  %v278 = vsel %vm70, 0, 0
  %280 = vmatprep.subr.bf16.mxu0 0
  %281 = vmatpush1.bf16.msra.mxu0 %v273
  %282 = vmatprep.subr.bf16.mxu0 0
  %283 = vmatpush1.bf16.msra.mxu0 %v274
  %284 = vmatprep.subr.bf16.mxu0 0
  %285 = vmatpush1.bf16.msra.mxu0 0
  %286 = vmatprep.subr.bf16.mxu0 0
  %287 = vmatpush1.bf16.msra.mxu0 0
  %288 = vmatprep.subr.bf16.mxu0 0
  %289 = vmatpush1.bf16.msra.mxu0 0
  %290 = vmatprep.subr.bf16.mxu0 0
  %291 = vmatpush1.bf16.msra.mxu0 0
  %292 = vmatprep.subr.bf16.mxu0 0
  %293 = vmatpush1.bf16.msra.mxu0 0
  %294 = vmatprep.subr.bf16.mxu0 0
  %295 = vmatpush1.bf16.msra.mxu0 0
  %296 = vmatprep.subr.bf16.mxu0 0
  %297 = vmatpush1.bf16.msra.mxu0 0
  %298 = vmatprep.subr.bf16.mxu0 0
  %299 = vmatpush1.bf16.msra.mxu0 0
  %300 = vmatprep.subr.bf16.mxu0 0
  %301 = vmatpush1.bf16.msra.mxu0 0
  %302 = vmatprep.subr.bf16.mxu0 0
  %303 = vmatpush1.bf16.msra.mxu0 0
  %304 = vmatprep.subr.bf16.mxu0 0
  %305 = vmatpush1.bf16.msra.mxu0 0
  %306 = vmatprep.subr.bf16.mxu0 0
  %307 = vmatpush1.bf16.msra.mxu0 0
  %308 = vmatprep.subr.bf16.mxu0 0
  %309 = vmatpush1.bf16.msra.mxu0 0
  %310 = vmatprep.subr.bf16.mxu0 0
  %311 = vmatpush1.bf16.msra.mxu0 0
  %312 = vmatprep.mubr.bf16.mxu0 0
  %313 = vmatmul.mubr.bf16.gmra.mrb[0].mxu0 %v278
  %v314 = vpop.f32.mrb[0].mxu0
  %v315 = vadd.f32 0.0, %v314
  %v316 = vpop.f32.mrb[0].mxu0
  %v317 = vpop.f32.mrb[0].mxu0
  %v318 = vpop.f32.mrb[0].mxu0
  %319 = vdwg.mxu0
  %v320 = vadd.f32 %v264, %v315
  %v321 = vxor.u32 %v320, 2147483648
  %v322 = vmul.f32 %v321, 1.442695
  %v323 = vpow.pop %v322
  %v324 = vadd.f32 %v323, 1.0
  %v325 = vrcp.pop %v324
  %v326 = vmul.f32 1.0, %v325
  %v327 = vtanh.pop %v320
  %v328 = vmul.f32 %v326, 0.0
  %330 = vrot.lane.b32.xlu0 %v327, 64
  %v331 = vpop.permute.xlu0 %330
  %v333 = vmul.f32 %v326, %v331
  %335 = vrot.lane.b32.xlu0 %v333, 32
  %v336 = vpop.permute.xlu0 %335
  %v338 = vadd.f32 %v328, %v336
  %v339 = vtanh.pop %v338
  %341 = vrot.lane.b32.xlu0 %v339, 64
  %v342 = vpop.permute.xlu0 %341
  %v344 = vmul.f32 %v326, %v342
  %v345 = vld [vmem:[%s1] sm:$0xff]
  %347 = vset.pattern.permute.xlu0 0
  %348 = vperm.xlu0 %347, %v345
  %v349 = vpop.permute.xlu0 %348
  %v351 = vmul.f32 %v349, %v344
  %353 = vrot.lane.b32.xlu0 %v351, 32
  %v354 = vpop.permute.xlu0 %353
  %356 = vst.msk [vmem:[%s4] sm:$0xff] %vm70, %v354
  %s357 = scalar_lea.vmem [#allocation2], 8
  %v358 = vld [vmem:[%s357] sm:$0xff]
  %v359 = vpack.c.bf16 %v344, %v344
  %361 = vrot.lane.b32.xlu0 %v359, 32
  %v362 = vpop.permute.xlu0 %361
  %v364 = vsel %vm70, %v362, 0
  %366 = vmatprep.subr.bf16.mxu0 0
  %367 = vmatpush1.bf16.msra.mxu0 %v273
  %368 = vmatprep.subr.bf16.mxu0 0
  %369 = vmatpush1.bf16.msra.mxu0 %v274
  %370 = vmatprep.subr.bf16.mxu0 0
  %371 = vmatpush1.bf16.msra.mxu0 0
  %372 = vmatprep.subr.bf16.mxu0 0
  %373 = vmatpush1.bf16.msra.mxu0 0
  %374 = vmatprep.subr.bf16.mxu0 0
  %375 = vmatpush1.bf16.msra.mxu0 0
  %376 = vmatprep.subr.bf16.mxu0 0
  %377 = vmatpush1.bf16.msra.mxu0 0
  %378 = vmatprep.subr.bf16.mxu0 0
  %379 = vmatpush1.bf16.msra.mxu0 0
  %380 = vmatprep.subr.bf16.mxu0 0
  %381 = vmatpush1.bf16.msra.mxu0 0
  %382 = vmatprep.subr.bf16.mxu0 0
  %383 = vmatpush1.bf16.msra.mxu0 0
  %384 = vmatprep.subr.bf16.mxu0 0
  %385 = vmatpush1.bf16.msra.mxu0 0
  %386 = vmatprep.subr.bf16.mxu0 0
  %387 = vmatpush1.bf16.msra.mxu0 0
  %388 = vmatprep.subr.bf16.mxu0 0
  %389 = vmatpush1.bf16.msra.mxu0 0
  %390 = vmatprep.subr.bf16.mxu0 0
  %391 = vmatpush1.bf16.msra.mxu0 0
  %392 = vmatprep.subr.bf16.mxu0 0
  %393 = vmatpush1.bf16.msra.mxu0 0
  %394 = vmatprep.subr.bf16.mxu0 0
  %395 = vmatpush1.bf16.msra.mxu0 0
  %396 = vmatprep.subr.bf16.mxu0 0
  %397 = vmatpush1.bf16.msra.mxu0 0
  %398 = vmatprep.mubr.bf16.mxu0 0
  %399 = vmatmul.mubr.bf16.gmra.mrb[0].mxu0 %v364
  %v400 = vpop.f32.mrb[0].mxu0
  %v401 = vadd.f32 0.0, %v400
  %v402 = vpop.f32.mrb[0].mxu0
  %v403 = vpop.f32.mrb[0].mxu0
  %v404 = vpop.f32.mrb[0].mxu0
  %405 = vdwg.mxu0
  %v406 = vadd.f32 %v358, %v401
  %v407 = vxor.u32 %v406, 2147483648
  %v408 = vmul.f32 %v407, 1.442695
  %v409 = vpow.pop %v408
  %v410 = vadd.f32 %v409, 1.0
  %v411 = vrcp.pop %v410
  %v412 = vmul.f32 1.0, %v411
  %v413 = vtanh.pop %v406
  %v414 = vmul.f32 %v412, %v338
  %416 = vrot.lane.b32.xlu0 %v413, 64
  %v417 = vpop.permute.xlu0 %416
  %v419 = vmul.f32 %v412, %v417
  %421 = vrot.lane.b32.xlu0 %v419, 32
  %v422 = vpop.permute.xlu0 %421
  %v424 = vadd.f32 %v414, %v422
  %v425 = vtanh.pop %v424
  %427 = vrot.lane.b32.xlu0 %v425, 64
  %v428 = vpop.permute.xlu0 %427
  %v430 = vmul.f32 %v412, %v428
  %s431 = scalar_lea.vmem %s1, 8
  %v432 = vld [vmem:[%s431] sm:$0xff]
  %434 = vset.pattern.permute.xlu0 0
  %435 = vperm.xlu0 %434, %v432
  %v436 = vpop.permute.xlu0 %435
  %v438 = vmul.f32 %v436, %v430
  %440 = vrot.lane.b32.xlu0 %v438, 32
  %v441 = vpop.permute.xlu0 %440
  %s443 = scalar_lea.vmem %s4, 8
  %444 = vst.msk [vmem:[%s443] sm:$0xff] %vm70, %v441
  %s445 = scalar_lea.vmem [#allocation2], 16
  %v446 = vld [vmem:[%s445] sm:$0xff]
  %v447 = vpack.c.bf16 %v430, %v430
  %449 = vrot.lane.b32.xlu0 %v447, 32
  %v450 = vpop.permute.xlu0 %449
  %v452 = vsel %vm70, %v450, 0
  %454 = vmatprep.subr.bf16.mxu0 0
  %455 = vmatpush1.bf16.msra.mxu0 %v273
  %456 = vmatprep.subr.bf16.mxu0 0
  %457 = vmatpush1.bf16.msra.mxu0 %v274
  %458 = vmatprep.subr.bf16.mxu0 0
  %459 = vmatpush1.bf16.msra.mxu0 0
  %460 = vmatprep.subr.bf16.mxu0 0
  %461 = vmatpush1.bf16.msra.mxu0 0
  %462 = vmatprep.subr.bf16.mxu0 0
  %463 = vmatpush1.bf16.msra.mxu0 0
  %464 = vmatprep.subr.bf16.mxu0 0
  %465 = vmatpush1.bf16.msra.mxu0 0
  %466 = vmatprep.subr.bf16.mxu0 0
  %467 = vmatpush1.bf16.msra.mxu0 0
  %468 = vmatprep.subr.bf16.mxu0 0
  %469 = vmatpush1.bf16.msra.mxu0 0
  %470 = vmatprep.subr.bf16.mxu0 0
  %471 = vmatpush1.bf16.msra.mxu0 0
  %472 = vmatprep.subr.bf16.mxu0 0
  %473 = vmatpush1.bf16.msra.mxu0 0
  %474 = vmatprep.subr.bf16.mxu0 0
  %475 = vmatpush1.bf16.msra.mxu0 0
  %476 = vmatprep.subr.bf16.mxu0 0
  %477 = vmatpush1.bf16.msra.mxu0 0
  %478 = vmatprep.subr.bf16.mxu0 0
  %479 = vmatpush1.bf16.msra.mxu0 0
  %480 = vmatprep.subr.bf16.mxu0 0
  %481 = vmatpush1.bf16.msra.mxu0 0
  %482 = vmatprep.subr.bf16.mxu0 0
  %483 = vmatpush1.bf16.msra.mxu0 0
  %484 = vmatprep.subr.bf16.mxu0 0
  %485 = vmatpush1.bf16.msra.mxu0 0
  %486 = vmatprep.mubr.bf16.mxu0 0
  %487 = vmatmul.mubr.bf16.gmra.mrb[0].mxu0 %v452
  %v488 = vpop.f32.mrb[0].mxu0
  %v489 = vadd.f32 0.0, %v488
  %v490 = vpop.f32.mrb[0].mxu0
  %v491 = vpop.f32.mrb[0].mxu0
  %v492 = vpop.f32.mrb[0].mxu0
  %493 = vdwg.mxu0
  %v494 = vadd.f32 %v446, %v489
  %v495 = vxor.u32 %v494, 2147483648
  %v496 = vmul.f32 %v495, 1.442695
  %v497 = vpow.pop %v496
  %v498 = vadd.f32 %v497, 1.0
  %v499 = vrcp.pop %v498
  %v500 = vmul.f32 1.0, %v499
  %v501 = vtanh.pop %v494
  %v502 = vmul.f32 %v500, %v424
  %504 = vrot.lane.b32.xlu0 %v501, 64
  %v505 = vpop.permute.xlu0 %504
  %v507 = vmul.f32 %v500, %v505
  %509 = vrot.lane.b32.xlu0 %v507, 32
  %v510 = vpop.permute.xlu0 %509
  %v512 = vadd.f32 %v502, %v510
  %v513 = vtanh.pop %v512
  %515 = vrot.lane.b32.xlu0 %v513, 64
  %v516 = vpop.permute.xlu0 %515
  %v518 = vmul.f32 %v500, %v516
  %s519 = scalar_lea.vmem %s1, 16
  %v520 = vld [vmem:[%s519] sm:$0xff]
  %522 = vset.pattern.permute.xlu0 0
  %523 = vperm.xlu0 %522, %v520
  %v524 = vpop.permute.xlu0 %523
  %v526 = vmul.f32 %v524, %v518
  %528 = vrot.lane.b32.xlu0 %v526, 32
  %v529 = vpop.permute.xlu0 %528
  %s531 = scalar_lea.vmem %s4, 16
  %532 = vst.msk [vmem:[%s531] sm:$0xff] %vm70, %v529
  %s533 = scalar_lea.vmem [#allocation2], 24
  %v534 = vld [vmem:[%s533] sm:$0xff]
  %v535 = vpack.c.bf16 %v518, %v518
  %537 = vrot.lane.b32.xlu0 %v535, 32
  %v538 = vpop.permute.xlu0 %537
  %v540 = vsel %vm70, %v538, 0
  %542 = vmatprep.subr.bf16.mxu0 0
  %543 = vmatpush1.bf16.msra.mxu0 %v273
  %544 = vmatprep.subr.bf16.mxu0 0
  %545 = vmatpush1.bf16.msra.mxu0 %v274
  %546 = vmatprep.subr.bf16.mxu0 0
  %547 = vmatpush1.bf16.msra.mxu0 0
  %548 = vmatprep.subr.bf16.mxu0 0
  %549 = vmatpush1.bf16.msra.mxu0 0
  %550 = vmatprep.subr.bf16.mxu0 0
  %551 = vmatpush1.bf16.msra.mxu0 0
  %552 = vmatprep.subr.bf16.mxu0 0
  %553 = vmatpush1.bf16.msra.mxu0 0
  %554 = vmatprep.subr.bf16.mxu0 0
  %555 = vmatpush1.bf16.msra.mxu0 0
  %556 = vmatprep.subr.bf16.mxu0 0
  %557 = vmatpush1.bf16.msra.mxu0 0
  %558 = vmatprep.subr.bf16.mxu0 0
  %559 = vmatpush1.bf16.msra.mxu0 0
  %560 = vmatprep.subr.bf16.mxu0 0
  %561 = vmatpush1.bf16.msra.mxu0 0
  %562 = vmatprep.subr.bf16.mxu0 0
  %563 = vmatpush1.bf16.msra.mxu0 0
  %564 = vmatprep.subr.bf16.mxu0 0
  %565 = vmatpush1.bf16.msra.mxu0 0
  %566 = vmatprep.subr.bf16.mxu0 0
  %567 = vmatpush1.bf16.msra.mxu0 0
  %568 = vmatprep.subr.bf16.mxu0 0
  %569 = vmatpush1.bf16.msra.mxu0 0
  %570 = vmatprep.subr.bf16.mxu0 0
  %571 = vmatpush1.bf16.msra.mxu0 0
  %572 = vmatprep.subr.bf16.mxu0 0
  %573 = vmatpush1.bf16.msra.mxu0 0
  %574 = vmatprep.mubr.bf16.mxu0 0
  %575 = vmatmul.mubr.bf16.gmra.mrb[0].mxu0 %v540
  %v576 = vpop.f32.mrb[0].mxu0
  %v577 = vadd.f32 0.0, %v576
  %v578 = vpop.f32.mrb[0].mxu0
  %v579 = vpop.f32.mrb[0].mxu0
  %v580 = vpop.f32.mrb[0].mxu0
  %581 = vdwg.mxu0
  %v582 = vadd.f32 %v534, %v577
  %v583 = vxor.u32 %v582, 2147483648
  %v584 = vmul.f32 %v583, 1.442695
  %v585 = vpow.pop %v584
  %v586 = vadd.f32 %v585, 1.0
  %v587 = vrcp.pop %v586
  %v588 = vmul.f32 1.0, %v587
  %v589 = vtanh.pop %v582
  %v590 = vmul.f32 %v588, %v512
  %592 = vrot.lane.b32.xlu0 %v589, 64
  %v593 = vpop.permute.xlu0 %592
  %v595 = vmul.f32 %v588, %v593
  %597 = vrot.lane.b32.xlu0 %v595, 32
  %v598 = vpop.permute.xlu0 %597
  %v600 = vadd.f32 %v590, %v598
  %v601 = vtanh.pop %v600
  %603 = vrot.lane.b32.xlu0 %v601, 64
  %v604 = vpop.permute.xlu0 %603
  %v606 = vmul.f32 %v588, %v604
  %s607 = scalar_lea.vmem %s1, 24
  %v608 = vld [vmem:[%s607] sm:$0xff]
  %610 = vset.pattern.permute.xlu0 0
  %611 = vperm.xlu0 %610, %v608
  %v612 = vpop.permute.xlu0 %611
  %v614 = vmul.f32 %v612, %v606
  %616 = vrot.lane.b32.xlu0 %v614, 32
  %v617 = vpop.permute.xlu0 %616
  %s619 = scalar_lea.vmem %s4, 24
  %620 = vst.msk [vmem:[%s619] sm:$0xff] %vm70, %v617
  %s621 = scalar_lea.vmem [#allocation2], 32
  %v622 = vld [vmem:[%s621] sm:$0xff]
  %v623 = vpack.c.bf16 %v606, %v606
  %625 = vrot.lane.b32.xlu0 %v623, 32
  %v626 = vpop.permute.xlu0 %625
  %v628 = vsel %vm70, %v626, 0
  %630 = vmatprep.subr.bf16.mxu0 0
  %631 = vmatpush1.bf16.msra.mxu0 %v273
  %632 = vmatprep.subr.bf16.mxu0 0
  %633 = vmatpush1.bf16.msra.mxu0 %v274
  %634 = vmatprep.subr.bf16.mxu0 0
  %635 = vmatpush1.bf16.msra.mxu0 0
  %636 = vmatprep.subr.bf16.mxu0 0
  %637 = vmatpush1.bf16.msra.mxu0 0
  %638 = vmatprep.subr.bf16.mxu0 0
  %639 = vmatpush1.bf16.msra.mxu0 0
  %640 = vmatprep.subr.bf16.mxu0 0
  %641 = vmatpush1.bf16.msra.mxu0 0
  %642 = vmatprep.subr.bf16.mxu0 0
  %643 = vmatpush1.bf16.msra.mxu0 0
  %644 = vmatprep.subr.bf16.mxu0 0
  %645 = vmatpush1.bf16.msra.mxu0 0
  %646 = vmatprep.subr.bf16.mxu0 0
  %647 = vmatpush1.bf16.msra.mxu0 0
  %648 = vmatprep.subr.bf16.mxu0 0
  %649 = vmatpush1.bf16.msra.mxu0 0
  %650 = vmatprep.subr.bf16.mxu0 0
  %651 = vmatpush1.bf16.msra.mxu0 0
  %652 = vmatprep.subr.bf16.mxu0 0
  %653 = vmatpush1.bf16.msra.mxu0 0
  %654 = vmatprep.subr.bf16.mxu0 0
  %655 = vmatpush1.bf16.msra.mxu0 0
  %656 = vmatprep.subr.bf16.mxu0 0
  %657 = vmatpush1.bf16.msra.mxu0 0
  %658 = vmatprep.subr.bf16.mxu0 0
  %659 = vmatpush1.bf16.msra.mxu0 0
  %660 = vmatprep.subr.bf16.mxu0 0
  %661 = vmatpush1.bf16.msra.mxu0 0
  %662 = vmatprep.mubr.bf16.mxu0 0
  %663 = vmatmul.mubr.bf16.gmra.mrb[0].mxu0 %v628
  %v664 = vpop.f32.mrb[0].mxu0
  %v665 = vadd.f32 0.0, %v664
  %v666 = vpop.f32.mrb[0].mxu0
  %v667 = vpop.f32.mrb[0].mxu0
  %v668 = vpop.f32.mrb[0].mxu0
  %669 = vdwg.mxu0
  %v670 = vadd.f32 %v622, %v665
  %v671 = vxor.u32 %v670, 2147483648
  %v672 = vmul.f32 %v671, 1.442695
  %v673 = vpow.pop %v672
  %v674 = vadd.f32 %v673, 1.0
  %v675 = vrcp.pop %v674
  %v676 = vmul.f32 1.0, %v675
  %v677 = vtanh.pop %v670
  %v678 = vmul.f32 %v676, %v600
  %680 = vrot.lane.b32.xlu0 %v677, 64
  %v681 = vpop.permute.xlu0 %680
  %v683 = vmul.f32 %v676, %v681
  %685 = vrot.lane.b32.xlu0 %v683, 32
  %v686 = vpop.permute.xlu0 %685
  %v688 = vadd.f32 %v678, %v686
  %v689 = vtanh.pop %v688
  %691 = vrot.lane.b32.xlu0 %v689, 64
  %v692 = vpop.permute.xlu0 %691
  %v694 = vmul.f32 %v676, %v692
  %s695 = scalar_lea.vmem %s1, 32
  %v696 = vld [vmem:[%s695] sm:$0xff]
  %698 = vset.pattern.permute.xlu0 0
  %699 = vperm.xlu0 %698, %v696
  %v700 = vpop.permute.xlu0 %699
  %v702 = vmul.f32 %v700, %v694
  %704 = vrot.lane.b32.xlu0 %v702, 32
  %v705 = vpop.permute.xlu0 %704
  %s707 = scalar_lea.vmem %s4, 32
  %708 = vst.msk [vmem:[%s707] sm:$0xff] %vm70, %v705
  %s709 = scalar_lea.vmem [#allocation2], 40
  %v710 = vld [vmem:[%s709] sm:$0xff]
  %v711 = vpack.c.bf16 %v694, %v694
  %713 = vrot.lane.b32.xlu0 %v711, 32
  %v714 = vpop.permute.xlu0 %713
  %v716 = vsel %vm70, %v714, 0
  %718 = vmatprep.subr.bf16.mxu0 0
  %719 = vmatpush1.bf16.msra.mxu0 %v273
  %720 = vmatprep.subr.bf16.mxu0 0
  %721 = vmatpush1.bf16.msra.mxu0 %v274
  %722 = vmatprep.subr.bf16.mxu0 0
  %723 = vmatpush1.bf16.msra.mxu0 0
  %724 = vmatprep.subr.bf16.mxu0 0
  %725 = vmatpush1.bf16.msra.mxu0 0
  %726 = vmatprep.subr.bf16.mxu0 0
  %727 = vmatpush1.bf16.msra.mxu0 0
  %728 = vmatprep.subr.bf16.mxu0 0
  %729 = vmatpush1.bf16.msra.mxu0 0
  %730 = vmatprep.subr.bf16.mxu0 0
  %731 = vmatpush1.bf16.msra.mxu0 0
  %732 = vmatprep.subr.bf16.mxu0 0
  %733 = vmatpush1.bf16.msra.mxu0 0
  %734 = vmatprep.subr.bf16.mxu0 0
  %735 = vmatpush1.bf16.msra.mxu0 0
  %736 = vmatprep.subr.bf16.mxu0 0
  %737 = vmatpush1.bf16.msra.mxu0 0
  %738 = vmatprep.subr.bf16.mxu0 0
  %739 = vmatpush1.bf16.msra.mxu0 0
  %740 = vmatprep.subr.bf16.mxu0 0
  %741 = vmatpush1.bf16.msra.mxu0 0
  %742 = vmatprep.subr.bf16.mxu0 0
  %743 = vmatpush1.bf16.msra.mxu0 0
  %744 = vmatprep.subr.bf16.mxu0 0
  %745 = vmatpush1.bf16.msra.mxu0 0
  %746 = vmatprep.subr.bf16.mxu0 0
  %747 = vmatpush1.bf16.msra.mxu0 0
  %748 = vmatprep.subr.bf16.mxu0 0
  %749 = vmatpush1.bf16.msra.mxu0 0
  %750 = vmatprep.mubr.bf16.mxu0 0
  %751 = vmatmul.mubr.bf16.gmra.mrb[0].mxu0 %v716
  %v752 = vpop.f32.mrb[0].mxu0
  %v753 = vadd.f32 0.0, %v752
  %v754 = vpop.f32.mrb[0].mxu0
  %v755 = vpop.f32.mrb[0].mxu0
  %v756 = vpop.f32.mrb[0].mxu0
  %757 = vdwg.mxu0
  %v758 = vadd.f32 %v710, %v753
  %v759 = vxor.u32 %v758, 2147483648
  %v760 = vmul.f32 %v759, 1.442695
  %v761 = vpow.pop %v760
  %v762 = vadd.f32 %v761, 1.0
  %v763 = vrcp.pop %v762
  %v764 = vmul.f32 1.0, %v763
  %v765 = vtanh.pop %v758
  %v766 = vmul.f32 %v764, %v688
  %768 = vrot.lane.b32.xlu0 %v765, 64
  %v769 = vpop.permute.xlu0 %768
  %v771 = vmul.f32 %v764, %v769
  %773 = vrot.lane.b32.xlu0 %v771, 32
  %v774 = vpop.permute.xlu0 %773
  %v776 = vadd.f32 %v766, %v774
  %v777 = vtanh.pop %v776
  %779 = vrot.lane.b32.xlu0 %v777, 64
  %v780 = vpop.permute.xlu0 %779
  %v782 = vmul.f32 %v764, %v780
  %s783 = scalar_lea.vmem %s1, 40
  %v784 = vld [vmem:[%s783] sm:$0xff]
  %786 = vset.pattern.permute.xlu0 0
  %787 = vperm.xlu0 %786, %v784
  %v788 = vpop.permute.xlu0 %787
  %v790 = vmul.f32 %v788, %v782
  %792 = vrot.lane.b32.xlu0 %v790, 32
  %v793 = vpop.permute.xlu0 %792
  %s795 = scalar_lea.vmem %s4, 40
  %796 = vst.msk [vmem:[%s795] sm:$0xff] %vm70, %v793
  %s797 = scalar_lea.vmem [#allocation2], 48
  %v798 = vld [vmem:[%s797] sm:$0xff]
  %v799 = vpack.c.bf16 %v782, %v782
  %801 = vrot.lane.b32.xlu0 %v799, 32
  %v802 = vpop.permute.xlu0 %801
  %v804 = vsel %vm70, %v802, 0
  %806 = vmatprep.subr.bf16.mxu0 0
  %807 = vmatpush1.bf16.msra.mxu0 %v273
  %808 = vmatprep.subr.bf16.mxu0 0
  %809 = vmatpush1.bf16.msra.mxu0 %v274
  %810 = vmatprep.subr.bf16.mxu0 0
  %811 = vmatpush1.bf16.msra.mxu0 0
  %812 = vmatprep.subr.bf16.mxu0 0
  %813 = vmatpush1.bf16.msra.mxu0 0
  %814 = vmatprep.subr.bf16.mxu0 0
  %815 = vmatpush1.bf16.msra.mxu0 0
  %816 = vmatprep.subr.bf16.mxu0 0
  %817 = vmatpush1.bf16.msra.mxu0 0
  %818 = vmatprep.subr.bf16.mxu0 0
  %819 = vmatpush1.bf16.msra.mxu0 0
  %820 = vmatprep.subr.bf16.mxu0 0
  %821 = vmatpush1.bf16.msra.mxu0 0
  %822 = vmatprep.subr.bf16.mxu0 0
  %823 = vmatpush1.bf16.msra.mxu0 0
  %824 = vmatprep.subr.bf16.mxu0 0
  %825 = vmatpush1.bf16.msra.mxu0 0
  %826 = vmatprep.subr.bf16.mxu0 0
  %827 = vmatpush1.bf16.msra.mxu0 0
  %828 = vmatprep.subr.bf16.mxu0 0
  %829 = vmatpush1.bf16.msra.mxu0 0
  %830 = vmatprep.subr.bf16.mxu0 0
  %831 = vmatpush1.bf16.msra.mxu0 0
  %832 = vmatprep.subr.bf16.mxu0 0
  %833 = vmatpush1.bf16.msra.mxu0 0
  %834 = vmatprep.subr.bf16.mxu0 0
  %835 = vmatpush1.bf16.msra.mxu0 0
  %836 = vmatprep.subr.bf16.mxu0 0
  %837 = vmatpush1.bf16.msra.mxu0 0
  %838 = vmatprep.mubr.bf16.mxu0 0
  %839 = vmatmul.mubr.bf16.gmra.mrb[0].mxu0 %v804
  %v840 = vpop.f32.mrb[0].mxu0
  %v841 = vadd.f32 0.0, %v840
  %v842 = vpop.f32.mrb[0].mxu0
  %v843 = vpop.f32.mrb[0].mxu0
  %v844 = vpop.f32.mrb[0].mxu0
  %845 = vdwg.mxu0
  %v846 = vadd.f32 %v798, %v841
  %v847 = vxor.u32 %v846, 2147483648
  %v848 = vmul.f32 %v847, 1.442695
  %v849 = vpow.pop %v848
  %v850 = vadd.f32 %v849, 1.0
  %v851 = vrcp.pop %v850
  %v852 = vmul.f32 1.0, %v851
  %v853 = vtanh.pop %v846
  %v854 = vmul.f32 %v852, %v776
  %856 = vrot.lane.b32.xlu0 %v853, 64
  %v857 = vpop.permute.xlu0 %856
  %v859 = vmul.f32 %v852, %v857
  %861 = vrot.lane.b32.xlu0 %v859, 32
  %v862 = vpop.permute.xlu0 %861
  %v864 = vadd.f32 %v854, %v862
  %v865 = vtanh.pop %v864
  %867 = vrot.lane.b32.xlu0 %v865, 64
  %v868 = vpop.permute.xlu0 %867
  %v870 = vmul.f32 %v852, %v868
  %s871 = scalar_lea.vmem %s1, 48
  %v872 = vld [vmem:[%s871] sm:$0xff]
  %874 = vset.pattern.permute.xlu0 0
  %875 = vperm.xlu0 %874, %v872
  %v876 = vpop.permute.xlu0 %875
  %v878 = vmul.f32 %v876, %v870
  %880 = vrot.lane.b32.xlu0 %v878, 32
  %v881 = vpop.permute.xlu0 %880
  %s883 = scalar_lea.vmem %s4, 48
  %884 = vst.msk [vmem:[%s883] sm:$0xff] %vm70, %v881
  %s885 = scalar_lea.vmem [#allocation2], 56
  %v886 = vld [vmem:[%s885] sm:$0xff]
  %v887 = vpack.c.bf16 %v870, %v870
  %889 = vrot.lane.b32.xlu0 %v887, 32
  %v890 = vpop.permute.xlu0 %889
  %v892 = vsel %vm70, %v890, 0
  %894 = vmatprep.subr.bf16.mxu0 0
  %895 = vmatpush1.bf16.msra.mxu0 %v273
  %896 = vmatprep.subr.bf16.mxu0 0
  %897 = vmatpush1.bf16.msra.mxu0 %v274
  %898 = vmatprep.subr.bf16.mxu0 0
  %899 = vmatpush1.bf16.msra.mxu0 0
  %900 = vmatprep.subr.bf16.mxu0 0
  %901 = vmatpush1.bf16.msra.mxu0 0
  %902 = vmatprep.subr.bf16.mxu0 0
  %903 = vmatpush1.bf16.msra.mxu0 0
  %904 = vmatprep.subr.bf16.mxu0 0
  %905 = vmatpush1.bf16.msra.mxu0 0
  %906 = vmatprep.subr.bf16.mxu0 0
  %907 = vmatpush1.bf16.msra.mxu0 0
  %908 = vmatprep.subr.bf16.mxu0 0
  %909 = vmatpush1.bf16.msra.mxu0 0
  %910 = vmatprep.subr.bf16.mxu0 0
  %911 = vmatpush1.bf16.msra.mxu0 0
  %912 = vmatprep.subr.bf16.mxu0 0
  %913 = vmatpush1.bf16.msra.mxu0 0
  %914 = vmatprep.subr.bf16.mxu0 0
  %915 = vmatpush1.bf16.msra.mxu0 0
  %916 = vmatprep.subr.bf16.mxu0 0
  %917 = vmatpush1.bf16.msra.mxu0 0
  %918 = vmatprep.subr.bf16.mxu0 0
  %919 = vmatpush1.bf16.msra.mxu0 0
  %920 = vmatprep.subr.bf16.mxu0 0
  %921 = vmatpush1.bf16.msra.mxu0 0
  %922 = vmatprep.subr.bf16.mxu0 0
  %923 = vmatpush1.bf16.msra.mxu0 0
  %924 = vmatprep.subr.bf16.mxu0 0
  %925 = vmatpush1.bf16.msra.mxu0 0
  %926 = vmatprep.mubr.bf16.mxu0 0
  %927 = vmatmul.mubr.bf16.gmra.mrb[0].mxu0 %v892
  %v928 = vpop.f32.mrb[0].mxu0
  %v929 = vadd.f32 0.0, %v928
  %v930 = vpop.f32.mrb[0].mxu0
  %v931 = vpop.f32.mrb[0].mxu0
  %v932 = vpop.f32.mrb[0].mxu0
  %933 = vdwg.mxu0
  %v934 = vadd.f32 %v886, %v929
  %v935 = vxor.u32 %v934, 2147483648
  %v936 = vmul.f32 %v935, 1.442695
  %v937 = vpow.pop %v936
  %v938 = vadd.f32 %v937, 1.0
  %v939 = vrcp.pop %v938
  %v940 = vmul.f32 1.0, %v939
  %v941 = vtanh.pop %v934
  %v942 = vmul.f32 %v940, %v864
  %944 = vrot.lane.b32.xlu0 %v941, 64
  %v945 = vpop.permute.xlu0 %944
  %v947 = vmul.f32 %v940, %v945
  %949 = vrot.lane.b32.xlu0 %v947, 32
  %v950 = vpop.permute.xlu0 %949
  %v952 = vadd.f32 %v942, %v950
  %v953 = vtanh.pop %v952
  %955 = vrot.lane.b32.xlu0 %v953, 64
  %v956 = vpop.permute.xlu0 %955
  %v958 = vmul.f32 %v940, %v956
  %s959 = scalar_lea.vmem %s1, 56
  %v960 = vld [vmem:[%s959] sm:$0xff]
  %962 = vset.pattern.permute.xlu0 0
  %963 = vperm.xlu0 %962, %v960
  %v964 = vpop.permute.xlu0 %963
  %v966 = vmul.f32 %v964, %v958
  %968 = vrot.lane.b32.xlu0 %v966, 32
  %v969 = vpop.permute.xlu0 %968
  %s971 = scalar_lea.vmem %s4, 56
  %972 = vst.msk [vmem:[%s971] sm:$0xff] %vm70, %v969
  %s973 = scalar_lea.vmem [#allocation2], 64
  %v974 = vld [vmem:[%s973] sm:$0xff]
  %v975 = vpack.c.bf16 %v958, %v958
  %977 = vrot.lane.b32.xlu0 %v975, 32
  %v978 = vpop.permute.xlu0 %977
  %v980 = vsel %vm70, %v978, 0
  %982 = vmatprep.subr.bf16.mxu0 0
  %983 = vmatpush1.bf16.msra.mxu0 %v273
  %984 = vmatprep.subr.bf16.mxu0 0
  %985 = vmatpush1.bf16.msra.mxu0 %v274
  %986 = vmatprep.subr.bf16.mxu0 0
  %987 = vmatpush1.bf16.msra.mxu0 0
  %988 = vmatprep.subr.bf16.mxu0 0
  %989 = vmatpush1.bf16.msra.mxu0 0
  %990 = vmatprep.subr.bf16.mxu0 0
  %991 = vmatpush1.bf16.msra.mxu0 0
  %992 = vmatprep.subr.bf16.mxu0 0
  %993 = vmatpush1.bf16.msra.mxu0 0
  %994 = vmatprep.subr.bf16.mxu0 0
  %995 = vmatpush1.bf16.msra.mxu0 0
  %996 = vmatprep.subr.bf16.mxu0 0
  %997 = vmatpush1.bf16.msra.mxu0 0
  %998 = vmatprep.subr.bf16.mxu0 0
  %999 = vmatpush1.bf16.msra.mxu0 0
  %1000 = vmatprep.subr.bf16.mxu0 0
  %1001 = vmatpush1.bf16.msra.mxu0 0
  %1002 = vmatprep.subr.bf16.mxu0 0
  %1003 = vmatpush1.bf16.msra.mxu0 0
  %1004 = vmatprep.subr.bf16.mxu0 0
  %1005 = vmatpush1.bf16.msra.mxu0 0
  %1006 = vmatprep.subr.bf16.mxu0 0
  %1007 = vmatpush1.bf16.msra.mxu0 0
  %1008 = vmatprep.subr.bf16.mxu0 0
  %1009 = vmatpush1.bf16.msra.mxu0 0
  %1010 = vmatprep.subr.bf16.mxu0 0
  %1011 = vmatpush1.bf16.msra.mxu0 0
  %1012 = vmatprep.subr.bf16.mxu0 0
  %1013 = vmatpush1.bf16.msra.mxu0 0
  %1014 = vmatprep.mubr.bf16.mxu0 0
  %1015 = vmatmul.mubr.bf16.gmra.mrb[0].mxu0 %v980
  %v1016 = vpop.f32.mrb[0].mxu0
  %v1017 = vadd.f32 0.0, %v1016
  %v1018 = vpop.f32.mrb[0].mxu0
  %v1019 = vpop.f32.mrb[0].mxu0
  %v1020 = vpop.f32.mrb[0].mxu0
  %1021 = vdwg.mxu0
  %v1022 = vadd.f32 %v974, %v1017
  %v1023 = vxor.u32 %v1022, 2147483648
  %v1024 = vmul.f32 %v1023, 1.442695
  %v1025 = vpow.pop %v1024
  %v1026 = vadd.f32 %v1025, 1.0
  %v1027 = vrcp.pop %v1026
  %v1028 = vmul.f32 1.0, %v1027
  %v1029 = vtanh.pop %v1022
  %v1030 = vmul.f32 %v1028, %v952
  %1032 = vrot.lane.b32.xlu0 %v1029, 64
  %v1033 = vpop.permute.xlu0 %1032
  %v1035 = vmul.f32 %v1028, %v1033
  %1037 = vrot.lane.b32.xlu0 %v1035, 32
  %v1038 = vpop.permute.xlu0 %1037
  %v1040 = vadd.f32 %v1030, %v1038
  %v1041 = vtanh.pop %v1040
  %1043 = vrot.lane.b32.xlu0 %v1041, 64
  %v1044 = vpop.permute.xlu0 %1043
  %v1046 = vmul.f32 %v1028, %v1044
  %s1047 = scalar_lea.vmem %s1, 64
  %v1048 = vld [vmem:[%s1047] sm:$0xff]
  %1050 = vset.pattern.permute.xlu0 0
  %1051 = vperm.xlu0 %1050, %v1048
  %v1052 = vpop.permute.xlu0 %1051
  %v1054 = vmul.f32 %v1052, %v1046
  %1056 = vrot.lane.b32.xlu0 %v1054, 32
  %v1057 = vpop.permute.xlu0 %1056
  %s1059 = scalar_lea.vmem %s4, 64
  %1060 = vst.msk [vmem:[%s1059] sm:$0xff] %vm70, %v1057
  %s1061 = scalar_lea.vmem [#allocation2], 72
  %v1062 = vld [vmem:[%s1061] sm:$0xff]
  %v1063 = vpack.c.bf16 %v1046, %v1046
  %1065 = vrot.lane.b32.xlu0 %v1063, 32
  %v1066 = vpop.permute.xlu0 %1065
  %v1068 = vsel %vm70, %v1066, 0
  %1070 = vmatprep.subr.bf16.mxu0 0
  %1071 = vmatpush1.bf16.msra.mxu0 %v273
  %1072 = vmatprep.subr.bf16.mxu0 0
  %1073 = vmatpush1.bf16.msra.mxu0 %v274
  %1074 = vmatprep.subr.bf16.mxu0 0
  %1075 = vmatpush1.bf16.msra.mxu0 0
  %1076 = vmatprep.subr.bf16.mxu0 0
  %1077 = vmatpush1.bf16.msra.mxu0 0
  %1078 = vmatprep.subr.bf16.mxu0 0
  %1079 = vmatpush1.bf16.msra.mxu0 0
  %1080 = vmatprep.subr.bf16.mxu0 0
  %1081 = vmatpush1.bf16.msra.mxu0 0
  %1082 = vmatprep.subr.bf16.mxu0 0
  %1083 = vmatpush1.bf16.msra.mxu0 0
  %1084 = vmatprep.subr.bf16.mxu0 0
  %1085 = vmatpush1.bf16.msra.mxu0 0
  %1086 = vmatprep.subr.bf16.mxu0 0
  %1087 = vmatpush1.bf16.msra.mxu0 0
  %1088 = vmatprep.subr.bf16.mxu0 0
  %1089 = vmatpush1.bf16.msra.mxu0 0
  %1090 = vmatprep.subr.bf16.mxu0 0
  %1091 = vmatpush1.bf16.msra.mxu0 0
  %1092 = vmatprep.subr.bf16.mxu0 0
  %1093 = vmatpush1.bf16.msra.mxu0 0
  %1094 = vmatprep.subr.bf16.mxu0 0
  %1095 = vmatpush1.bf16.msra.mxu0 0
  %1096 = vmatprep.subr.bf16.mxu0 0
  %1097 = vmatpush1.bf16.msra.mxu0 0
  %1098 = vmatprep.subr.bf16.mxu0 0
  %1099 = vmatpush1.bf16.msra.mxu0 0
  %1100 = vmatprep.subr.bf16.mxu0 0
  %1101 = vmatpush1.bf16.msra.mxu0 0
  %1102 = vmatprep.mubr.bf16.mxu0 0
  %1103 = vmatmul.mubr.bf16.gmra.mrb[0].mxu0 %v1068
  %v1104 = vpop.f32.mrb[0].mxu0
  %v1105 = vadd.f32 0.0, %v1104
  %v1106 = vpop.f32.mrb[0].mxu0
  %v1107 = vpop.f32.mrb[0].mxu0
  %v1108 = vpop.f32.mrb[0].mxu0
  %1109 = vdwg.mxu0
  %v1110 = vadd.f32 %v1062, %v1105
  %v1111 = vxor.u32 %v1110, 2147483648
  %v1112 = vmul.f32 %v1111, 1.442695
  %v1113 = vpow.pop %v1112
  %v1114 = vadd.f32 %v1113, 1.0
  %v1115 = vrcp.pop %v1114
  %v1116 = vmul.f32 1.0, %v1115
  %v1117 = vtanh.pop %v1110
  %v1118 = vmul.f32 %v1116, %v1040
  %1120 = vrot.lane.b32.xlu0 %v1117, 64
  %v1121 = vpop.permute.xlu0 %1120
  %v1123 = vmul.f32 %v1116, %v1121
  %1125 = vrot.lane.b32.xlu0 %v1123, 32
  %v1126 = vpop.permute.xlu0 %1125
  %v1128 = vadd.f32 %v1118, %v1126
  %v1129 = vtanh.pop %v1128
  %1131 = vrot.lane.b32.xlu0 %v1129, 64
  %v1132 = vpop.permute.xlu0 %1131
  %v1134 = vmul.f32 %v1116, %v1132
  %s1135 = scalar_lea.vmem %s1, 72
  %v1136 = vld [vmem:[%s1135] sm:$0xff]
  %1138 = vset.pattern.permute.xlu0 0
  %1139 = vperm.xlu0 %1138, %v1136
  %v1140 = vpop.permute.xlu0 %1139
  %v1142 = vmul.f32 %v1140, %v1134
  %1144 = vrot.lane.b32.xlu0 %v1142, 32
  %v1145 = vpop.permute.xlu0 %1144
  %s1147 = scalar_lea.vmem %s4, 72
  %1148 = vst.msk [vmem:[%s1147] sm:$0xff] %vm70, %v1145
  %s1149 = scalar_lea.vmem [#allocation2], 80
  %v1150 = vld [vmem:[%s1149] sm:$0xff]
  %v1151 = vpack.c.bf16 %v1134, %v1134
  %1153 = vrot.lane.b32.xlu0 %v1151, 32
  %v1154 = vpop.permute.xlu0 %1153
  %v1156 = vsel %vm70, %v1154, 0
  %1158 = vmatprep.subr.bf16.mxu0 0
  %1159 = vmatpush1.bf16.msra.mxu0 %v273
  %1160 = vmatprep.subr.bf16.mxu0 0
  %1161 = vmatpush1.bf16.msra.mxu0 %v274
  %1162 = vmatprep.subr.bf16.mxu0 0
  %1163 = vmatpush1.bf16.msra.mxu0 0
  %1164 = vmatprep.subr.bf16.mxu0 0
  %1165 = vmatpush1.bf16.msra.mxu0 0
  %1166 = vmatprep.subr.bf16.mxu0 0
  %1167 = vmatpush1.bf16.msra.mxu0 0
  %1168 = vmatprep.subr.bf16.mxu0 0
  %1169 = vmatpush1.bf16.msra.mxu0 0
  %1170 = vmatprep.subr.bf16.mxu0 0
  %1171 = vmatpush1.bf16.msra.mxu0 0
  %1172 = vmatprep.subr.bf16.mxu0 0
  %1173 = vmatpush1.bf16.msra.mxu0 0
  %1174 = vmatprep.subr.bf16.mxu0 0
  %1175 = vmatpush1.bf16.msra.mxu0 0
  %1176 = vmatprep.subr.bf16.mxu0 0
  %1177 = vmatpush1.bf16.msra.mxu0 0
  %1178 = vmatprep.subr.bf16.mxu0 0
  %1179 = vmatpush1.bf16.msra.mxu0 0
  %1180 = vmatprep.subr.bf16.mxu0 0
  %1181 = vmatpush1.bf16.msra.mxu0 0
  %1182 = vmatprep.subr.bf16.mxu0 0
  %1183 = vmatpush1.bf16.msra.mxu0 0
  %1184 = vmatprep.subr.bf16.mxu0 0
  %1185 = vmatpush1.bf16.msra.mxu0 0
  %1186 = vmatprep.subr.bf16.mxu0 0
  %1187 = vmatpush1.bf16.msra.mxu0 0
  %1188 = vmatprep.subr.bf16.mxu0 0
  %1189 = vmatpush1.bf16.msra.mxu0 0
  %1190 = vmatprep.mubr.bf16.mxu0 0
  %1191 = vmatmul.mubr.bf16.gmra.mrb[0].mxu0 %v1156
  %v1192 = vpop.f32.mrb[0].mxu0
  %v1193 = vadd.f32 0.0, %v1192
  %v1194 = vpop.f32.mrb[0].mxu0
  %v1195 = vpop.f32.mrb[0].mxu0
  %v1196 = vpop.f32.mrb[0].mxu0
  %1197 = vdwg.mxu0
  %v1198 = vadd.f32 %v1150, %v1193
  %v1199 = vxor.u32 %v1198, 2147483648
  %v1200 = vmul.f32 %v1199, 1.442695
  %v1201 = vpow.pop %v1200
  %v1202 = vadd.f32 %v1201, 1.0
  %v1203 = vrcp.pop %v1202
  %v1204 = vmul.f32 1.0, %v1203
  %v1205 = vtanh.pop %v1198
  %v1206 = vmul.f32 %v1204, %v1128
  %1208 = vrot.lane.b32.xlu0 %v1205, 64
  %v1209 = vpop.permute.xlu0 %1208
  %v1211 = vmul.f32 %v1204, %v1209
  %1213 = vrot.lane.b32.xlu0 %v1211, 32
  %v1214 = vpop.permute.xlu0 %1213
  %v1216 = vadd.f32 %v1206, %v1214
  %v1217 = vtanh.pop %v1216
  %1219 = vrot.lane.b32.xlu0 %v1217, 64
  %v1220 = vpop.permute.xlu0 %1219
  %v1222 = vmul.f32 %v1204, %v1220
  %s1223 = scalar_lea.vmem %s1, 80
  %v1224 = vld [vmem:[%s1223] sm:$0xff]
  %1226 = vset.pattern.permute.xlu0 0
  %1227 = vperm.xlu0 %1226, %v1224
  %v1228 = vpop.permute.xlu0 %1227
  %v1230 = vmul.f32 %v1228, %v1222
  %1232 = vrot.lane.b32.xlu0 %v1230, 32
  %v1233 = vpop.permute.xlu0 %1232
  %s1235 = scalar_lea.vmem %s4, 80
  %1236 = vst.msk [vmem:[%s1235] sm:$0xff] %vm70, %v1233
  %s1237 = scalar_lea.vmem [#allocation2], 88
  %v1238 = vld [vmem:[%s1237] sm:$0xff]
  %v1239 = vpack.c.bf16 %v1222, %v1222
  %1241 = vrot.lane.b32.xlu0 %v1239, 32
  %v1242 = vpop.permute.xlu0 %1241
  %v1244 = vsel %vm70, %v1242, 0
  %1246 = vmatprep.subr.bf16.mxu0 0
  %1247 = vmatpush1.bf16.msra.mxu0 %v273
  %1248 = vmatprep.subr.bf16.mxu0 0
  %1249 = vmatpush1.bf16.msra.mxu0 %v274
  %1250 = vmatprep.subr.bf16.mxu0 0
  %1251 = vmatpush1.bf16.msra.mxu0 0
  %1252 = vmatprep.subr.bf16.mxu0 0
  %1253 = vmatpush1.bf16.msra.mxu0 0
  %1254 = vmatprep.subr.bf16.mxu0 0
  %1255 = vmatpush1.bf16.msra.mxu0 0
  %1256 = vmatprep.subr.bf16.mxu0 0
  %1257 = vmatpush1.bf16.msra.mxu0 0
  %1258 = vmatprep.subr.bf16.mxu0 0
  %1259 = vmatpush1.bf16.msra.mxu0 0
  %1260 = vmatprep.subr.bf16.mxu0 0
  %1261 = vmatpush1.bf16.msra.mxu0 0
  %1262 = vmatprep.subr.bf16.mxu0 0
  %1263 = vmatpush1.bf16.msra.mxu0 0
  %1264 = vmatprep.subr.bf16.mxu0 0
  %1265 = vmatpush1.bf16.msra.mxu0 0
  %1266 = vmatprep.subr.bf16.mxu0 0
  %1267 = vmatpush1.bf16.msra.mxu0 0
  %1268 = vmatprep.subr.bf16.mxu0 0
  %1269 = vmatpush1.bf16.msra.mxu0 0
  %1270 = vmatprep.subr.bf16.mxu0 0
  %1271 = vmatpush1.bf16.msra.mxu0 0
  %1272 = vmatprep.subr.bf16.mxu0 0
  %1273 = vmatpush1.bf16.msra.mxu0 0
  %1274 = vmatprep.subr.bf16.mxu0 0
  %1275 = vmatpush1.bf16.msra.mxu0 0
  %1276 = vmatprep.subr.bf16.mxu0 0
  %1277 = vmatpush1.bf16.msra.mxu0 0
  %1278 = vmatprep.mubr.bf16.mxu0 0
  %1279 = vmatmul.mubr.bf16.gmra.mrb[0].mxu0 %v1244
  %v1280 = vpop.f32.mrb[0].mxu0
  %v1281 = vadd.f32 0.0, %v1280
  %v1282 = vpop.f32.mrb[0].mxu0
  %v1283 = vpop.f32.mrb[0].mxu0
  %v1284 = vpop.f32.mrb[0].mxu0
  %1285 = vdwg.mxu0
  %v1286 = vadd.f32 %v1238, %v1281
  %v1287 = vxor.u32 %v1286, 2147483648
  %v1288 = vmul.f32 %v1287, 1.442695
  %v1289 = vpow.pop %v1288
  %v1290 = vadd.f32 %v1289, 1.0
  %v1291 = vrcp.pop %v1290
  %v1292 = vmul.f32 1.0, %v1291
  %v1293 = vtanh.pop %v1286
  %v1294 = vmul.f32 %v1292, %v1216
  %1296 = vrot.lane.b32.xlu0 %v1293, 64
  %v1297 = vpop.permute.xlu0 %1296
  %v1299 = vmul.f32 %v1292, %v1297
  %1301 = vrot.lane.b32.xlu0 %v1299, 32
  %v1302 = vpop.permute.xlu0 %1301
  %v1304 = vadd.f32 %v1294, %v1302
  %v1305 = vtanh.pop %v1304
  %1307 = vrot.lane.b32.xlu0 %v1305, 64
  %v1308 = vpop.permute.xlu0 %1307
  %v1310 = vmul.f32 %v1292, %v1308
  %s1311 = scalar_lea.vmem %s1, 88
  %v1312 = vld [vmem:[%s1311] sm:$0xff]
  %1314 = vset.pattern.permute.xlu0 0
  %1315 = vperm.xlu0 %1314, %v1312
  %v1316 = vpop.permute.xlu0 %1315
  %v1318 = vmul.f32 %v1316, %v1310
  %1320 = vrot.lane.b32.xlu0 %v1318, 32
  %v1321 = vpop.permute.xlu0 %1320
  %s1323 = scalar_lea.vmem %s4, 88
  %1324 = vst.msk [vmem:[%s1323] sm:$0xff] %vm70, %v1321
  %s1325 = scalar_lea.vmem [#allocation2], 96
  %v1326 = vld [vmem:[%s1325] sm:$0xff]
  %v1327 = vpack.c.bf16 %v1310, %v1310
  %1329 = vrot.lane.b32.xlu0 %v1327, 32
  %v1330 = vpop.permute.xlu0 %1329
  %v1332 = vsel %vm70, %v1330, 0
  %1334 = vmatprep.subr.bf16.mxu0 0
  %1335 = vmatpush1.bf16.msra.mxu0 %v273
  %1336 = vmatprep.subr.bf16.mxu0 0
  %1337 = vmatpush1.bf16.msra.mxu0 %v274
  %1338 = vmatprep.subr.bf16.mxu0 0
  %1339 = vmatpush1.bf16.msra.mxu0 0
  %1340 = vmatprep.subr.bf16.mxu0 0
  %1341 = vmatpush1.bf16.msra.mxu0 0
  %1342 = vmatprep.subr.bf16.mxu0 0
  %1343 = vmatpush1.bf16.msra.mxu0 0
  %1344 = vmatprep.subr.bf16.mxu0 0
  %1345 = vmatpush1.bf16.msra.mxu0 0
  %1346 = vmatprep.subr.bf16.mxu0 0
  %1347 = vmatpush1.bf16.msra.mxu0 0
  %1348 = vmatprep.subr.bf16.mxu0 0
  %1349 = vmatpush1.bf16.msra.mxu0 0
  %1350 = vmatprep.subr.bf16.mxu0 0
  %1351 = vmatpush1.bf16.msra.mxu0 0
  %1352 = vmatprep.subr.bf16.mxu0 0
  %1353 = vmatpush1.bf16.msra.mxu0 0
  %1354 = vmatprep.subr.bf16.mxu0 0
  %1355 = vmatpush1.bf16.msra.mxu0 0
  %1356 = vmatprep.subr.bf16.mxu0 0
  %1357 = vmatpush1.bf16.msra.mxu0 0
  %1358 = vmatprep.subr.bf16.mxu0 0
  %1359 = vmatpush1.bf16.msra.mxu0 0
  %1360 = vmatprep.subr.bf16.mxu0 0
  %1361 = vmatpush1.bf16.msra.mxu0 0
  %1362 = vmatprep.subr.bf16.mxu0 0
  %1363 = vmatpush1.bf16.msra.mxu0 0
  %1364 = vmatprep.subr.bf16.mxu0 0
  %1365 = vmatpush1.bf16.msra.mxu0 0
  %1366 = vmatprep.mubr.bf16.mxu0 0
  %1367 = vmatmul.mubr.bf16.gmra.mrb[0].mxu0 %v1332
  %v1368 = vpop.f32.mrb[0].mxu0
  %v1369 = vadd.f32 0.0, %v1368
  %v1370 = vpop.f32.mrb[0].mxu0
  %v1371 = vpop.f32.mrb[0].mxu0
  %v1372 = vpop.f32.mrb[0].mxu0
  %1373 = vdwg.mxu0
  %v1374 = vadd.f32 %v1326, %v1369
  %v1375 = vxor.u32 %v1374, 2147483648
  %v1376 = vmul.f32 %v1375, 1.442695
  %v1377 = vpow.pop %v1376
  %v1378 = vadd.f32 %v1377, 1.0
  %v1379 = vrcp.pop %v1378
  %v1380 = vmul.f32 1.0, %v1379
  %v1381 = vtanh.pop %v1374
  %v1382 = vmul.f32 %v1380, %v1304
  %1384 = vrot.lane.b32.xlu0 %v1381, 64
  %v1385 = vpop.permute.xlu0 %1384
  %v1387 = vmul.f32 %v1380, %v1385
  %1389 = vrot.lane.b32.xlu0 %v1387, 32
  %v1390 = vpop.permute.xlu0 %1389
  %v1392 = vadd.f32 %v1382, %v1390
  %v1393 = vtanh.pop %v1392
  %1395 = vrot.lane.b32.xlu0 %v1393, 64
  %v1396 = vpop.permute.xlu0 %1395
  %v1398 = vmul.f32 %v1380, %v1396
  %s1399 = scalar_lea.vmem %s1, 96
  %v1400 = vld [vmem:[%s1399] sm:$0xff]
  %1402 = vset.pattern.permute.xlu0 0
  %1403 = vperm.xlu0 %1402, %v1400
  %v1404 = vpop.permute.xlu0 %1403
  %v1406 = vmul.f32 %v1404, %v1398
  %1408 = vrot.lane.b32.xlu0 %v1406, 32
  %v1409 = vpop.permute.xlu0 %1408
  %s1411 = scalar_lea.vmem %s4, 96
  %1412 = vst.msk [vmem:[%s1411] sm:$0xff] %vm70, %v1409
  %s1413 = scalar_lea.vmem [#allocation2], 104
  %v1414 = vld [vmem:[%s1413] sm:$0xff]
  %v1415 = vpack.c.bf16 %v1398, %v1398
  %1417 = vrot.lane.b32.xlu0 %v1415, 32
  %v1418 = vpop.permute.xlu0 %1417
  %v1420 = vsel %vm70, %v1418, 0
  %1422 = vmatprep.subr.bf16.mxu0 0
  %1423 = vmatpush1.bf16.msra.mxu0 %v273
  %1424 = vmatprep.subr.bf16.mxu0 0
  %1425 = vmatpush1.bf16.msra.mxu0 %v274
  %1426 = vmatprep.subr.bf16.mxu0 0
  %1427 = vmatpush1.bf16.msra.mxu0 0
  %1428 = vmatprep.subr.bf16.mxu0 0
  %1429 = vmatpush1.bf16.msra.mxu0 0
  %1430 = vmatprep.subr.bf16.mxu0 0
  %1431 = vmatpush1.bf16.msra.mxu0 0
  %1432 = vmatprep.subr.bf16.mxu0 0
  %1433 = vmatpush1.bf16.msra.mxu0 0
  %1434 = vmatprep.subr.bf16.mxu0 0
  %1435 = vmatpush1.bf16.msra.mxu0 0
  %1436 = vmatprep.subr.bf16.mxu0 0
  %1437 = vmatpush1.bf16.msra.mxu0 0
  %1438 = vmatprep.subr.bf16.mxu0 0
  %1439 = vmatpush1.bf16.msra.mxu0 0
  %1440 = vmatprep.subr.bf16.mxu0 0
  %1441 = vmatpush1.bf16.msra.mxu0 0
  %1442 = vmatprep.subr.bf16.mxu0 0
  %1443 = vmatpush1.bf16.msra.mxu0 0
  %1444 = vmatprep.subr.bf16.mxu0 0
  %1445 = vmatpush1.bf16.msra.mxu0 0
  %1446 = vmatprep.subr.bf16.mxu0 0
  %1447 = vmatpush1.bf16.msra.mxu0 0
  %1448 = vmatprep.subr.bf16.mxu0 0
  %1449 = vmatpush1.bf16.msra.mxu0 0
  %1450 = vmatprep.subr.bf16.mxu0 0
  %1451 = vmatpush1.bf16.msra.mxu0 0
  %1452 = vmatprep.subr.bf16.mxu0 0
  %1453 = vmatpush1.bf16.msra.mxu0 0
  %1454 = vmatprep.mubr.bf16.mxu0 0
  %1455 = vmatmul.mubr.bf16.gmra.mrb[0].mxu0 %v1420
  %v1456 = vpop.f32.mrb[0].mxu0
  %v1457 = vadd.f32 0.0, %v1456
  %v1458 = vpop.f32.mrb[0].mxu0
  %v1459 = vpop.f32.mrb[0].mxu0
  %v1460 = vpop.f32.mrb[0].mxu0
  %1461 = vdwg.mxu0
  %v1462 = vadd.f32 %v1414, %v1457
  %v1463 = vxor.u32 %v1462, 2147483648
  %v1464 = vmul.f32 %v1463, 1.442695
  %v1465 = vpow.pop %v1464
  %v1466 = vadd.f32 %v1465, 1.0
  %v1467 = vrcp.pop %v1466
  %v1468 = vmul.f32 1.0, %v1467
  %v1469 = vtanh.pop %v1462
  %v1470 = vmul.f32 %v1468, %v1392
  %1472 = vrot.lane.b32.xlu0 %v1469, 64
  %v1473 = vpop.permute.xlu0 %1472
  %v1475 = vmul.f32 %v1468, %v1473
  %1477 = vrot.lane.b32.xlu0 %v1475, 32
  %v1478 = vpop.permute.xlu0 %1477
  %v1480 = vadd.f32 %v1470, %v1478
  %v1481 = vtanh.pop %v1480
  %1483 = vrot.lane.b32.xlu0 %v1481, 64
  %v1484 = vpop.permute.xlu0 %1483
  %v1486 = vmul.f32 %v1468, %v1484
  %s1487 = scalar_lea.vmem %s1, 104
  %v1488 = vld [vmem:[%s1487] sm:$0xff]
  %1490 = vset.pattern.permute.xlu0 0
  %1491 = vperm.xlu0 %1490, %v1488
  %v1492 = vpop.permute.xlu0 %1491
  %v1494 = vmul.f32 %v1492, %v1486
  %1496 = vrot.lane.b32.xlu0 %v1494, 32
  %v1497 = vpop.permute.xlu0 %1496
  %s1499 = scalar_lea.vmem %s4, 104
  %1500 = vst.msk [vmem:[%s1499] sm:$0xff] %vm70, %v1497
  %s1501 = scalar_lea.vmem [#allocation2], 112
  %v1502 = vld [vmem:[%s1501] sm:$0xff]
  %v1503 = vpack.c.bf16 %v1486, %v1486
  %1505 = vrot.lane.b32.xlu0 %v1503, 32
  %v1506 = vpop.permute.xlu0 %1505
  %v1508 = vsel %vm70, %v1506, 0
  %1510 = vmatprep.subr.bf16.mxu0 0
  %1511 = vmatpush1.bf16.msra.mxu0 %v273
  %1512 = vmatprep.subr.bf16.mxu0 0
  %1513 = vmatpush1.bf16.msra.mxu0 %v274
  %1514 = vmatprep.subr.bf16.mxu0 0
  %1515 = vmatpush1.bf16.msra.mxu0 0
  %1516 = vmatprep.subr.bf16.mxu0 0
  %1517 = vmatpush1.bf16.msra.mxu0 0
  %1518 = vmatprep.subr.bf16.mxu0 0
  %1519 = vmatpush1.bf16.msra.mxu0 0
  %1520 = vmatprep.subr.bf16.mxu0 0
  %1521 = vmatpush1.bf16.msra.mxu0 0
  %1522 = vmatprep.subr.bf16.mxu0 0
  %1523 = vmatpush1.bf16.msra.mxu0 0
  %1524 = vmatprep.subr.bf16.mxu0 0
  %1525 = vmatpush1.bf16.msra.mxu0 0
  %1526 = vmatprep.subr.bf16.mxu0 0
  %1527 = vmatpush1.bf16.msra.mxu0 0
  %1528 = vmatprep.subr.bf16.mxu0 0
  %1529 = vmatpush1.bf16.msra.mxu0 0
  %1530 = vmatprep.subr.bf16.mxu0 0
  %1531 = vmatpush1.bf16.msra.mxu0 0
  %1532 = vmatprep.subr.bf16.mxu0 0
  %1533 = vmatpush1.bf16.msra.mxu0 0
  %1534 = vmatprep.subr.bf16.mxu0 0
  %1535 = vmatpush1.bf16.msra.mxu0 0
  %1536 = vmatprep.subr.bf16.mxu0 0
  %1537 = vmatpush1.bf16.msra.mxu0 0
  %1538 = vmatprep.subr.bf16.mxu0 0
  %1539 = vmatpush1.bf16.msra.mxu0 0
  %1540 = vmatprep.subr.bf16.mxu0 0
  %1541 = vmatpush1.bf16.msra.mxu0 0
  %1542 = vmatprep.mubr.bf16.mxu0 0
  %1543 = vmatmul.mubr.bf16.gmra.mrb[0].mxu0 %v1508
  %v1544 = vpop.f32.mrb[0].mxu0
  %v1545 = vadd.f32 0.0, %v1544
  %v1546 = vpop.f32.mrb[0].mxu0
  %v1547 = vpop.f32.mrb[0].mxu0
  %v1548 = vpop.f32.mrb[0].mxu0
  %1549 = vdwg.mxu0
  %v1550 = vadd.f32 %v1502, %v1545
  %v1551 = vxor.u32 %v1550, 2147483648
  %v1552 = vmul.f32 %v1551, 1.442695
  %v1553 = vpow.pop %v1552
  %v1554 = vadd.f32 %v1553, 1.0
  %v1555 = vrcp.pop %v1554
  %v1556 = vmul.f32 1.0, %v1555
  %v1557 = vtanh.pop %v1550
  %v1558 = vmul.f32 %v1556, %v1480
  %1560 = vrot.lane.b32.xlu0 %v1557, 64
  %v1561 = vpop.permute.xlu0 %1560
  %v1563 = vmul.f32 %v1556, %v1561
  %1565 = vrot.lane.b32.xlu0 %v1563, 32
  %v1566 = vpop.permute.xlu0 %1565
  %v1568 = vadd.f32 %v1558, %v1566
  %v1569 = vtanh.pop %v1568
  %1571 = vrot.lane.b32.xlu0 %v1569, 64
  %v1572 = vpop.permute.xlu0 %1571
  %v1574 = vmul.f32 %v1556, %v1572
  %s1575 = scalar_lea.vmem %s1, 112
  %v1576 = vld [vmem:[%s1575] sm:$0xff]
  %1578 = vset.pattern.permute.xlu0 0
  %1579 = vperm.xlu0 %1578, %v1576
  %v1580 = vpop.permute.xlu0 %1579
  %v1582 = vmul.f32 %v1580, %v1574
  %1584 = vrot.lane.b32.xlu0 %v1582, 32
  %v1585 = vpop.permute.xlu0 %1584
  %s1587 = scalar_lea.vmem %s4, 112
  %1588 = vst.msk [vmem:[%s1587] sm:$0xff] %vm70, %v1585
  %s1589 = scalar_lea.vmem [#allocation2], 120
  %v1590 = vld [vmem:[%s1589] sm:$0xff]
  %v1591 = vpack.c.bf16 %v1574, %v1574
  %1593 = vrot.lane.b32.xlu0 %v1591, 32
  %v1594 = vpop.permute.xlu0 %1593
  %v1596 = vsel %vm70, %v1594, 0
  %1598 = vmatprep.subr.bf16.mxu0 0
  %1599 = vmatpush1.bf16.msra.mxu0 %v273
  %1600 = vmatprep.subr.bf16.mxu0 0
  %1601 = vmatpush1.bf16.msra.mxu0 %v274
  %1602 = vmatprep.subr.bf16.mxu0 0
  %1603 = vmatpush1.bf16.msra.mxu0 0
  %1604 = vmatprep.subr.bf16.mxu0 0
  %1605 = vmatpush1.bf16.msra.mxu0 0
  %1606 = vmatprep.subr.bf16.mxu0 0
  %1607 = vmatpush1.bf16.msra.mxu0 0
  %1608 = vmatprep.subr.bf16.mxu0 0
  %1609 = vmatpush1.bf16.msra.mxu0 0
  %1610 = vmatprep.subr.bf16.mxu0 0
  %1611 = vmatpush1.bf16.msra.mxu0 0
  %1612 = vmatprep.subr.bf16.mxu0 0
  %1613 = vmatpush1.bf16.msra.mxu0 0
  %1614 = vmatprep.subr.bf16.mxu0 0
  %1615 = vmatpush1.bf16.msra.mxu0 0
  %1616 = vmatprep.subr.bf16.mxu0 0
  %1617 = vmatpush1.bf16.msra.mxu0 0
  %1618 = vmatprep.subr.bf16.mxu0 0
  %1619 = vmatpush1.bf16.msra.mxu0 0
  %1620 = vmatprep.subr.bf16.mxu0 0
  %1621 = vmatpush1.bf16.msra.mxu0 0
  %1622 = vmatprep.subr.bf16.mxu0 0
  %1623 = vmatpush1.bf16.msra.mxu0 0
  %1624 = vmatprep.subr.bf16.mxu0 0
  %1625 = vmatpush1.bf16.msra.mxu0 0
  %1626 = vmatprep.subr.bf16.mxu0 0
  %1627 = vmatpush1.bf16.msra.mxu0 0
  %1628 = vmatprep.subr.bf16.mxu0 0
  %1629 = vmatpush1.bf16.msra.mxu0 0
  %1630 = vmatprep.mubr.bf16.mxu0 0
  %1631 = vmatmul.mubr.bf16.gmra.mrb[0].mxu0 %v1596
  %v1632 = vpop.f32.mrb[0].mxu0
  %v1633 = vadd.f32 0.0, %v1632
  %v1634 = vpop.f32.mrb[0].mxu0
  %v1635 = vpop.f32.mrb[0].mxu0
  %v1636 = vpop.f32.mrb[0].mxu0
  %1637 = vdwg.mxu0
  %v1638 = vadd.f32 %v1590, %v1633
  %v1639 = vxor.u32 %v1638, 2147483648
  %v1640 = vmul.f32 %v1639, 1.442695
  %v1641 = vpow.pop %v1640
  %v1642 = vadd.f32 %v1641, 1.0
  %v1643 = vrcp.pop %v1642
  %v1644 = vmul.f32 1.0, %v1643
  %v1645 = vtanh.pop %v1638
  %v1646 = vmul.f32 %v1644, %v1568
  %1648 = vrot.lane.b32.xlu0 %v1645, 64
  %v1649 = vpop.permute.xlu0 %1648
  %v1651 = vmul.f32 %v1644, %v1649
  %1653 = vrot.lane.b32.xlu0 %v1651, 32
  %v1654 = vpop.permute.xlu0 %1653
  %v1656 = vadd.f32 %v1646, %v1654
  %v1657 = vtanh.pop %v1656
  %1659 = vrot.lane.b32.xlu0 %v1657, 64
  %v1660 = vpop.permute.xlu0 %1659
  %v1662 = vmul.f32 %v1644, %v1660
  %s1663 = scalar_lea.vmem %s1, 120
  %v1664 = vld [vmem:[%s1663] sm:$0xff]
  %1666 = vset.pattern.permute.xlu0 0
  %1667 = vperm.xlu0 %1666, %v1664
  %v1668 = vpop.permute.xlu0 %1667
  %v1670 = vmul.f32 %v1668, %v1662
  %1672 = vrot.lane.b32.xlu0 %v1670, 32
  %v1673 = vpop.permute.xlu0 %1672
  %s1675 = scalar_lea.vmem %s4, 120
  %1676 = vst.msk [vmem:[%s1675] sm:$0xff] %vm70, %v1673
  %s1677 = scalar_lea.vmem [#allocation2], 128
  %v1678 = vld [vmem:[%s1677] sm:$0xff]
  %v1679 = vpack.c.bf16 %v1662, %v1662
  %1681 = vrot.lane.b32.xlu0 %v1679, 32
  %v1682 = vpop.permute.xlu0 %1681
  %v1684 = vsel %vm70, %v1682, 0
  %1686 = vmatprep.subr.bf16.mxu0 0
  %1687 = vmatpush1.bf16.msra.mxu0 %v273
  %1688 = vmatprep.subr.bf16.mxu0 0
  %1689 = vmatpush1.bf16.msra.mxu0 %v274
  %1690 = vmatprep.subr.bf16.mxu0 0
  %1691 = vmatpush1.bf16.msra.mxu0 0
  %1692 = vmatprep.subr.bf16.mxu0 0
  %1693 = vmatpush1.bf16.msra.mxu0 0
  %1694 = vmatprep.subr.bf16.mxu0 0
  %1695 = vmatpush1.bf16.msra.mxu0 0
  %1696 = vmatprep.subr.bf16.mxu0 0
  %1697 = vmatpush1.bf16.msra.mxu0 0
  %1698 = vmatprep.subr.bf16.mxu0 0
  %1699 = vmatpush1.bf16.msra.mxu0 0
  %1700 = vmatprep.subr.bf16.mxu0 0
  %1701 = vmatpush1.bf16.msra.mxu0 0
  %1702 = vmatprep.subr.bf16.mxu0 0
  %1703 = vmatpush1.bf16.msra.mxu0 0
  %1704 = vmatprep.subr.bf16.mxu0 0
  %1705 = vmatpush1.bf16.msra.mxu0 0
  %1706 = vmatprep.subr.bf16.mxu0 0
  %1707 = vmatpush1.bf16.msra.mxu0 0
  %1708 = vmatprep.subr.bf16.mxu0 0
  %1709 = vmatpush1.bf16.msra.mxu0 0
  %1710 = vmatprep.subr.bf16.mxu0 0
  %1711 = vmatpush1.bf16.msra.mxu0 0
  %1712 = vmatprep.subr.bf16.mxu0 0
  %1713 = vmatpush1.bf16.msra.mxu0 0
  %1714 = vmatprep.subr.bf16.mxu0 0
  %1715 = vmatpush1.bf16.msra.mxu0 0
  %1716 = vmatprep.subr.bf16.mxu0 0
  %1717 = vmatpush1.bf16.msra.mxu0 0
  %1718 = vmatprep.mubr.bf16.mxu0 0
  %1719 = vmatmul.mubr.bf16.gmra.mrb[0].mxu0 %v1684
  %v1720 = vpop.f32.mrb[0].mxu0
  %v1721 = vadd.f32 0.0, %v1720
  %v1722 = vpop.f32.mrb[0].mxu0
  %v1723 = vpop.f32.mrb[0].mxu0
  %v1724 = vpop.f32.mrb[0].mxu0
  %1725 = vdwg.mxu0
  %v1726 = vadd.f32 %v1678, %v1721
  %v1727 = vxor.u32 %v1726, 2147483648
  %v1728 = vmul.f32 %v1727, 1.442695
  %v1729 = vpow.pop %v1728
  %v1730 = vadd.f32 %v1729, 1.0
  %v1731 = vrcp.pop %v1730
  %v1732 = vmul.f32 1.0, %v1731
  %v1733 = vtanh.pop %v1726
  %v1734 = vmul.f32 %v1732, %v1656
  %1736 = vrot.lane.b32.xlu0 %v1733, 64
  %v1737 = vpop.permute.xlu0 %1736
  %v1739 = vmul.f32 %v1732, %v1737
  %1741 = vrot.lane.b32.xlu0 %v1739, 32
  %v1742 = vpop.permute.xlu0 %1741
  %v1744 = vadd.f32 %v1734, %v1742
  %v1745 = vtanh.pop %v1744
  %1747 = vrot.lane.b32.xlu0 %v1745, 64
  %v1748 = vpop.permute.xlu0 %1747
  %v1750 = vmul.f32 %v1732, %v1748
  %s1751 = scalar_lea.vmem %s1, 128
  %v1752 = vld [vmem:[%s1751] sm:$0xff]
  %1754 = vset.pattern.permute.xlu0 0
  %1755 = vperm.xlu0 %1754, %v1752
  %v1756 = vpop.permute.xlu0 %1755
  %v1758 = vmul.f32 %v1756, %v1750
  %1760 = vrot.lane.b32.xlu0 %v1758, 32
  %v1761 = vpop.permute.xlu0 %1760
  %s1763 = scalar_lea.vmem %s4, 128
  %1764 = vst.msk [vmem:[%s1763] sm:$0xff] %vm70, %v1761
  %s1765 = scalar_lea.vmem [#allocation2], 136
  %v1766 = vld [vmem:[%s1765] sm:$0xff]
  %v1767 = vpack.c.bf16 %v1750, %v1750
  %1769 = vrot.lane.b32.xlu0 %v1767, 32
  %v1770 = vpop.permute.xlu0 %1769
  %v1772 = vsel %vm70, %v1770, 0
  %1774 = vmatprep.subr.bf16.mxu0 0
  %1775 = vmatpush1.bf16.msra.mxu0 %v273
  %1776 = vmatprep.subr.bf16.mxu0 0
  %1777 = vmatpush1.bf16.msra.mxu0 %v274
  %1778 = vmatprep.subr.bf16.mxu0 0
  %1779 = vmatpush1.bf16.msra.mxu0 0
  %1780 = vmatprep.subr.bf16.mxu0 0
  %1781 = vmatpush1.bf16.msra.mxu0 0
  %1782 = vmatprep.subr.bf16.mxu0 0
  %1783 = vmatpush1.bf16.msra.mxu0 0
  %1784 = vmatprep.subr.bf16.mxu0 0
  %1785 = vmatpush1.bf16.msra.mxu0 0
  %1786 = vmatprep.subr.bf16.mxu0 0
  %1787 = vmatpush1.bf16.msra.mxu0 0
  %1788 = vmatprep.subr.bf16.mxu0 0
  %1789 = vmatpush1.bf16.msra.mxu0 0
  %1790 = vmatprep.subr.bf16.mxu0 0
  %1791 = vmatpush1.bf16.msra.mxu0 0
  %1792 = vmatprep.subr.bf16.mxu0 0
  %1793 = vmatpush1.bf16.msra.mxu0 0
  %1794 = vmatprep.subr.bf16.mxu0 0
  %1795 = vmatpush1.bf16.msra.mxu0 0
  %1796 = vmatprep.subr.bf16.mxu0 0
  %1797 = vmatpush1.bf16.msra.mxu0 0
  %1798 = vmatprep.subr.bf16.mxu0 0
  %1799 = vmatpush1.bf16.msra.mxu0 0
  %1800 = vmatprep.subr.bf16.mxu0 0
  %1801 = vmatpush1.bf16.msra.mxu0 0
  %1802 = vmatprep.subr.bf16.mxu0 0
  %1803 = vmatpush1.bf16.msra.mxu0 0
  %1804 = vmatprep.subr.bf16.mxu0 0
  %1805 = vmatpush1.bf16.msra.mxu0 0
  %1806 = vmatprep.mubr.bf16.mxu0 0
  %1807 = vmatmul.mubr.bf16.gmra.mrb[0].mxu0 %v1772
  %v1808 = vpop.f32.mrb[0].mxu0
  %v1809 = vadd.f32 0.0, %v1808
  %v1810 = vpop.f32.mrb[0].mxu0
  %v1811 = vpop.f32.mrb[0].mxu0
  %v1812 = vpop.f32.mrb[0].mxu0
  %1813 = vdwg.mxu0
  %v1814 = vadd.f32 %v1766, %v1809
  %v1815 = vxor.u32 %v1814, 2147483648
  %v1816 = vmul.f32 %v1815, 1.442695
  %v1817 = vpow.pop %v1816
  %v1818 = vadd.f32 %v1817, 1.0
  %v1819 = vrcp.pop %v1818
  %v1820 = vmul.f32 1.0, %v1819
  %v1821 = vtanh.pop %v1814
  %v1822 = vmul.f32 %v1820, %v1744
  %1824 = vrot.lane.b32.xlu0 %v1821, 64
  %v1825 = vpop.permute.xlu0 %1824
  %v1827 = vmul.f32 %v1820, %v1825
  %1829 = vrot.lane.b32.xlu0 %v1827, 32
  %v1830 = vpop.permute.xlu0 %1829
  %v1832 = vadd.f32 %v1822, %v1830
  %v1833 = vtanh.pop %v1832
  %1835 = vrot.lane.b32.xlu0 %v1833, 64
  %v1836 = vpop.permute.xlu0 %1835
  %v1838 = vmul.f32 %v1820, %v1836
  %s1839 = scalar_lea.vmem %s1, 136
  %v1840 = vld [vmem:[%s1839] sm:$0xff]
  %1842 = vset.pattern.permute.xlu0 0
  %1843 = vperm.xlu0 %1842, %v1840
  %v1844 = vpop.permute.xlu0 %1843
  %v1846 = vmul.f32 %v1844, %v1838
  %1848 = vrot.lane.b32.xlu0 %v1846, 32
  %v1849 = vpop.permute.xlu0 %1848
  %s1851 = scalar_lea.vmem %s4, 136
  %1852 = vst.msk [vmem:[%s1851] sm:$0xff] %vm70, %v1849
  %s1853 = scalar_lea.vmem [#allocation2], 144
  %v1854 = vld [vmem:[%s1853] sm:$0xff]
  %v1855 = vpack.c.bf16 %v1838, %v1838
  %1857 = vrot.lane.b32.xlu0 %v1855, 32
  %v1858 = vpop.permute.xlu0 %1857
  %v1860 = vsel %vm70, %v1858, 0
  %1862 = vmatprep.subr.bf16.mxu0 0
  %1863 = vmatpush1.bf16.msra.mxu0 %v273
  %1864 = vmatprep.subr.bf16.mxu0 0
  %1865 = vmatpush1.bf16.msra.mxu0 %v274
  %1866 = vmatprep.subr.bf16.mxu0 0
  %1867 = vmatpush1.bf16.msra.mxu0 0
  %1868 = vmatprep.subr.bf16.mxu0 0
  %1869 = vmatpush1.bf16.msra.mxu0 0
  %1870 = vmatprep.subr.bf16.mxu0 0
  %1871 = vmatpush1.bf16.msra.mxu0 0
  %1872 = vmatprep.subr.bf16.mxu0 0
  %1873 = vmatpush1.bf16.msra.mxu0 0
  %1874 = vmatprep.subr.bf16.mxu0 0
  %1875 = vmatpush1.bf16.msra.mxu0 0
  %1876 = vmatprep.subr.bf16.mxu0 0
  %1877 = vmatpush1.bf16.msra.mxu0 0
  %1878 = vmatprep.subr.bf16.mxu0 0
  %1879 = vmatpush1.bf16.msra.mxu0 0
  %1880 = vmatprep.subr.bf16.mxu0 0
  %1881 = vmatpush1.bf16.msra.mxu0 0
  %1882 = vmatprep.subr.bf16.mxu0 0
  %1883 = vmatpush1.bf16.msra.mxu0 0
  %1884 = vmatprep.subr.bf16.mxu0 0
  %1885 = vmatpush1.bf16.msra.mxu0 0
  %1886 = vmatprep.subr.bf16.mxu0 0
  %1887 = vmatpush1.bf16.msra.mxu0 0
  %1888 = vmatprep.subr.bf16.mxu0 0
  %1889 = vmatpush1.bf16.msra.mxu0 0
  %1890 = vmatprep.subr.bf16.mxu0 0
  %1891 = vmatpush1.bf16.msra.mxu0 0
  %1892 = vmatprep.subr.bf16.mxu0 0
  %1893 = vmatpush1.bf16.msra.mxu0 0
  %1894 = vmatprep.mubr.bf16.mxu0 0
  %1895 = vmatmul.mubr.bf16.gmra.mrb[0].mxu0 %v1860
  %v1896 = vpop.f32.mrb[0].mxu0
  %v1897 = vadd.f32 0.0, %v1896
  %v1898 = vpop.f32.mrb[0].mxu0
  %v1899 = vpop.f32.mrb[0].mxu0
  %v1900 = vpop.f32.mrb[0].mxu0
  %1901 = vdwg.mxu0
  %v1902 = vadd.f32 %v1854, %v1897
  %v1903 = vxor.u32 %v1902, 2147483648
  %v1904 = vmul.f32 %v1903, 1.442695
  %v1905 = vpow.pop %v1904
  %v1906 = vadd.f32 %v1905, 1.0
  %v1907 = vrcp.pop %v1906
  %v1908 = vmul.f32 1.0, %v1907
  %v1909 = vtanh.pop %v1902
  %v1910 = vmul.f32 %v1908, %v1832
  %1912 = vrot.lane.b32.xlu0 %v1909, 64
  %v1913 = vpop.permute.xlu0 %1912
  %v1915 = vmul.f32 %v1908, %v1913
  %1917 = vrot.lane.b32.xlu0 %v1915, 32
  %v1918 = vpop.permute.xlu0 %1917
  %v1920 = vadd.f32 %v1910, %v1918
  %v1921 = vtanh.pop %v1920
  %1923 = vrot.lane.b32.xlu0 %v1921, 64
  %v1924 = vpop.permute.xlu0 %1923
  %v1926 = vmul.f32 %v1908, %v1924
  %s1927 = scalar_lea.vmem %s1, 144
  %v1928 = vld [vmem:[%s1927] sm:$0xff]
  %1930 = vset.pattern.permute.xlu0 0
  %1931 = vperm.xlu0 %1930, %v1928
  %v1932 = vpop.permute.xlu0 %1931
  %v1934 = vmul.f32 %v1932, %v1926
  %1936 = vrot.lane.b32.xlu0 %v1934, 32
  %v1937 = vpop.permute.xlu0 %1936
  %s1939 = scalar_lea.vmem %s4, 144
  %1940 = vst.msk [vmem:[%s1939] sm:$0xff] %vm70, %v1937
  %s1941 = scalar_lea.vmem [#allocation2], 152
  %v1942 = vld [vmem:[%s1941] sm:$0xff]
  %v1943 = vpack.c.bf16 %v1926, %v1926
  %1945 = vrot.lane.b32.xlu0 %v1943, 32
  %v1946 = vpop.permute.xlu0 %1945
  %v1948 = vsel %vm70, %v1946, 0
  %1950 = vmatprep.subr.bf16.mxu0 0
  %1951 = vmatpush1.bf16.msra.mxu0 %v273
  %1952 = vmatprep.subr.bf16.mxu0 0
  %1953 = vmatpush1.bf16.msra.mxu0 %v274
  %1954 = vmatprep.subr.bf16.mxu0 0
  %1955 = vmatpush1.bf16.msra.mxu0 0
  %1956 = vmatprep.subr.bf16.mxu0 0
  %1957 = vmatpush1.bf16.msra.mxu0 0
  %1958 = vmatprep.subr.bf16.mxu0 0
  %1959 = vmatpush1.bf16.msra.mxu0 0
  %1960 = vmatprep.subr.bf16.mxu0 0
  %1961 = vmatpush1.bf16.msra.mxu0 0
  %1962 = vmatprep.subr.bf16.mxu0 0
  %1963 = vmatpush1.bf16.msra.mxu0 0
  %1964 = vmatprep.subr.bf16.mxu0 0
  %1965 = vmatpush1.bf16.msra.mxu0 0
  %1966 = vmatprep.subr.bf16.mxu0 0
  %1967 = vmatpush1.bf16.msra.mxu0 0
  %1968 = vmatprep.subr.bf16.mxu0 0
  %1969 = vmatpush1.bf16.msra.mxu0 0
  %1970 = vmatprep.subr.bf16.mxu0 0
  %1971 = vmatpush1.bf16.msra.mxu0 0
  %1972 = vmatprep.subr.bf16.mxu0 0
  %1973 = vmatpush1.bf16.msra.mxu0 0
  %1974 = vmatprep.subr.bf16.mxu0 0
  %1975 = vmatpush1.bf16.msra.mxu0 0
  %1976 = vmatprep.subr.bf16.mxu0 0
  %1977 = vmatpush1.bf16.msra.mxu0 0
  %1978 = vmatprep.subr.bf16.mxu0 0
  %1979 = vmatpush1.bf16.msra.mxu0 0
  %1980 = vmatprep.subr.bf16.mxu0 0
  %1981 = vmatpush1.bf16.msra.mxu0 0
  %1982 = vmatprep.mubr.bf16.mxu0 0
  %1983 = vmatmul.mubr.bf16.gmra.mrb[0].mxu0 %v1948
  %v1984 = vpop.f32.mrb[0].mxu0
  %v1985 = vadd.f32 0.0, %v1984
  %v1986 = vpop.f32.mrb[0].mxu0
  %v1987 = vpop.f32.mrb[0].mxu0
  %v1988 = vpop.f32.mrb[0].mxu0
  %1989 = vdwg.mxu0
  %v1990 = vadd.f32 %v1942, %v1985
  %v1991 = vxor.u32 %v1990, 2147483648
  %v1992 = vmul.f32 %v1991, 1.442695
  %v1993 = vpow.pop %v1992
  %v1994 = vadd.f32 %v1993, 1.0
  %v1995 = vrcp.pop %v1994
  %v1996 = vmul.f32 1.0, %v1995
  %v1997 = vtanh.pop %v1990
  %v1998 = vmul.f32 %v1996, %v1920
  %2000 = vrot.lane.b32.xlu0 %v1997, 64
  %v2001 = vpop.permute.xlu0 %2000
  %v2003 = vmul.f32 %v1996, %v2001
  %2005 = vrot.lane.b32.xlu0 %v2003, 32
  %v2006 = vpop.permute.xlu0 %2005
  %v2008 = vadd.f32 %v1998, %v2006
  %v2009 = vtanh.pop %v2008
  %2011 = vrot.lane.b32.xlu0 %v2009, 64
  %v2012 = vpop.permute.xlu0 %2011
  %v2014 = vmul.f32 %v1996, %v2012
  %s2015 = scalar_lea.vmem %s1, 152
  %v2016 = vld [vmem:[%s2015] sm:$0xff]
  %2018 = vset.pattern.permute.xlu0 0
  %2019 = vperm.xlu0 %2018, %v2016
  %v2020 = vpop.permute.xlu0 %2019
  %v2022 = vmul.f32 %v2020, %v2014
  %2024 = vrot.lane.b32.xlu0 %v2022, 32
  %v2025 = vpop.permute.xlu0 %2024
  %s2027 = scalar_lea.vmem %s4, 152
  %2028 = vst.msk [vmem:[%s2027] sm:$0xff] %vm70, %v2025
  %s2029 = scalar_lea.vmem [#allocation2], 160
  %v2030 = vld [vmem:[%s2029] sm:$0xff]
  %v2031 = vpack.c.bf16 %v2014, %v2014
  %2033 = vrot.lane.b32.xlu0 %v2031, 32
  %v2034 = vpop.permute.xlu0 %2033
  %v2036 = vsel %vm70, %v2034, 0
  %2038 = vmatprep.subr.bf16.mxu0 0
  %2039 = vmatpush1.bf16.msra.mxu0 %v273
  %2040 = vmatprep.subr.bf16.mxu0 0
  %2041 = vmatpush1.bf16.msra.mxu0 %v274
  %2042 = vmatprep.subr.bf16.mxu0 0
  %2043 = vmatpush1.bf16.msra.mxu0 0
  %2044 = vmatprep.subr.bf16.mxu0 0
  %2045 = vmatpush1.bf16.msra.mxu0 0
  %2046 = vmatprep.subr.bf16.mxu0 0
  %2047 = vmatpush1.bf16.msra.mxu0 0
  %2048 = vmatprep.subr.bf16.mxu0 0
  %2049 = vmatpush1.bf16.msra.mxu0 0
  %2050 = vmatprep.subr.bf16.mxu0 0
  %2051 = vmatpush1.bf16.msra.mxu0 0
  %2052 = vmatprep.subr.bf16.mxu0 0
  %2053 = vmatpush1.bf16.msra.mxu0 0
  %2054 = vmatprep.subr.bf16.mxu0 0
  %2055 = vmatpush1.bf16.msra.mxu0 0
  %2056 = vmatprep.subr.bf16.mxu0 0
  %2057 = vmatpush1.bf16.msra.mxu0 0
  %2058 = vmatprep.subr.bf16.mxu0 0
  %2059 = vmatpush1.bf16.msra.mxu0 0
  %2060 = vmatprep.subr.bf16.mxu0 0
  %2061 = vmatpush1.bf16.msra.mxu0 0
  %2062 = vmatprep.subr.bf16.mxu0 0
  %2063 = vmatpush1.bf16.msra.mxu0 0
  %2064 = vmatprep.subr.bf16.mxu0 0
  %2065 = vmatpush1.bf16.msra.mxu0 0
  %2066 = vmatprep.subr.bf16.mxu0 0
  %2067 = vmatpush1.bf16.msra.mxu0 0
  %2068 = vmatprep.subr.bf16.mxu0 0
  %2069 = vmatpush1.bf16.msra.mxu0 0
  %2070 = vmatprep.mubr.bf16.mxu0 0
  %2071 = vmatmul.mubr.bf16.gmra.mrb[0].mxu0 %v2036
  %v2072 = vpop.f32.mrb[0].mxu0
  %v2073 = vadd.f32 0.0, %v2072
  %v2074 = vpop.f32.mrb[0].mxu0
  %v2075 = vpop.f32.mrb[0].mxu0
  %v2076 = vpop.f32.mrb[0].mxu0
  %2077 = vdwg.mxu0
  %v2078 = vadd.f32 %v2030, %v2073
  %v2079 = vxor.u32 %v2078, 2147483648
  %v2080 = vmul.f32 %v2079, 1.442695
  %v2081 = vpow.pop %v2080
  %v2082 = vadd.f32 %v2081, 1.0
  %v2083 = vrcp.pop %v2082
  %v2084 = vmul.f32 1.0, %v2083
  %v2085 = vtanh.pop %v2078
  %v2086 = vmul.f32 %v2084, %v2008
  %2088 = vrot.lane.b32.xlu0 %v2085, 64
  %v2089 = vpop.permute.xlu0 %2088
  %v2091 = vmul.f32 %v2084, %v2089
  %2093 = vrot.lane.b32.xlu0 %v2091, 32
  %v2094 = vpop.permute.xlu0 %2093
  %v2096 = vadd.f32 %v2086, %v2094
  %v2097 = vtanh.pop %v2096
  %2099 = vrot.lane.b32.xlu0 %v2097, 64
  %v2100 = vpop.permute.xlu0 %2099
  %v2102 = vmul.f32 %v2084, %v2100
  %s2103 = scalar_lea.vmem %s1, 160
  %v2104 = vld [vmem:[%s2103] sm:$0xff]
  %2106 = vset.pattern.permute.xlu0 0
  %2107 = vperm.xlu0 %2106, %v2104
  %v2108 = vpop.permute.xlu0 %2107
  %v2110 = vmul.f32 %v2108, %v2102
  %2112 = vrot.lane.b32.xlu0 %v2110, 32
  %v2113 = vpop.permute.xlu0 %2112
  %s2115 = scalar_lea.vmem %s4, 160
  %2116 = vst.msk [vmem:[%s2115] sm:$0xff] %vm70, %v2113
  %s2117 = scalar_lea.vmem [#allocation2], 168
  %v2118 = vld [vmem:[%s2117] sm:$0xff]
  %v2119 = vpack.c.bf16 %v2102, %v2102
  %2121 = vrot.lane.b32.xlu0 %v2119, 32
  %v2122 = vpop.permute.xlu0 %2121
  %v2124 = vsel %vm70, %v2122, 0
  %2126 = vmatprep.subr.bf16.mxu0 0
  %2127 = vmatpush1.bf16.msra.mxu0 %v273
  %2128 = vmatprep.subr.bf16.mxu0 0
  %2129 = vmatpush1.bf16.msra.mxu0 %v274
  %2130 = vmatprep.subr.bf16.mxu0 0
  %2131 = vmatpush1.bf16.msra.mxu0 0
  %2132 = vmatprep.subr.bf16.mxu0 0
  %2133 = vmatpush1.bf16.msra.mxu0 0
  %2134 = vmatprep.subr.bf16.mxu0 0
  %2135 = vmatpush1.bf16.msra.mxu0 0
  %2136 = vmatprep.subr.bf16.mxu0 0
  %2137 = vmatpush1.bf16.msra.mxu0 0
  %2138 = vmatprep.subr.bf16.mxu0 0
  %2139 = vmatpush1.bf16.msra.mxu0 0
  %2140 = vmatprep.subr.bf16.mxu0 0
  %2141 = vmatpush1.bf16.msra.mxu0 0
  %2142 = vmatprep.subr.bf16.mxu0 0
  %2143 = vmatpush1.bf16.msra.mxu0 0
  %2144 = vmatprep.subr.bf16.mxu0 0
  %2145 = vmatpush1.bf16.msra.mxu0 0
  %2146 = vmatprep.subr.bf16.mxu0 0
  %2147 = vmatpush1.bf16.msra.mxu0 0
  %2148 = vmatprep.subr.bf16.mxu0 0
  %2149 = vmatpush1.bf16.msra.mxu0 0
  %2150 = vmatprep.subr.bf16.mxu0 0
  %2151 = vmatpush1.bf16.msra.mxu0 0
  %2152 = vmatprep.subr.bf16.mxu0 0
  %2153 = vmatpush1.bf16.msra.mxu0 0
  %2154 = vmatprep.subr.bf16.mxu0 0
  %2155 = vmatpush1.bf16.msra.mxu0 0
  %2156 = vmatprep.subr.bf16.mxu0 0
  %2157 = vmatpush1.bf16.msra.mxu0 0
  %2158 = vmatprep.mubr.bf16.mxu0 0
  %2159 = vmatmul.mubr.bf16.gmra.mrb[0].mxu0 %v2124
  %v2160 = vpop.f32.mrb[0].mxu0
  %v2161 = vadd.f32 0.0, %v2160
  %v2162 = vpop.f32.mrb[0].mxu0
  %v2163 = vpop.f32.mrb[0].mxu0
  %v2164 = vpop.f32.mrb[0].mxu0
  %2165 = vdwg.mxu0
  %v2166 = vadd.f32 %v2118, %v2161
  %v2167 = vxor.u32 %v2166, 2147483648
  %v2168 = vmul.f32 %v2167, 1.442695
  %v2169 = vpow.pop %v2168
  %v2170 = vadd.f32 %v2169, 1.0
  %v2171 = vrcp.pop %v2170
  %v2172 = vmul.f32 1.0, %v2171
  %v2173 = vtanh.pop %v2166
  %v2174 = vmul.f32 %v2172, %v2096
  %2176 = vrot.lane.b32.xlu0 %v2173, 64
  %v2177 = vpop.permute.xlu0 %2176
  %v2179 = vmul.f32 %v2172, %v2177
  %2181 = vrot.lane.b32.xlu0 %v2179, 32
  %v2182 = vpop.permute.xlu0 %2181
  %v2184 = vadd.f32 %v2174, %v2182
  %v2185 = vtanh.pop %v2184
  %2187 = vrot.lane.b32.xlu0 %v2185, 64
  %v2188 = vpop.permute.xlu0 %2187
  %v2190 = vmul.f32 %v2172, %v2188
  %s2191 = scalar_lea.vmem %s1, 168
  %v2192 = vld [vmem:[%s2191] sm:$0xff]
  %2194 = vset.pattern.permute.xlu0 0
  %2195 = vperm.xlu0 %2194, %v2192
  %v2196 = vpop.permute.xlu0 %2195
  %v2198 = vmul.f32 %v2196, %v2190
  %2200 = vrot.lane.b32.xlu0 %v2198, 32
  %v2201 = vpop.permute.xlu0 %2200
  %s2203 = scalar_lea.vmem %s4, 168
  %2204 = vst.msk [vmem:[%s2203] sm:$0xff] %vm70, %v2201
  %s2205 = scalar_lea.vmem [#allocation2], 176
  %v2206 = vld [vmem:[%s2205] sm:$0xff]
  %v2207 = vpack.c.bf16 %v2190, %v2190
  %2209 = vrot.lane.b32.xlu0 %v2207, 32
  %v2210 = vpop.permute.xlu0 %2209
  %v2212 = vsel %vm70, %v2210, 0
  %2214 = vmatprep.subr.bf16.mxu0 0
  %2215 = vmatpush1.bf16.msra.mxu0 %v273
  %2216 = vmatprep.subr.bf16.mxu0 0
  %2217 = vmatpush1.bf16.msra.mxu0 %v274
  %2218 = vmatprep.subr.bf16.mxu0 0
  %2219 = vmatpush1.bf16.msra.mxu0 0
  %2220 = vmatprep.subr.bf16.mxu0 0
  %2221 = vmatpush1.bf16.msra.mxu0 0
  %2222 = vmatprep.subr.bf16.mxu0 0
  %2223 = vmatpush1.bf16.msra.mxu0 0
  %2224 = vmatprep.subr.bf16.mxu0 0
  %2225 = vmatpush1.bf16.msra.mxu0 0
  %2226 = vmatprep.subr.bf16.mxu0 0
  %2227 = vmatpush1.bf16.msra.mxu0 0
  %2228 = vmatprep.subr.bf16.mxu0 0
  %2229 = vmatpush1.bf16.msra.mxu0 0
  %2230 = vmatprep.subr.bf16.mxu0 0
  %2231 = vmatpush1.bf16.msra.mxu0 0
  %2232 = vmatprep.subr.bf16.mxu0 0
  %2233 = vmatpush1.bf16.msra.mxu0 0
  %2234 = vmatprep.subr.bf16.mxu0 0
  %2235 = vmatpush1.bf16.msra.mxu0 0
  %2236 = vmatprep.subr.bf16.mxu0 0
  %2237 = vmatpush1.bf16.msra.mxu0 0
  %2238 = vmatprep.subr.bf16.mxu0 0
  %2239 = vmatpush1.bf16.msra.mxu0 0
  %2240 = vmatprep.subr.bf16.mxu0 0
  %2241 = vmatpush1.bf16.msra.mxu0 0
  %2242 = vmatprep.subr.bf16.mxu0 0
  %2243 = vmatpush1.bf16.msra.mxu0 0
  %2244 = vmatprep.subr.bf16.mxu0 0
  %2245 = vmatpush1.bf16.msra.mxu0 0
  %2246 = vmatprep.mubr.bf16.mxu0 0
  %2247 = vmatmul.mubr.bf16.gmra.mrb[0].mxu0 %v2212
  %v2248 = vpop.f32.mrb[0].mxu0
  %v2249 = vadd.f32 0.0, %v2248
  %v2250 = vpop.f32.mrb[0].mxu0
  %v2251 = vpop.f32.mrb[0].mxu0
  %v2252 = vpop.f32.mrb[0].mxu0
  %2253 = vdwg.mxu0
  %v2254 = vadd.f32 %v2206, %v2249
  %v2255 = vxor.u32 %v2254, 2147483648
  %v2256 = vmul.f32 %v2255, 1.442695
  %v2257 = vpow.pop %v2256
  %v2258 = vadd.f32 %v2257, 1.0
  %v2259 = vrcp.pop %v2258
  %v2260 = vmul.f32 1.0, %v2259
  %v2261 = vtanh.pop %v2254
  %v2262 = vmul.f32 %v2260, %v2184
  %2264 = vrot.lane.b32.xlu0 %v2261, 64
  %v2265 = vpop.permute.xlu0 %2264
  %v2267 = vmul.f32 %v2260, %v2265
  %2269 = vrot.lane.b32.xlu0 %v2267, 32
  %v2270 = vpop.permute.xlu0 %2269
  %v2272 = vadd.f32 %v2262, %v2270
  %v2273 = vtanh.pop %v2272
  %2275 = vrot.lane.b32.xlu0 %v2273, 64
  %v2276 = vpop.permute.xlu0 %2275
  %v2278 = vmul.f32 %v2260, %v2276
  %s2279 = scalar_lea.vmem %s1, 176
  %v2280 = vld [vmem:[%s2279] sm:$0xff]
  %2282 = vset.pattern.permute.xlu0 0
  %2283 = vperm.xlu0 %2282, %v2280
  %v2284 = vpop.permute.xlu0 %2283
  %v2286 = vmul.f32 %v2284, %v2278
  %2288 = vrot.lane.b32.xlu0 %v2286, 32
  %v2289 = vpop.permute.xlu0 %2288
  %s2291 = scalar_lea.vmem %s4, 176
  %2292 = vst.msk [vmem:[%s2291] sm:$0xff] %vm70, %v2289
  %s2293 = scalar_lea.vmem [#allocation2], 184
  %v2294 = vld [vmem:[%s2293] sm:$0xff]
  %v2295 = vpack.c.bf16 %v2278, %v2278
  %2297 = vrot.lane.b32.xlu0 %v2295, 32
  %v2298 = vpop.permute.xlu0 %2297
  %v2300 = vsel %vm70, %v2298, 0
  %2302 = vmatprep.subr.bf16.mxu0 0
  %2303 = vmatpush1.bf16.msra.mxu0 %v273
  %2304 = vmatprep.subr.bf16.mxu0 0
  %2305 = vmatpush1.bf16.msra.mxu0 %v274
  %2306 = vmatprep.subr.bf16.mxu0 0
  %2307 = vmatpush1.bf16.msra.mxu0 0
  %2308 = vmatprep.subr.bf16.mxu0 0
  %2309 = vmatpush1.bf16.msra.mxu0 0
  %2310 = vmatprep.subr.bf16.mxu0 0
  %2311 = vmatpush1.bf16.msra.mxu0 0
  %2312 = vmatprep.subr.bf16.mxu0 0
  %2313 = vmatpush1.bf16.msra.mxu0 0
  %2314 = vmatprep.subr.bf16.mxu0 0
  %2315 = vmatpush1.bf16.msra.mxu0 0
  %2316 = vmatprep.subr.bf16.mxu0 0
  %2317 = vmatpush1.bf16.msra.mxu0 0
  %2318 = vmatprep.subr.bf16.mxu0 0
  %2319 = vmatpush1.bf16.msra.mxu0 0
  %2320 = vmatprep.subr.bf16.mxu0 0
  %2321 = vmatpush1.bf16.msra.mxu0 0
  %2322 = vmatprep.subr.bf16.mxu0 0
  %2323 = vmatpush1.bf16.msra.mxu0 0
  %2324 = vmatprep.subr.bf16.mxu0 0
  %2325 = vmatpush1.bf16.msra.mxu0 0
  %2326 = vmatprep.subr.bf16.mxu0 0
  %2327 = vmatpush1.bf16.msra.mxu0 0
  %2328 = vmatprep.subr.bf16.mxu0 0
  %2329 = vmatpush1.bf16.msra.mxu0 0
  %2330 = vmatprep.subr.bf16.mxu0 0
  %2331 = vmatpush1.bf16.msra.mxu0 0
  %2332 = vmatprep.subr.bf16.mxu0 0
  %2333 = vmatpush1.bf16.msra.mxu0 0
  %2334 = vmatprep.mubr.bf16.mxu0 0
  %2335 = vmatmul.mubr.bf16.gmra.mrb[0].mxu0 %v2300
  %v2336 = vpop.f32.mrb[0].mxu0
  %v2337 = vadd.f32 0.0, %v2336
  %v2338 = vpop.f32.mrb[0].mxu0
  %v2339 = vpop.f32.mrb[0].mxu0
  %v2340 = vpop.f32.mrb[0].mxu0
  %2341 = vdwg.mxu0
  %v2342 = vadd.f32 %v2294, %v2337
  %v2343 = vxor.u32 %v2342, 2147483648
  %v2344 = vmul.f32 %v2343, 1.442695
  %v2345 = vpow.pop %v2344
  %v2346 = vadd.f32 %v2345, 1.0
  %v2347 = vrcp.pop %v2346
  %v2348 = vmul.f32 1.0, %v2347
  %v2349 = vtanh.pop %v2342
  %v2350 = vmul.f32 %v2348, %v2272
  %2352 = vrot.lane.b32.xlu0 %v2349, 64
  %v2353 = vpop.permute.xlu0 %2352
  %v2355 = vmul.f32 %v2348, %v2353
  %2357 = vrot.lane.b32.xlu0 %v2355, 32
  %v2358 = vpop.permute.xlu0 %2357
  %v2360 = vadd.f32 %v2350, %v2358
  %v2361 = vtanh.pop %v2360
  %2363 = vrot.lane.b32.xlu0 %v2361, 64
  %v2364 = vpop.permute.xlu0 %2363
  %v2366 = vmul.f32 %v2348, %v2364
  %s2367 = scalar_lea.vmem %s1, 184
  %v2368 = vld [vmem:[%s2367] sm:$0xff]
  %2370 = vset.pattern.permute.xlu0 0
  %2371 = vperm.xlu0 %2370, %v2368
  %v2372 = vpop.permute.xlu0 %2371
  %v2374 = vmul.f32 %v2372, %v2366
  %2376 = vrot.lane.b32.xlu0 %v2374, 32
  %v2377 = vpop.permute.xlu0 %2376
  %s2379 = scalar_lea.vmem %s4, 184
  %2380 = vst.msk [vmem:[%s2379] sm:$0xff] %vm70, %v2377
  // Predicated region
  $region18: #{_forward_impl.2} parent=0 // pred_check
    _
  $region19: #{_forward_impl.2} parent=0 // pred_check_branch
    %2382 = sbr.rel (0) target = $region21
  $region20: #{_forward_impl.2} parent=0 // pred_region
    _
  $region21: #{_forward_impl.2} parent=0 // pred_fallthru
    _
  // Predicated region
  $region22: #{_forward_impl.2} parent=0 // pred_check
    _
  $region23: #{_forward_impl.2} parent=0 // pred_check_branch
    %2384 = sbr.rel (0) target = $region25
  $region24: #{_forward_impl.2} parent=0 // pred_region
    _
  $region25: #{_forward_impl.2} parent=0 // pred_fallthru
    _

</llo_original>
